<compile_context>
chip_gen: v5e
topology: v5e:2x2
jax: 0.10.0
libtpu: 0.0.40
codegen_flags: <defaults>
</compile_context>

<pallas_src>
import functools

import jax
import jax.numpy as jnp
from jax.experimental import pallas as pl
from jax.experimental.pallas import tpu as pltpu


# ---------------------------------------------------------------------------
# Host-side constants (cached): M = fftshift . IDFT_ortho . ifftshift
# ---------------------------------------------------------------------------
@functools.lru_cache(maxsize=None)
def _shifted_idft_parts(n: int):
    """Real/imag parts of the shifted ortho inverse-DFT matrix (dense, f32)."""
    k = jnp.arange(n, dtype=jnp.float32)
    ang = 2.0 * jnp.pi * jnp.outer(k, k) / jnp.float32(n)
    scale = 1.0 / jnp.sqrt(jnp.float32(n))
    mr = jnp.fft.fftshift(jnp.cos(ang) * scale, axes=(0, 1))
    mi = jnp.fft.fftshift(jnp.sin(ang) * scale, axes=(0, 1))
    return mr, mi


# ---------------------------------------------------------------------------
# Generation-aware helpers
# ---------------------------------------------------------------------------
def _vmem_capacity_bytes() -> int:
    try:
        cap = getattr(pltpu.get_tpu_info(), "vmem_capacity_bytes", None)
        if cap:
            return int(cap)
    except Exception:
        pass
    return 64 * 1024 * 1024  # conservative fallback (v7x per-TC VMEM)


def _is_megacore() -> bool:
    """True when the device exposes >1 TensorCore (v4/v5p/v7x style megacore)."""
    try:
        kind = jax.devices()[0].device_kind.lower()
    except Exception:
        return True  # conservative: keep >=2 grid steps
    single_tc = any(t in kind for t in ("v5e", "v6e", "lite"))
    return not single_tc


def _choose_block_batch(n: int, h: int, megacore: bool) -> int:
    """Images per grid step: fill the MXU M dim, keep (B*H) sublane-aligned,
    and keep >= 2 grid steps only when the chip has >1 TensorCore."""
    row_cap = 256 if megacore else 512
    cands = [d for d in range(1, n + 1)
             if n % d == 0 and (d == n or (d * h) % 8 == 0)]
    if megacore:
        pref = [d for d in cands if d * h <= row_cap and n // d >= 2]
        if pref:
            return max(pref)
    pref = [d for d in cands if d * h <= row_cap]
    if pref:
        return max(pref)
    return min(cands)


def _vmem_limit_bytes(B, H, W, mm_itemsize, use_gauss, const_buffers) -> int:
    n_mats = 3 if use_gauss else 2
    const_b = n_mats * (H * H + W * W) * mm_itemsize * const_buffers
    io_b = 2 * (B * 2 * H * W) * 4 * 2            # in + out blocks, 2x buffered, f32
    scratch_b = (3 if use_gauss else 2) * B * H * W * mm_itemsize
    temp_b = 8 * B * H * W * 4                    # stage-1/2 f32 temporaries headroom
    est = const_b + io_b + scratch_b + temp_b
    cap = int(0.625 * _vmem_capacity_bytes())     # ~40 MiB on v7x, ~80 MiB on v5e/v6e
    return int(min(cap, max(32 * 1024 * 1024, int(1.5 * est))))


# ---------------------------------------------------------------------------
# Kernels
# ---------------------------------------------------------------------------
def _make_kernel_gauss(B, H, W, mm_dtype, precision):
    """f32 path: Gauss/Karatsuba 3-multiply complex products (6 real matmuls)."""
    f32 = jnp.float32

    def kernel(x_ref, ar_ref, ai_ref, as_ref, btr_ref, bti_ref, bs_ref,
               o_ref, tr_ref, ti_ref, ts_ref):
        x = x_ref[...]                                   # (B, 2, H, W)
        xr = x[:, 0].reshape(B * H, W).astype(mm_dtype)  # leading-dim merge, layout-free
        xi = x[:, 1].reshape(B * H, W).astype(mm_dtype)

        # ---- Stage 1: T = X @ M_W^T over all B*H rows at once. ----
        p1 = jnp.dot(xr, btr_ref[...], preferred_element_type=f32, precision=precision)
        p2 = jnp.dot(xi, bti_ref[...], preferred_element_type=f32, precision=precision)
        p3 = jnp.dot(xr + xi, bs_ref[...], preferred_element_type=f32, precision=precision)
        tr = p1 - p2
        ti = p3 - p1 - p2
        tr_ref[...] = tr.astype(mm_dtype)                # explicit VMEM scratch
        ti_ref[...] = ti.astype(mm_dtype)
        ts_ref[...] = (tr + ti).astype(mm_dtype)

        # ---- Stage 2: Y_b = M_H @ T_b, stored straight into the NCHW block. ----
        ar = ar_ref[...]
        ai = ai_ref[...]
        asum = as_ref[...]                               # hoisted constant (ar + ai)
        for b in range(B):                               # static unroll, B is small
            rows = pl.ds(b * H, H)
            q1 = jnp.dot(ar, tr_ref[rows, :], preferred_element_type=f32, precision=precision)
            q2 = jnp.dot(ai, ti_ref[rows, :], preferred_element_type=f32, precision=precision)
            q3 = jnp.dot(asum, ts_ref[rows, :], preferred_element_type=f32, precision=precision)
            o_ref[b, 0, :, :] = q1 - q2
            o_ref[b, 1, :, :] = q3 - q1 - q2

    return kernel


def _make_kernel_4mult(B, H, W, mm_dtype, precision):
    """bf16 fast path: plain 4-multiply complex products (no cancellation,
    no extra full-array adds/casts; matmuls are cheap at bf16 MXU rates)."""
    f32 = jnp.float32

    def kernel(x_ref, ar_ref, ai_ref, btr_ref, bti_ref,
               o_ref, tr_ref, ti_ref):
        x = x_ref[...]                                   # (B, 2, H, W)
        xr = x[:, 0].reshape(B * H, W).astype(mm_dtype)
        xi = x[:, 1].reshape(B * H, W).astype(mm_dtype)
        btr = btr_ref[...]
        bti = bti_ref[...]

        # ---- Stage 1: T = X @ M_W^T ----
        rr = jnp.dot(xr, btr, preferred_element_type=f32, precision=precision)
        ii = jnp.dot(xi, bti, preferred_element_type=f32, precision=precision)
        ri = jnp.dot(xr, bti, preferred_element_type=f32, precision=precision)
        ir = jnp.dot(xi, btr, preferred_element_type=f32, precision=precision)
        tr_ref[...] = (rr - ii).astype(mm_dtype)
        ti_ref[...] = (ri + ir).astype(mm_dtype)

        # ---- Stage 2: Y_b = M_H @ T_b ----
        ar = ar_ref[...]
        ai = ai_ref[...]
        for b in range(B):
            rows = pl.ds(b * H, H)
            tr = tr_ref[rows, :]
            ti = ti_ref[rows, :]
            qrr = jnp.dot(ar, tr, preferred_element_type=f32, precision=precision)
            qii = jnp.dot(ai, ti, preferred_element_type=f32, precision=precision)
            qri = jnp.dot(ar, ti, preferred_element_type=f32, precision=precision)
            qir = jnp.dot(ai, tr, preferred_element_type=f32, precision=precision)
            o_ref[b, 0, :, :] = qrr - qii
            o_ref[b, 1, :, :] = qri + qir

    return kernel


# ---------------------------------------------------------------------------
# pallas_call builder + public wrapper
# ---------------------------------------------------------------------------
def _build_call(N, H, W, B, mm_dtype, use_gauss, precision, buffered_consts):
    mm_itemsize = jnp.dtype(mm_dtype).itemsize
    # Constant index maps: matrices are DMA'd into VMEM once and never re-fetched;
    # Buffered(1) additionally drops the unused second buffer.
    mat_kwargs = {"pipeline_mode": pl.Buffered(1)} if buffered_consts else {}

    x_spec = pl.BlockSpec((B, 2, H, W), lambda g: (g, 0, 0, 0))
    out_spec = pl.BlockSpec((B, 2, H, W), lambda g: (g, 0, 0, 0))
    mat_h_spec = pl.BlockSpec((H, H), lambda g: (0, 0), **mat_kwargs)
    mat_w_spec = pl.BlockSpec((W, W), lambda g: (0, 0), **mat_kwargs)

    if use_gauss:
        kernel = _make_kernel_gauss(B, H, W, mm_dtype, precision)
        in_specs = [x_spec, mat_h_spec, mat_h_spec, mat_h_spec,
                    mat_w_spec, mat_w_spec, mat_w_spec]
        n_scratch = 3
    else:
        kernel = _make_kernel_4mult(B, H, W, mm_dtype, precision)
        in_specs = [x_spec, mat_h_spec, mat_h_spec, mat_w_spec, mat_w_spec]
        n_scratch = 2

    grid_spec = pltpu.PrefetchScalarGridSpec(
        num_scalar_prefetch=0,
        grid=(N // B,),
        in_specs=in_specs,
        out_specs=out_spec,
        scratch_shapes=[pltpu.VMEM((B * H, W), mm_dtype)] * n_scratch,
    )

    return pl.pallas_call(
        kernel,
        out_shape=jax.ShapeDtypeStruct((N, 2, H, W), jnp.float32),
        grid_spec=grid_spec,
        compiler_params=pltpu.CompilerParams(
            dimension_semantics=("parallel",),
            vmem_limit_bytes=_vmem_limit_bytes(
                B, H, W, mm_itemsize, use_gauss,
                const_buffers=1 if buffered_consts else 2),
        ),
    )


def ifft2c_nchw(x: jax.Array, *, mm_dtype=jnp.float32, block_batch=None,
                precision=None) -> jax.Array:
    """x: (N, 2, H, W) -> centered ortho 2D IFFT, (N, 2, H, W) float32.

    Default (mm_dtype=f32, precision=HIGHEST) preserves the module's float32
    semantics.  mm_dtype=jnp.bfloat16 runs the MXU with bf16 operands + f32
    accumulation (~3x matmul throughput, half the operand DMA) at ~1e-2 accuracy.
    """
    x = x.astype(jnp.float32)
    N, C, H, W = x.shape
    assert C == 2, "channel dim must be 2 (real, imag)"

    mm_dtype = jnp.dtype(mm_dtype)
    use_gauss = mm_dtype == jnp.dtype(jnp.float32)
    if precision is None:
        precision = (jax.lax.Precision.HIGHEST if use_gauss
                     else jax.lax.Precision.DEFAULT)

    megacore = _is_megacore()
    B = _choose_block_batch(N, H, megacore) if block_batch is None else block_batch
    assert N % B == 0 and (B == N or (B * H) % 8 == 0)

    mhr, mhi = _shifted_idft_parts(H)          # M_H
    mwr, mwi = _shifted_idft_parts(W)          # M_W
    ar, ai = mhr.astype(mm_dtype), mhi.astype(mm_dtype)
    btr, bti = mwr.T.astype(mm_dtype), mwi.T.astype(mm_dtype)   # M_W^T

    if use_gauss:
        # Hoisted grid-invariant sums (DMA'd once, never recomputed per step).
        asum = (mhr + mhi).astype(mm_dtype)
        bsum = (mwr.T + mwi.T).astype(mm_dtype)
        operands = (x, ar, ai, asum, btr, bti, bsum)
    else:
        operands = (x, ar, ai, btr, bti)

    try:
        return _build_call(N, H, W, B, mm_dtype, use_gauss, precision,
                           buffered_consts=True)(*operands)
    except Exception:
        # Fallback in case the installed JAX rejects pl.Buffered(1) for
        # pallas_call block specs (double-buffers the small constant matrices).
        return _build_call(N, H, W, B, mm_dtype, use_gauss, precision,
                           buffered_consts=False)(*operands)


if __name__ == "__main__":
    key = jax.random.PRNGKey(0)
    N, C, H, W = 2, 2, 16, 16
    x = jax.random.normal(key, (N, C, H, W), dtype=jnp.float32)

    # Reference: centered ortho 2D inverse FFT (== fastmri.ifft2c on permuted input).
    xc = x[:, 0] + 1j * x[:, 1]
    ref_c = jnp.fft.fftshift(
        jnp.fft.ifft2(jnp.fft.ifftshift(xc, axes=(-2, -1)), norm="ortho"),
        axes=(-2, -1))
    ref = jnp.stack([ref_c.real, ref_c.imag], axis=1).astype(jnp.float32)

    # Default full-f32 path (pinned HIGHEST precision, float32 semantics).
    out = jax.block_until_ready(ifft2c_nchw(x))
    assert out.shape == (N, 2, H, W)
    assert jnp.allclose(out, ref, atol=1e-3, rtol=1e-3), "f32 path mismatch vs FFT reference"

    # bf16-operand / f32-accumulation fast path (4-mult complex products).
    out_bf16 = jax.block_until_ready(ifft2c_nchw(x, mm_dtype=jnp.bfloat16))
    assert jnp.allclose(out_bf16, ref, atol=5e-2, rtol=5e-2), "bf16 path mismatch vs FFT reference"

    print("KERNEL_OK")
</pallas_src>

<mosaic_0001>
module attributes {stable_mosaic.version = 11 : i64} {
  func.func @kernel(%arg0: i32, %arg1: memref<1x2x16x16xf32, #tpu.memory_space<vmem>>, %arg2: memref<16x16xf32, #tpu.memory_space<vmem>>, %arg3: memref<16x16xf32, #tpu.memory_space<vmem>>, %arg4: memref<16x16xf32, #tpu.memory_space<vmem>>, %arg5: memref<16x16xf32, #tpu.memory_space<vmem>>, %arg6: memref<16x16xf32, #tpu.memory_space<vmem>>, %arg7: memref<16x16xf32, #tpu.memory_space<vmem>>, %arg8: memref<1x2x16x16xf32, #tpu.memory_space<vmem>>, %arg9: memref<16x16xf32, #tpu.memory_space<vmem>>, %arg10: memref<16x16xf32, #tpu.memory_space<vmem>>, %arg11: memref<16x16xf32, #tpu.memory_space<vmem>>) attributes {dimension_semantics = [#tpu.dimension_semantics<parallel>], iteration_bounds = array<i64: 2>, scalar_prefetch = 0 : i64, scratch_operands = 3 : i64, tpu.core_type = #tpu.core_type<tc>, window_params = [{transform_indices = @transform_0, window_bounds = array<i64: 1, 2, 16, 16>}, {pipeline_mode = #tpu.pipeline_mode<synchronous>, transform_indices = @transform_1, window_bounds = array<i64: 16, 16>}, {pipeline_mode = #tpu.pipeline_mode<synchronous>, transform_indices = @transform_2, window_bounds = array<i64: 16, 16>}, {pipeline_mode = #tpu.pipeline_mode<synchronous>, transform_indices = @transform_3, window_bounds = array<i64: 16, 16>}, {pipeline_mode = #tpu.pipeline_mode<synchronous>, transform_indices = @transform_4, window_bounds = array<i64: 16, 16>}, {pipeline_mode = #tpu.pipeline_mode<synchronous>, transform_indices = @transform_5, window_bounds = array<i64: 16, 16>}, {pipeline_mode = #tpu.pipeline_mode<synchronous>, transform_indices = @transform_6, window_bounds = array<i64: 16, 16>}, {transform_indices = @transform_7, window_bounds = array<i64: 1, 2, 16, 16>}]} {
    %c0 = arith.constant 0 : index
    %c0_0 = arith.constant 0 : index
    %c0_1 = arith.constant 0 : index
    %c0_2 = arith.constant 0 : index
    %0 = vector.load %arg1[%c0, %c0_0, %c0_1, %c0_2] : memref<1x2x16x16xf32, #tpu.memory_space<vmem>>, vector<1x2x16x16xf32>
    %1 = vector.extract_strided_slice %0 {offsets = [0, 0, 0, 0], sizes = [1, 1, 16, 16], strides = [1, 1, 1, 1]} : vector<1x2x16x16xf32> to vector<1x1x16x16xf32>
    %2 = vector.shape_cast %1 : vector<1x1x16x16xf32> to vector<1x16x16xf32>
    %3 = vector.shape_cast %2 : vector<1x16x16xf32> to vector<16x16xf32>
    %4 = vector.extract_strided_slice %0 {offsets = [0, 1, 0, 0], sizes = [1, 1, 16, 16], strides = [1, 1, 1, 1]} : vector<1x2x16x16xf32> to vector<1x1x16x16xf32>
    %5 = vector.shape_cast %4 : vector<1x1x16x16xf32> to vector<1x16x16xf32>
    %6 = vector.shape_cast %5 : vector<1x16x16xf32> to vector<16x16xf32>
    %c0_3 = arith.constant 0 : index
    %c0_4 = arith.constant 0 : index
    %7 = vector.load %arg5[%c0_3, %c0_4] : memref<16x16xf32, #tpu.memory_space<vmem>>, vector<16x16xf32>
    %cst = arith.constant dense<0.000000e+00> : vector<16x16xf32>
    %8 = tpu.matmul %3, %7, %cst {dimension_numbers = #tpu.dot_dimension_numbers<[1], [0], [0], [1], [0, 0, 1, 1], [], []>, precision = #tpu.contract_precision<fp32>} : vector<16x16xf32>, vector<16x16xf32>, vector<16x16xf32> -> vector<16x16xf32>
    %c0_5 = arith.constant 0 : index
    %c0_6 = arith.constant 0 : index
    %9 = vector.load %arg6[%c0_5, %c0_6] : memref<16x16xf32, #tpu.memory_space<vmem>>, vector<16x16xf32>
    %cst_7 = arith.constant dense<0.000000e+00> : vector<16x16xf32>
    %10 = tpu.matmul %6, %9, %cst_7 {dimension_numbers = #tpu.dot_dimension_numbers<[1], [0], [0], [1], [0, 0, 1, 1], [], []>, precision = #tpu.contract_precision<fp32>} : vector<16x16xf32>, vector<16x16xf32>, vector<16x16xf32> -> vector<16x16xf32>
    %11 = arith.addf %3, %6 : vector<16x16xf32>
    %c0_8 = arith.constant 0 : index
    %c0_9 = arith.constant 0 : index
    %12 = vector.load %arg7[%c0_8, %c0_9] : memref<16x16xf32, #tpu.memory_space<vmem>>, vector<16x16xf32>
    %cst_10 = arith.constant dense<0.000000e+00> : vector<16x16xf32>
    %13 = tpu.matmul %11, %12, %cst_10 {dimension_numbers = #tpu.dot_dimension_numbers<[1], [0], [0], [1], [0, 0, 1, 1], [], []>, precision = #tpu.contract_precision<fp32>} : vector<16x16xf32>, vector<16x16xf32>, vector<16x16xf32> -> vector<16x16xf32>
    %14 = arith.subf %8, %10 : vector<16x16xf32>
    %15 = arith.subf %13, %8 : vector<16x16xf32>
    %16 = arith.subf %15, %10 : vector<16x16xf32>
    %c0_11 = arith.constant 0 : index
    %c0_12 = arith.constant 0 : index
    %17 = vector.load %arg9[%c0_11, %c0_12] : memref<16x16xf32, #tpu.memory_space<vmem>>, vector<16x16xf32>
    tpu.vector_store %arg9[%c0_11, %c0_12], %14 {strides = array<i32>} : memref<16x16xf32, #tpu.memory_space<vmem>>, vector<16x16xf32>,
    %c0_13 = arith.constant 0 : index
    %c0_14 = arith.constant 0 : index
    %18 = vector.load %arg10[%c0_13, %c0_14] : memref<16x16xf32, #tpu.memory_space<vmem>>, vector<16x16xf32>
    tpu.vector_store %arg10[%c0_13, %c0_14], %16 {strides = array<i32>} : memref<16x16xf32, #tpu.memory_space<vmem>>, vector<16x16xf32>,
    %19 = arith.addf %14, %16 : vector<16x16xf32>
    %c0_15 = arith.constant 0 : index
    %c0_16 = arith.constant 0 : index
    %20 = vector.load %arg11[%c0_15, %c0_16] : memref<16x16xf32, #tpu.memory_space<vmem>>, vector<16x16xf32>
    tpu.vector_store %arg11[%c0_15, %c0_16], %19 {strides = array<i32>} : memref<16x16xf32, #tpu.memory_space<vmem>>, vector<16x16xf32>,
    %c0_17 = arith.constant 0 : index
    %c0_18 = arith.constant 0 : index
    %21 = vector.load %arg2[%c0_17, %c0_18] : memref<16x16xf32, #tpu.memory_space<vmem>>, vector<16x16xf32>
    %c0_19 = arith.constant 0 : index
    %c0_20 = arith.constant 0 : index
    %22 = vector.load %arg3[%c0_19, %c0_20] : memref<16x16xf32, #tpu.memory_space<vmem>>, vector<16x16xf32>
    %c0_21 = arith.constant 0 : index
    %c0_22 = arith.constant 0 : index
    %23 = vector.load %arg4[%c0_21, %c0_22] : memref<16x16xf32, #tpu.memory_space<vmem>>, vector<16x16xf32>
    %c0_23 = arith.constant 0 : index
    %c0_24 = arith.constant 0 : index
    %24 = vector.load %arg9[%c0_23, %c0_24] : memref<16x16xf32, #tpu.memory_space<vmem>>, vector<16x16xf32>
    %cst_25 = arith.constant dense<0.000000e+00> : vector<16x16xf32>
    %25 = tpu.matmul %21, %24, %cst_25 {dimension_numbers = #tpu.dot_dimension_numbers<[1], [0], [0], [1], [0, 0, 1, 1], [], []>, precision = #tpu.contract_precision<fp32>} : vector<16x16xf32>, vector<16x16xf32>, vector<16x16xf32> -> vector<16x16xf32>
    %c0_26 = arith.constant 0 : index
    %c0_27 = arith.constant 0 : index
    %26 = vector.load %arg10[%c0_26, %c0_27] : memref<16x16xf32, #tpu.memory_space<vmem>>, vector<16x16xf32>
    %cst_28 = arith.constant dense<0.000000e+00> : vector<16x16xf32>
    %27 = tpu.matmul %22, %26, %cst_28 {dimension_numbers = #tpu.dot_dimension_numbers<[1], [0], [0], [1], [0, 0, 1, 1], [], []>, precision = #tpu.contract_precision<fp32>} : vector<16x16xf32>, vector<16x16xf32>, vector<16x16xf32> -> vector<16x16xf32>
    %c0_29 = arith.constant 0 : index
    %c0_30 = arith.constant 0 : index
    %28 = vector.load %arg11[%c0_29, %c0_30] : memref<16x16xf32, #tpu.memory_space<vmem>>, vector<16x16xf32>
    %cst_31 = arith.constant dense<0.000000e+00> : vector<16x16xf32>
    %29 = tpu.matmul %23, %28, %cst_31 {dimension_numbers = #tpu.dot_dimension_numbers<[1], [0], [0], [1], [0, 0, 1, 1], [], []>, precision = #tpu.contract_precision<fp32>} : vector<16x16xf32>, vector<16x16xf32>, vector<16x16xf32> -> vector<16x16xf32>
    %30 = arith.subf %25, %27 : vector<16x16xf32>
    %c0_32 = arith.constant 0 : index
    %c0_33 = arith.constant 0 : index
    %c0_34 = arith.constant 0 : index
    %c0_35 = arith.constant 0 : index
    %31 = vector.load %arg8[%c0_32, %c0_33, %c0_34, %c0_35] : memref<1x2x16x16xf32, #tpu.memory_space<vmem>>, vector<1x1x16x16xf32>
    %32 = vector.shape_cast %31 : vector<1x1x16x16xf32> to vector<16x16xf32>
    %33 = vector.shape_cast %30 : vector<16x16xf32> to vector<1x1x16x16xf32>
    tpu.vector_store %arg8[%c0_32, %c0_33, %c0_34, %c0_35], %33 {strides = array<i32>} : memref<1x2x16x16xf32, #tpu.memory_space<vmem>>, vector<1x1x16x16xf32>,
    %34 = arith.subf %29, %25 : vector<16x16xf32>
    %35 = arith.subf %34, %27 : vector<16x16xf32>
    %c0_36 = arith.constant 0 : index
    %c1 = arith.constant 1 : index
    %c0_37 = arith.constant 0 : index
    %c0_38 = arith.constant 0 : index
    %36 = vector.load %arg8[%c0_36, %c1, %c0_37, %c0_38] : memref<1x2x16x16xf32, #tpu.memory_space<vmem>>, vector<1x1x16x16xf32>
    %37 = vector.shape_cast %36 : vector<1x1x16x16xf32> to vector<16x16xf32>
    %38 = vector.shape_cast %35 : vector<16x16xf32> to vector<1x1x16x16xf32>
    tpu.vector_store %arg8[%c0_36, %c1, %c0_37, %c0_38], %38 {strides = array<i32>} : memref<1x2x16x16xf32, #tpu.memory_space<vmem>>, vector<1x1x16x16xf32>,
    return
  }
  func.func @transform_0(%arg0: i32) -> (i32, i32, i32, i32) {
    %c0_i32 = arith.constant 0 : i32
    %c0_i32_0 = arith.constant 0 : i32
    %c0_i32_1 = arith.constant 0 : i32
    %c0_i32_2 = arith.constant 0 : i32
    return %arg0, %c0_i32, %c0_i32_0, %c0_i32_1 : i32, i32, i32, i32
  }
  func.func @transform_1(%arg0: i32) -> (i32, i32) {
    %c0_i32 = arith.constant 0 : i32
    %c0_i32_0 = arith.constant 0 : i32
    %c0_i32_1 = arith.constant 0 : i32
    return %c0_i32, %c0_i32_0 : i32, i32
  }
  func.func @transform_2(%arg0: i32) -> (i32, i32) {
    %c0_i32 = arith.constant 0 : i32
    %c0_i32_0 = arith.constant 0 : i32
    %c0_i32_1 = arith.constant 0 : i32
    return %c0_i32, %c0_i32_0 : i32, i32
  }
  func.func @transform_3(%arg0: i32) -> (i32, i32) {
    %c0_i32 = arith.constant 0 : i32
    %c0_i32_0 = arith.constant 0 : i32
    %c0_i32_1 = arith.constant 0 : i32
    return %c0_i32, %c0_i32_0 : i32, i32
  }
  func.func @transform_4(%arg0: i32) -> (i32, i32) {
    %c0_i32 = arith.constant 0 : i32
    %c0_i32_0 = arith.constant 0 : i32
    %c0_i32_1 = arith.constant 0 : i32
    return %c0_i32, %c0_i32_0 : i32, i32
  }
  func.func @transform_5(%arg0: i32) -> (i32, i32) {
    %c0_i32 = arith.constant 0 : i32
    %c0_i32_0 = arith.constant 0 : i32
    %c0_i32_1 = arith.constant 0 : i32
    return %c0_i32, %c0_i32_0 : i32, i32
  }
  func.func @transform_6(%arg0: i32) -> (i32, i32) {
    %c0_i32 = arith.constant 0 : i32
    %c0_i32_0 = arith.constant 0 : i32
    %c0_i32_1 = arith.constant 0 : i32
    return %c0_i32, %c0_i32_0 : i32, i32
  }
  func.func @transform_7(%arg0: i32) -> (i32, i32, i32, i32) {
    %c0_i32 = arith.constant 0 : i32
    %c0_i32_0 = arith.constant 0 : i32
    %c0_i32_1 = arith.constant 0 : i32
    %c0_i32_2 = arith.constant 0 : i32
    return %arg0, %c0_i32, %c0_i32_0, %c0_i32_1 : i32, i32, i32, i32
  }
}

module attributes {stable_mosaic.version = 11 : i64} {
  func.func @kernel(%arg0: i32, %arg1: memref<1x2x16x16xf32, #tpu.memory_space<vmem>>, %arg2: memref<16x16xf32, #tpu.memory_space<vmem>>, %arg3: memref<16x16xf32, #tpu.memory_space<vmem>>, %arg4: memref<16x16xf32, #tpu.memory_space<vmem>>, %arg5: memref<16x16xf32, #tpu.memory_space<vmem>>, %arg6: memref<16x16xf32, #tpu.memory_space<vmem>>, %arg7: memref<16x16xf32, #tpu.memory_space<vmem>>, %arg8: memref<1x2x16x16xf32, #tpu.memory_space<vmem>>, %arg9: memref<16x16xf32, #tpu.memory_space<vmem>>, %arg10: memref<16x16xf32, #tpu.memory_space<vmem>>, %arg11: memref<16x16xf32, #tpu.memory_space<vmem>>) attributes {dimension_semantics = [#tpu.dimension_semantics<parallel>], iteration_bounds = array<i64: 2>, scalar_prefetch = 0 : i64, scratch_operands = 3 : i64, tpu.core_type = #tpu.core_type<tc>, window_params = [{transform_indices = @transform_0, window_bounds = array<i64: 1, 2, 16, 16>}, {pipeline_mode = #tpu.pipeline_mode<synchronous>, transform_indices = @transform_1, window_bounds = array<i64: 16, 16>}, {pipeline_mode = #tpu.pipeline_mode<synchronous>, transform_indices = @transform_2, window_bounds = array<i64: 16, 16>}, {pipeline_mode = #tpu.pipeline_mode<synchronous>, transform_indices = @transform_3, window_bounds = array<i64: 16, 16>}, {pipeline_mode = #tpu.pipeline_mode<synchronous>, transform_indices = @transform_4, window_bounds = array<i64: 16, 16>}, {pipeline_mode = #tpu.pipeline_mode<synchronous>, transform_indices = @transform_5, window_bounds = array<i64: 16, 16>}, {pipeline_mode = #tpu.pipeline_mode<synchronous>, transform_indices = @transform_6, window_bounds = array<i64: 16, 16>}, {transform_indices = @transform_7, window_bounds = array<i64: 1, 2, 16, 16>}]} {
    %c0 = arith.constant 0 : index
    %c0_0 = arith.constant 0 : index
    %c0_1 = arith.constant 0 : index
    %c0_2 = arith.constant 0 : index
    %0 = vector.load %arg1[%c0, %c0_0, %c0_1, %c0_2] : memref<1x2x16x16xf32, #tpu.memory_space<vmem>>, vector<1x2x16x16xf32>
    %1 = vector.extract_strided_slice %0 {offsets = [0, 0, 0, 0], sizes = [1, 1, 16, 16], strides = [1, 1, 1, 1]} : vector<1x2x16x16xf32> to vector<1x1x16x16xf32>
    %2 = vector.shape_cast %1 : vector<1x1x16x16xf32> to vector<1x16x16xf32>
    %3 = vector.shape_cast %2 : vector<1x16x16xf32> to vector<16x16xf32>
    %4 = vector.extract_strided_slice %0 {offsets = [0, 1, 0, 0], sizes = [1, 1, 16, 16], strides = [1, 1, 1, 1]} : vector<1x2x16x16xf32> to vector<1x1x16x16xf32>
    %5 = vector.shape_cast %4 : vector<1x1x16x16xf32> to vector<1x16x16xf32>
    %6 = vector.shape_cast %5 : vector<1x16x16xf32> to vector<16x16xf32>
    %c0_3 = arith.constant 0 : index
    %c0_4 = arith.constant 0 : index
    %7 = vector.load %arg5[%c0_3, %c0_4] : memref<16x16xf32, #tpu.memory_space<vmem>>, vector<16x16xf32>
    %cst = arith.constant dense<0.000000e+00> : vector<16x16xf32>
    %8 = tpu.matmul %3, %7, %cst {dimension_numbers = #tpu.dot_dimension_numbers<[1], [0], [0], [1], [0, 0, 1, 1], [], []>, precision = #tpu.contract_precision<fp32>} : vector<16x16xf32>, vector<16x16xf32>, vector<16x16xf32> -> vector<16x16xf32>
    %c0_5 = arith.constant 0 : index
    %c0_6 = arith.constant 0 : index
    %9 = vector.load %arg6[%c0_5, %c0_6] : memref<16x16xf32, #tpu.memory_space<vmem>>, vector<16x16xf32>
    %cst_7 = arith.constant dense<0.000000e+00> : vector<16x16xf32>
    %10 = tpu.matmul %6, %9, %cst_7 {dimension_numbers = #tpu.dot_dimension_numbers<[1], [0], [0], [1], [0, 0, 1, 1], [], []>, precision = #tpu.contract_precision<fp32>} : vector<16x16xf32>, vector<16x16xf32>, vector<16x16xf32> -> vector<16x16xf32>
    %11 = arith.addf %3, %6 : vector<16x16xf32>
    %c0_8 = arith.constant 0 : index
    %c0_9 = arith.constant 0 : index
    %12 = vector.load %arg7[%c0_8, %c0_9] : memref<16x16xf32, #tpu.memory_space<vmem>>, vector<16x16xf32>
    %cst_10 = arith.constant dense<0.000000e+00> : vector<16x16xf32>
    %13 = tpu.matmul %11, %12, %cst_10 {dimension_numbers = #tpu.dot_dimension_numbers<[1], [0], [0], [1], [0, 0, 1, 1], [], []>, precision = #tpu.contract_precision<fp32>} : vector<16x16xf32>, vector<16x16xf32>, vector<16x16xf32> -> vector<16x16xf32>
    %14 = arith.subf %8, %10 : vector<16x16xf32>
    %15 = arith.subf %13, %8 : vector<16x16xf32>
    %16 = arith.subf %15, %10 : vector<16x16xf32>
    %c0_11 = arith.constant 0 : index
    %c0_12 = arith.constant 0 : index
    %17 = vector.load %arg9[%c0_11, %c0_12] : memref<16x16xf32, #tpu.memory_space<vmem>>, vector<16x16xf32>
    tpu.vector_store %arg9[%c0_11, %c0_12], %14 {strides = array<i32>} : memref<16x16xf32, #tpu.memory_space<vmem>>, vector<16x16xf32>,
    %c0_13 = arith.constant 0 : index
    %c0_14 = arith.constant 0 : index
    %18 = vector.load %arg10[%c0_13, %c0_14] : memref<16x16xf32, #tpu.memory_space<vmem>>, vector<16x16xf32>
    tpu.vector_store %arg10[%c0_13, %c0_14], %16 {strides = array<i32>} : memref<16x16xf32, #tpu.memory_space<vmem>>, vector<16x16xf32>,
    %19 = arith.addf %14, %16 : vector<16x16xf32>
    %c0_15 = arith.constant 0 : index
    %c0_16 = arith.constant 0 : index
    %20 = vector.load %arg11[%c0_15, %c0_16] : memref<16x16xf32, #tpu.memory_space<vmem>>, vector<16x16xf32>
    tpu.vector_store %arg11[%c0_15, %c0_16], %19 {strides = array<i32>} : memref<16x16xf32, #tpu.memory_space<vmem>>, vector<16x16xf32>,
    %c0_17 = arith.constant 0 : index
    %c0_18 = arith.constant 0 : index
    %21 = vector.load %arg2[%c0_17, %c0_18] : memref<16x16xf32, #tpu.memory_space<vmem>>, vector<16x16xf32>
    %c0_19 = arith.constant 0 : index
    %c0_20 = arith.constant 0 : index
    %22 = vector.load %arg3[%c0_19, %c0_20] : memref<16x16xf32, #tpu.memory_space<vmem>>, vector<16x16xf32>
    %c0_21 = arith.constant 0 : index
    %c0_22 = arith.constant 0 : index
    %23 = vector.load %arg4[%c0_21, %c0_22] : memref<16x16xf32, #tpu.memory_space<vmem>>, vector<16x16xf32>
    %c0_23 = arith.constant 0 : index
    %c0_24 = arith.constant 0 : index
    %24 = vector.load %arg9[%c0_23, %c0_24] : memref<16x16xf32, #tpu.memory_space<vmem>>, vector<16x16xf32>
    %cst_25 = arith.constant dense<0.000000e+00> : vector<16x16xf32>
    %25 = tpu.matmul %21, %24, %cst_25 {dimension_numbers = #tpu.dot_dimension_numbers<[1], [0], [0], [1], [0, 0, 1, 1], [], []>, precision = #tpu.contract_precision<fp32>} : vector<16x16xf32>, vector<16x16xf32>, vector<16x16xf32> -> vector<16x16xf32>
    %c0_26 = arith.constant 0 : index
    %c0_27 = arith.constant 0 : index
    %26 = vector.load %arg10[%c0_26, %c0_27] : memref<16x16xf32, #tpu.memory_space<vmem>>, vector<16x16xf32>
    %cst_28 = arith.constant dense<0.000000e+00> : vector<16x16xf32>
    %27 = tpu.matmul %22, %26, %cst_28 {dimension_numbers = #tpu.dot_dimension_numbers<[1], [0], [0], [1], [0, 0, 1, 1], [], []>, precision = #tpu.contract_precision<fp32>} : vector<16x16xf32>, vector<16x16xf32>, vector<16x16xf32> -> vector<16x16xf32>
    %c0_29 = arith.constant 0 : index
    %c0_30 = arith.constant 0 : index
    %28 = vector.load %arg11[%c0_29, %c0_30] : memref<16x16xf32, #tpu.memory_space<vmem>>, vector<16x16xf32>
    %cst_31 = arith.constant dense<0.000000e+00> : vector<16x16xf32>
    %29 = tpu.matmul %23, %28, %cst_31 {dimension_numbers = #tpu.dot_dimension_numbers<[1], [0], [0], [1], [0, 0, 1, 1], [], []>, precision = #tpu.contract_precision<fp32>} : vector<16x16xf32>, vector<16x16xf32>, vector<16x16xf32> -> vector<16x16xf32>
    %30 = arith.subf %25, %27 : vector<16x16xf32>
    %c0_32 = arith.constant 0 : index
    %c0_33 = arith.constant 0 : index
    %c0_34 = arith.constant 0 : index
    %c0_35 = arith.constant 0 : index
    %31 = vector.load %arg8[%c0_32, %c0_33, %c0_34, %c0_35] : memref<1x2x16x16xf32, #tpu.memory_space<vmem>>, vector<1x1x16x16xf32>
    %32 = vector.shape_cast %31 : vector<1x1x16x16xf32> to vector<16x16xf32>
    %33 = vector.shape_cast %30 : vector<16x16xf32> to vector<1x1x16x16xf32>
    tpu.vector_store %arg8[%c0_32, %c0_33, %c0_34, %c0_35], %33 {strides = array<i32>} : memref<1x2x16x16xf32, #tpu.memory_space<vmem>>, vector<1x1x16x16xf32>,
    %34 = arith.subf %29, %25 : vector<16x16xf32>
    %35 = arith.subf %34, %27 : vector<16x16xf32>
    %c0_36 = arith.constant 0 : index
    %c1 = arith.constant 1 : index
    %c0_37 = arith.constant 0 : index
    %c0_38 = arith.constant 0 : index
    %36 = vector.load %arg8[%c0_36, %c1, %c0_37, %c0_38] : memref<1x2x16x16xf32, #tpu.memory_space<vmem>>, vector<1x1x16x16xf32>
    %37 = vector.shape_cast %36 : vector<1x1x16x16xf32> to vector<16x16xf32>
    %38 = vector.shape_cast %35 : vector<16x16xf32> to vector<1x1x16x16xf32>
    tpu.vector_store %arg8[%c0_36, %c1, %c0_37, %c0_38], %38 {strides = array<i32>} : memref<1x2x16x16xf32, #tpu.memory_space<vmem>>, vector<1x1x16x16xf32>,
    return
  }
  func.func @transform_0(%arg0: i32) -> (i32, i32, i32, i32) {
    %c0_i32 = arith.constant 0 : i32
    %c0_i32_0 = arith.constant 0 : i32
    %c0_i32_1 = arith.constant 0 : i32
    %c0_i32_2 = arith.constant 0 : i32
    return %arg0, %c0_i32, %c0_i32_0, %c0_i32_1 : i32, i32, i32, i32
  }
  func.func @transform_1(%arg0: i32) -> (i32, i32) {
    %c0_i32 = arith.constant 0 : i32
    %c0_i32_0 = arith.constant 0 : i32
    %c0_i32_1 = arith.constant 0 : i32
    return %c0_i32, %c0_i32_0 : i32, i32
  }
  func.func @transform_2(%arg0: i32) -> (i32, i32) {
    %c0_i32 = arith.constant 0 : i32
    %c0_i32_0 = arith.constant 0 : i32
    %c0_i32_1 = arith.constant 0 : i32
    return %c0_i32, %c0_i32_0 : i32, i32
  }
  func.func @transform_3(%arg0: i32) -> (i32, i32) {
    %c0_i32 = arith.constant 0 : i32
    %c0_i32_0 = arith.constant 0 : i32
    %c0_i32_1 = arith.constant 0 : i32
    return %c0_i32, %c0_i32_0 : i32, i32
  }
  func.func @transform_4(%arg0: i32) -> (i32, i32) {
    %c0_i32 = arith.constant 0 : i32
    %c0_i32_0 = arith.constant 0 : i32
    %c0_i32_1 = arith.constant 0 : i32
    return %c0_i32, %c0_i32_0 : i32, i32
  }
  func.func @transform_5(%arg0: i32) -> (i32, i32) {
    %c0_i32 = arith.constant 0 : i32
    %c0_i32_0 = arith.constant 0 : i32
    %c0_i32_1 = arith.constant 0 : i32
    return %c0_i32, %c0_i32_0 : i32, i32
  }
  func.func @transform_6(%arg0: i32) -> (i32, i32) {
    %c0_i32 = arith.constant 0 : i32
    %c0_i32_0 = arith.constant 0 : i32
    %c0_i32_1 = arith.constant 0 : i32
    return %c0_i32, %c0_i32_0 : i32, i32
  }
  func.func @transform_7(%arg0: i32) -> (i32, i32, i32, i32) {
    %c0_i32 = arith.constant 0 : i32
    %c0_i32_0 = arith.constant 0 : i32
    %c0_i32_1 = arith.constant 0 : i32
    %c0_i32_2 = arith.constant 0 : i32
    return %arg0, %c0_i32, %c0_i32_0, %c0_i32_1 : i32, i32, i32, i32
  }
}

</mosaic_0001>

<llo_original>
// kernel: tpu_custom_call.1
$region0: #{tpu_custom_call.1}
  #allocation0 [shape = 'u32[]', space=smem, size = 0x4, offset = 0x4, fixed_abs, tag = 'smem constant byte address 0x4 - core index']
  #allocation1 [shape = 'u32[72,128]{1,0:T(1,128)}', space=vmem, size = 0x9000, scoped, tag = 'internal scratch']
  #allocation2 [shape = 'f32[16,16]{1,0:T(8,128)}', space=vmem, size = 0x2000, scoped, tag = 'scratch operand']
  #allocation3 [shape = 'f32[16,16]{1,0:T(8,128)}', space=vmem, size = 0x2000, scoped, tag = 'scratch operand']
  #allocation4 [shape = 'f32[16,16]{1,0:T(8,128)}', space=vmem, size = 0x2000, scoped, tag = 'scratch operand']
  %s0 = inlined_call_operand.hbm [shape: f32[2,2,16,16], index: 0, kind: input, shape index: {}]
  %s1 = inlined_call_operand.hbm [shape: f32[16,16], index: 1, kind: input, shape index: {}]
  %s2 = inlined_call_operand.hbm [shape: f32[16,16], index: 2, kind: input, shape index: {}]
  %s3 = inlined_call_operand.hbm [shape: f32[16,16], index: 3, kind: input, shape index: {}]
  %s4 = inlined_call_operand.hbm [shape: f32[16,16], index: 4, kind: input, shape index: {}]
  %s5 = inlined_call_operand.hbm [shape: f32[16,16], index: 5, kind: input, shape index: {}]
  %s6 = inlined_call_operand.hbm [shape: f32[16,16], index: 6, kind: input, shape index: {}]
  %s7 = inlined_call_operand.hbm [shape: f32[2,2,16,16], index: 7, kind: output, shape index: {}]
  %s8 = sld [smem:[#allocation0]]
  $region89: #{tpu_custom_call.1} parent=0
    _
  %s10 = ssub.s32 1, %s8
  %s11 = scalar_select 0, %s10, %s8
  $region1: #{tpu_custom_call.1} parent=0
    #allocation5 [shape = 'u8[32768]{0}', space=vmem, size = 0x8000, scoped, tag = 'input window, operand 0']
    #allocation6 [shape = 's32[2]{0}', space=sflag, size = 0x8, scoped, tag = 'scoped memory for tpu_custom_call.1']
    #allocation7 [shape = 's32[2]{0}', space=sflag, size = 0x8, scoped, tag = 'scoped memory for tpu_custom_call.1']
    #allocation8 [shape = 'u8[8192]{0}', space=vmem, size = 0x2000, scoped, tag = 'input window, operand 1, single buffered']
    #allocation9 [shape = 's32[1]{0}', space=sflag, size = 0x4, scoped, tag = 'scoped memory for tpu_custom_call.1']
    #allocation10 [shape = 'u8[8192]{0}', space=vmem, size = 0x2000, scoped, tag = 'input window, operand 2, single buffered']
    #allocation11 [shape = 'u8[8192]{0}', space=vmem, size = 0x2000, scoped, tag = 'input window, operand 3, single buffered']
    #allocation12 [shape = 's32[1]{0}', space=sflag, size = 0x4, scoped, tag = 'scoped memory for tpu_custom_call.1']
    #allocation13 [shape = 'u8[8192]{0}', space=vmem, size = 0x2000, scoped, tag = 'input window, operand 4, single buffered']
    #allocation14 [shape = 'u8[8192]{0}', space=vmem, size = 0x2000, scoped, tag = 'input window, operand 5, single buffered']
    #allocation15 [shape = 's32[1]{0}', space=sflag, size = 0x4, scoped, tag = 'scoped memory for tpu_custom_call.1']
    #allocation16 [shape = 'u8[8192]{0}', space=vmem, size = 0x2000, scoped, tag = 'input window, operand 6, single buffered']
    #allocation17 [shape = 'u8[32768]{0}', space=vmem, size = 0x8000, scoped, tag = 'output window, operand 0']
    %12 = vsyncpa [#allocation6], 0
    %s13 = scalar_lea.sflag [#allocation6], 1
    %14 = vsyncpa %s13, 0
    %15 = vsyncpa [#allocation9], 0
    %16 = vsyncpa [#allocation12], 0
    %17 = vsyncpa [#allocation15], 0
    %18 = vsyncpa [#allocation7], 0
    %s19 = scalar_lea.sflag [#allocation7], 1
    %20 = vsyncpa %s19, 0
    loop: start=0, step=1, limit=4
    $region2: #{tpu_custom_call.1} parent=1 // loop_pre_header
      _
    $region3: #{tpu_custom_call.1} parent=1 // loop_header
      %s22 = sphi 0, %s26
      %p23 = scmp.ge.s32.totalorder %s22, 4
      %s32 = sphi 0, %s34
      %s35 = sphi 0, %s32
      %s36 = sphi 0, %s35
      %s52 = sphi 0, %s36
      %s56 = sphi 0, %s56
      %s58 = sphi 0, %s56
      %s59 = sphi 0, %s58
      %s73 = sphi 0, %s59
      %s77 = sphi 0, %s77
      %s79 = sphi 0, %s77
      %s80 = sphi 0, %s79
      %s94 = sphi 0, %s80
      %s98 = sphi 0, %s98
      %s100 = sphi 0, %s98
      %s101 = sphi 0, %s100
      %s115 = sphi 0, %s101
      %s119 = sphi 0, %s119
      %s121 = sphi 0, %s119
      %s122 = sphi 0, %s121
      %s136 = sphi 0, %s122
      %s140 = sphi 0, %s140
      %s142 = sphi 0, %s140
      %s143 = sphi 0, %s142
      %s157 = sphi 0, %s143
      %s161 = sphi 0, %s161
      %s163 = sphi 0, %s161
      %s164 = sphi 0, %s163
      %s178 = sphi 0, %s164
      %s184 = sphi 0, %s186
      %s187 = sphi 0, %s184
      %s188 = sphi 0, %s187
      %s204 = sphi 0, %s188
    $region4: #{tpu_custom_call.1} parent=1 // loop_header_branch
      %25 = sbr.rel (%p23) target = $region8
    $region5: #{tpu_custom_call.1} parent=1 // loop_body
      %s27 = ssub.s32 %s22, 1
      %s28 = ssub.s32 %s22, 2
      %s29 = sadd.s32 %s22, 1
      %s30 = ssub.s32 %s22, %s29
      %p31 = scmp.eq.s32.totalorder %s30, 0
      %s33 = sadd.s32 %s32, 1
      %s34 = scalar_select %p31, %s32, %s33
      %p37 = pneg %p31
      %p38 = scmp.eq.s32.totalorder %s22, 1
      %p39 = por %p37, %p38
      %p40 = scmp.ne.s32.totalorder %s32, %s35
      %p41 = scmp.eq.s32.totalorder %s22, 0
      %p42 = por %p40, %p41
      %p43 = scmp.ne.s32.totalorder %s32, %s35
      %p44 = scmp.eq.s32.totalorder %s27, 1
      %p45 = por %p43, %p44
      %p46 = scmp.ne.s32.totalorder %s35, %s36
      %p47 = scmp.eq.s32.totalorder %s27, 0
      %p48 = por %p46, %p47
      %p49 = scmp.ne.s32.totalorder %s35, %s36
      %p50 = scmp.eq.s32.totalorder %s28, 1
      %p51 = por %p49, %p50
      %p53 = scmp.ne.s32.totalorder %s36, %s52
      %p54 = scmp.eq.s32.totalorder %s28, 0
      %p55 = por %p53, %p54
      %s57 = sadd.s32 %s56, 1
      %p60 = scmp.eq.s32.totalorder %s22, 1
      %p61 = scmp.ne.s32.totalorder %s56, %s58
      %p62 = scmp.eq.s32.totalorder %s22, 0
      %p63 = por %p61, %p62
      %p64 = scmp.ne.s32.totalorder %s56, %s58
      %p65 = scmp.eq.s32.totalorder %s27, 1
      %p66 = por %p64, %p65
      %p67 = scmp.ne.s32.totalorder %s58, %s59
      %p68 = scmp.eq.s32.totalorder %s27, 0
      %p69 = por %p67, %p68
      %p70 = scmp.ne.s32.totalorder %s58, %s59
      %p71 = scmp.eq.s32.totalorder %s28, 1
      %p72 = por %p70, %p71
      %p74 = scmp.ne.s32.totalorder %s59, %s73
      %p75 = scmp.eq.s32.totalorder %s28, 0
      %p76 = por %p74, %p75
      %s78 = sadd.s32 %s77, 1
      %p81 = scmp.eq.s32.totalorder %s22, 1
      %p82 = scmp.ne.s32.totalorder %s77, %s79
      %p83 = scmp.eq.s32.totalorder %s22, 0
      %p84 = por %p82, %p83
      %p85 = scmp.ne.s32.totalorder %s77, %s79
      %p86 = scmp.eq.s32.totalorder %s27, 1
      %p87 = por %p85, %p86
      %p88 = scmp.ne.s32.totalorder %s79, %s80
      %p89 = scmp.eq.s32.totalorder %s27, 0
      %p90 = por %p88, %p89
      %p91 = scmp.ne.s32.totalorder %s79, %s80
      %p92 = scmp.eq.s32.totalorder %s28, 1
      %p93 = por %p91, %p92
      %p95 = scmp.ne.s32.totalorder %s80, %s94
      %p96 = scmp.eq.s32.totalorder %s28, 0
      %p97 = por %p95, %p96
      %s99 = sadd.s32 %s98, 1
      %p102 = scmp.eq.s32.totalorder %s22, 1
      %p103 = scmp.ne.s32.totalorder %s98, %s100
      %p104 = scmp.eq.s32.totalorder %s22, 0
      %p105 = por %p103, %p104
      %p106 = scmp.ne.s32.totalorder %s98, %s100
      %p107 = scmp.eq.s32.totalorder %s27, 1
      %p108 = por %p106, %p107
      %p109 = scmp.ne.s32.totalorder %s100, %s101
      %p110 = scmp.eq.s32.totalorder %s27, 0
      %p111 = por %p109, %p110
      %p112 = scmp.ne.s32.totalorder %s100, %s101
      %p113 = scmp.eq.s32.totalorder %s28, 1
      %p114 = por %p112, %p113
      %p116 = scmp.ne.s32.totalorder %s101, %s115
      %p117 = scmp.eq.s32.totalorder %s28, 0
      %p118 = por %p116, %p117
      %s120 = sadd.s32 %s119, 1
      %p123 = scmp.eq.s32.totalorder %s22, 1
      %p124 = scmp.ne.s32.totalorder %s119, %s121
      %p125 = scmp.eq.s32.totalorder %s22, 0
      %p126 = por %p124, %p125
      %p127 = scmp.ne.s32.totalorder %s119, %s121
      %p128 = scmp.eq.s32.totalorder %s27, 1
      %p129 = por %p127, %p128
      %p130 = scmp.ne.s32.totalorder %s121, %s122
      %p131 = scmp.eq.s32.totalorder %s27, 0
      %p132 = por %p130, %p131
      %p133 = scmp.ne.s32.totalorder %s121, %s122
      %p134 = scmp.eq.s32.totalorder %s28, 1
      %p135 = por %p133, %p134
      %p137 = scmp.ne.s32.totalorder %s122, %s136
      %p138 = scmp.eq.s32.totalorder %s28, 0
      %p139 = por %p137, %p138
      %s141 = sadd.s32 %s140, 1
      %p144 = scmp.eq.s32.totalorder %s22, 1
      %p145 = scmp.ne.s32.totalorder %s140, %s142
      %p146 = scmp.eq.s32.totalorder %s22, 0
      %p147 = por %p145, %p146
      %p148 = scmp.ne.s32.totalorder %s140, %s142
      %p149 = scmp.eq.s32.totalorder %s27, 1
      %p150 = por %p148, %p149
      %p151 = scmp.ne.s32.totalorder %s142, %s143
      %p152 = scmp.eq.s32.totalorder %s27, 0
      %p153 = por %p151, %p152
      %p154 = scmp.ne.s32.totalorder %s142, %s143
      %p155 = scmp.eq.s32.totalorder %s28, 1
      %p156 = por %p154, %p155
      %p158 = scmp.ne.s32.totalorder %s143, %s157
      %p159 = scmp.eq.s32.totalorder %s28, 0
      %p160 = por %p158, %p159
      %s162 = sadd.s32 %s161, 1
      %p165 = scmp.eq.s32.totalorder %s22, 1
      %p166 = scmp.ne.s32.totalorder %s161, %s163
      %p167 = scmp.eq.s32.totalorder %s22, 0
      %p168 = por %p166, %p167
      %p169 = scmp.ne.s32.totalorder %s161, %s163
      %p170 = scmp.eq.s32.totalorder %s27, 1
      %p171 = por %p169, %p170
      %p172 = scmp.ne.s32.totalorder %s163, %s164
      %p173 = scmp.eq.s32.totalorder %s27, 0
      %p174 = por %p172, %p173
      %p175 = scmp.ne.s32.totalorder %s163, %s164
      %p176 = scmp.eq.s32.totalorder %s28, 1
      %p177 = por %p175, %p176
      %p179 = scmp.ne.s32.totalorder %s164, %s178
      %p180 = scmp.eq.s32.totalorder %s28, 0
      %p181 = por %p179, %p180
      %s182 = ssub.s32 %s22, %s29
      %p183 = scmp.eq.s32.totalorder %s182, 0
      %s185 = sadd.s32 %s184, 1
      %s186 = scalar_select %p183, %s184, %s185
      %p189 = pneg %p183
      %p190 = scmp.eq.s32.totalorder %s22, 1
      %p191 = por %p189, %p190
      %p192 = scmp.ne.s32.totalorder %s184, %s187
      %p193 = scmp.eq.s32.totalorder %s22, 0
      %p194 = por %p192, %p193
      %p195 = scmp.ne.s32.totalorder %s184, %s187
      %p196 = scmp.eq.s32.totalorder %s27, 1
      %p197 = por %p195, %p196
      %p198 = scmp.ne.s32.totalorder %s187, %s188
      %p199 = scmp.eq.s32.totalorder %s27, 0
      %p200 = por %p198, %p199
      %p201 = scmp.ne.s32.totalorder %s187, %s188
      %p202 = scmp.eq.s32.totalorder %s28, 1
      %p203 = por %p201, %p202
      %p205 = scmp.ne.s32.totalorder %s188, %s204
      %p206 = scmp.eq.s32.totalorder %s28, 0
      %p207 = por %p205, %p206
      %p208 = scmp.le.s32.totalorder 1, %s22
      %p209 = scmp.lt.s32.totalorder %s22, 3
      %p210 = pnand %p208, %p209
      %p211 = pneg %p210
      // Predicated region
      $region9: #{tpu_custom_call.1} parent=5 // pred_check
        _
      $region10: #{tpu_custom_call.1} parent=5 // pred_check_branch
        %213 = sbr.rel (%p210) target = $region12
      $region11: #{tpu_custom_call.1} parent=5 // pred_region
        %s214 = ssub.s32 %s22, 1
        // Predicated region
        $region13: #{tpu_custom_call.1} parent=11 // pred_check
          %p215 = pneg %p69
        $region14: #{tpu_custom_call.1} parent=11 // pred_check_branch
          %217 = sbr.rel (%p215) target = $region16
        $region15: #{tpu_custom_call.1} parent=11 // pred_region
          %219 = vsyncadd [#allocation9], 0
          %s220 = sshll.u32 %s1, 4
          %s221 = int_to_ptr.hbm [resolvable:$true] %s220
          %s222 = sshll.u32 [#allocation8], 4
          %s223 = int_to_ptr.vmem [resolvable:$true] %s222
          %228 = dma.hbm_to_vmem [thread:$0]  %s221, 256, %s223, [#allocation9], 128, 128, 8
        $region16: #{tpu_custom_call.1} parent=11 // pred_fallthru
          _
        // Predicated region
        $region17: #{tpu_custom_call.1} parent=11 // pred_check
          %p229 = pneg %p90
        $region18: #{tpu_custom_call.1} parent=11 // pred_check_branch
          %231 = sbr.rel (%p229) target = $region20
        $region19: #{tpu_custom_call.1} parent=11 // pred_region
          %233 = vsyncadd [#allocation9], 0
          %s234 = sshll.u32 %s2, 4
          %s235 = int_to_ptr.hbm [resolvable:$true] %s234
          %s236 = sshll.u32 [#allocation10], 4
          %s237 = int_to_ptr.vmem [resolvable:$true] %s236
          %242 = dma.hbm_to_vmem [thread:$0]  %s235, 256, %s237, [#allocation9], 128, 128, 8
        $region20: #{tpu_custom_call.1} parent=11 // pred_fallthru
          _
        // Predicated region
        $region21: #{tpu_custom_call.1} parent=11 // pred_check
          %p243 = pneg %p111
        $region22: #{tpu_custom_call.1} parent=11 // pred_check_branch
          %245 = sbr.rel (%p243) target = $region24
        $region23: #{tpu_custom_call.1} parent=11 // pred_region
          %247 = vsyncadd [#allocation12], 0
          %s248 = sshll.u32 %s3, 4
          %s249 = int_to_ptr.hbm [resolvable:$true] %s248
          %s250 = sshll.u32 [#allocation11], 4
          %s251 = int_to_ptr.vmem [resolvable:$true] %s250
          %256 = dma.hbm_to_vmem [thread:$0]  %s249, 256, %s251, [#allocation12], 128, 128, 8
        $region24: #{tpu_custom_call.1} parent=11 // pred_fallthru
          _
        // Predicated region
        $region25: #{tpu_custom_call.1} parent=11 // pred_check
          %p257 = pneg %p132
        $region26: #{tpu_custom_call.1} parent=11 // pred_check_branch
          %259 = sbr.rel (%p257) target = $region28
        $region27: #{tpu_custom_call.1} parent=11 // pred_region
          %261 = vsyncadd [#allocation12], 0
          %s262 = sshll.u32 %s4, 4
          %s263 = int_to_ptr.hbm [resolvable:$true] %s262
          %s264 = sshll.u32 [#allocation13], 4
          %s265 = int_to_ptr.vmem [resolvable:$true] %s264
          %270 = dma.hbm_to_vmem [thread:$0]  %s263, 256, %s265, [#allocation12], 128, 128, 8
        $region28: #{tpu_custom_call.1} parent=11 // pred_fallthru
          _
        // Predicated region
        $region29: #{tpu_custom_call.1} parent=11 // pred_check
          %p271 = pneg %p153
        $region30: #{tpu_custom_call.1} parent=11 // pred_check_branch
          %273 = sbr.rel (%p271) target = $region32
        $region31: #{tpu_custom_call.1} parent=11 // pred_region
          %275 = vsyncadd [#allocation15], 0
          %s276 = sshll.u32 %s5, 4
          %s277 = int_to_ptr.hbm [resolvable:$true] %s276
          %s278 = sshll.u32 [#allocation14], 4
          %s279 = int_to_ptr.vmem [resolvable:$true] %s278
          %284 = dma.hbm_to_vmem [thread:$0]  %s277, 256, %s279, [#allocation15], 128, 128, 8
        $region32: #{tpu_custom_call.1} parent=11 // pred_fallthru
          _
        // Predicated region
        $region33: #{tpu_custom_call.1} parent=11 // pred_check
          %p285 = pneg %p174
        $region34: #{tpu_custom_call.1} parent=11 // pred_check_branch
          %287 = sbr.rel (%p285) target = $region36
        $region35: #{tpu_custom_call.1} parent=11 // pred_region
          %289 = vsyncadd [#allocation15], 0
          %s290 = sshll.u32 %s6, 4
          %s291 = int_to_ptr.hbm [resolvable:$true] %s290
          %s292 = sshll.u32 [#allocation16], 4
          %s293 = int_to_ptr.vmem [resolvable:$true] %s292
          %298 = dma.hbm_to_vmem [thread:$0]  %s291, 256, %s293, [#allocation15], 128, 128, 8
        $region36: #{tpu_custom_call.1} parent=11 // pred_fallthru
          _
      $region12: #{tpu_custom_call.1} parent=5 // pred_fallthru
        _
      %p299 = scmp.lt.s32.totalorder %s22, 2
      // Predicated region
      $region37: #{tpu_custom_call.1} parent=5 // pred_check
        %p300 = pneg %p299
      $region38: #{tpu_custom_call.1} parent=5 // pred_check_branch
        %302 = sbr.rel (%p300) target = $region40
      $region39: #{tpu_custom_call.1} parent=5 // pred_region
        // Predicated region
        $region41: #{tpu_custom_call.1} parent=39 // pred_check
          %p303 = pneg %p42
        $region42: #{tpu_custom_call.1} parent=39 // pred_check_branch
          %305 = sbr.rel (%p303) target = $region44
        $region43: #{tpu_custom_call.1} parent=39 // pred_region
          %s306 = sand.u32 %s32, 1
          %s307 = scalar_lea.sflag [#allocation6], %s306
          %s308 = sand.u32 %s32, 1
          %s309 = smul.addr %s308, 32
          %s310 = scalar_lea.vmem [#allocation5], %s309
          %312 = vsyncadd %s307, 0
          %s313 = smul.addr %s22, 4
          %s314 = smul.addr %s313, 8
          %s315 = scalar_lea.hbm %s0, %s314
          %s316 = sshll.u32 %s315, 4
          %s317 = int_to_ptr.hbm [resolvable:$true] %s316
          %s318 = sshll.u32 %s310, 4
          %s319 = int_to_ptr.vmem [resolvable:$true] %s318
          %324 = dma.hbm_to_vmem [thread:$0]  %s317, 512, %s319, %s307, 128, 128, 8
        $region44: #{tpu_custom_call.1} parent=39 // pred_fallthru
          _
      $region40: #{tpu_custom_call.1} parent=5 // pred_fallthru
        _
      %p325 = scmp.le.s32.totalorder 1, %s22
      %p326 = scmp.lt.s32.totalorder %s22, 3
      %p327 = pnand %p325, %p326
      %p328 = pneg %p327
      // Predicated region
      $region45: #{tpu_custom_call.1} parent=5 // pred_check
        _
      $region46: #{tpu_custom_call.1} parent=5 // pred_check_branch
        %330 = sbr.rel (%p327) target = $region48
      $region47: #{tpu_custom_call.1} parent=5 // pred_region
        %s331 = ssub.s32 %s22, 1
        %s332 = sand.u32 %s35, 1
        %s333 = scalar_lea.sflag [#allocation6], %s332
        %s334 = sand.u32 %s35, 1
        %s335 = smul.addr %s334, 32
        %s336 = scalar_lea.vmem [#allocation5], %s335
        // Predicated region
        $region49: #{tpu_custom_call.1} parent=47 // pred_check
          %p337 = pneg %p48
        $region50: #{tpu_custom_call.1} parent=47 // pred_check_branch
          %339 = sbr.rel (%p337) target = $region52
        $region51: #{tpu_custom_call.1} parent=47 // pred_region
          %341 = dma.done %s333, 512
        $region52: #{tpu_custom_call.1} parent=47 // pred_fallthru
          _
        // Predicated region
        $region53: #{tpu_custom_call.1} parent=47 // pred_check
          %p342 = pneg %p69
        $region54: #{tpu_custom_call.1} parent=47 // pred_check_branch
          %344 = sbr.rel (%p342) target = $region56
        $region55: #{tpu_custom_call.1} parent=47 // pred_region
          %346 = dma.done [#allocation9], 256
        $region56: #{tpu_custom_call.1} parent=47 // pred_fallthru
          _
        // Predicated region
        $region57: #{tpu_custom_call.1} parent=47 // pred_check
          %p347 = pneg %p90
        $region58: #{tpu_custom_call.1} parent=47 // pred_check_branch
          %349 = sbr.rel (%p347) target = $region60
        $region59: #{tpu_custom_call.1} parent=47 // pred_region
          %351 = dma.done [#allocation9], 256
        $region60: #{tpu_custom_call.1} parent=47 // pred_fallthru
          _
        // Predicated region
        $region61: #{tpu_custom_call.1} parent=47 // pred_check
          %p352 = pneg %p111
        $region62: #{tpu_custom_call.1} parent=47 // pred_check_branch
          %354 = sbr.rel (%p352) target = $region64
        $region63: #{tpu_custom_call.1} parent=47 // pred_region
          %356 = dma.done [#allocation12], 256
        $region64: #{tpu_custom_call.1} parent=47 // pred_fallthru
          _
        // Predicated region
        $region65: #{tpu_custom_call.1} parent=47 // pred_check
          %p357 = pneg %p132
        $region66: #{tpu_custom_call.1} parent=47 // pred_check_branch
          %359 = sbr.rel (%p357) target = $region68
        $region67: #{tpu_custom_call.1} parent=47 // pred_region
          %361 = dma.done [#allocation12], 256
        $region68: #{tpu_custom_call.1} parent=47 // pred_fallthru
          _
        // Predicated region
        $region69: #{tpu_custom_call.1} parent=47 // pred_check
          %p362 = pneg %p153
        $region70: #{tpu_custom_call.1} parent=47 // pred_check_branch
          %364 = sbr.rel (%p362) target = $region72
        $region71: #{tpu_custom_call.1} parent=47 // pred_region
          %366 = dma.done [#allocation15], 256
        $region72: #{tpu_custom_call.1} parent=47 // pred_fallthru
          _
        // Predicated region
        $region73: #{tpu_custom_call.1} parent=47 // pred_check
          %p367 = pneg %p174
        $region74: #{tpu_custom_call.1} parent=47 // pred_check_branch
          %369 = sbr.rel (%p367) target = $region76
        $region75: #{tpu_custom_call.1} parent=47 // pred_region
          %371 = dma.done [#allocation15], 256
        $region76: #{tpu_custom_call.1} parent=47 // pred_fallthru
          _
        %s372 = sand.u32 %s35, 1
        %s373 = scalar_lea.sflag [#allocation6], %s372
        %s374 = sand.u32 %s35, 1
        %s375 = smul.addr %s374, 32
        %s376 = scalar_lea.vmem [#allocation5], %s375
        %p377 = pneg %p48
        %p378 = pneg %p45
        %p379 = pneg %p69
        %p380 = pneg %p66
        %p381 = pneg %p90
        %p382 = pneg %p87
        %p383 = pneg %p111
        %p384 = pneg %p108
        %p385 = pneg %p132
        %p386 = pneg %p129
        %p387 = pneg %p153
        %p388 = pneg %p150
        %p389 = pneg %p174
        %p390 = pneg %p171
        %p391 = pneg %p200
        %p392 = pneg %p197
        %s393 = sand.u32 %s187, 1
        %s394 = scalar_lea.sflag [#allocation7], %s393
        %s395 = sand.u32 %s187, 1
        %s396 = smul.addr %s395, 32
        %s397 = scalar_lea.vmem [#allocation17], %s396
        %v398 = vld [vmem:[%s336] sm:$0xff]
        %v399 = vld [vmem:[%s336 + $0x8] sm:$0xff]
        %v400 = vld [vmem:[%s336 + $0x10] sm:$0xff]
        %v401 = vld [vmem:[%s336 + $0x18] sm:$0xff]
        %v402 = vld [vmem:[#allocation13] sm:$0xff]
        %v403 = vld [vmem:[#allocation13 + $0x8] sm:$0xff]
        %vm404 = vcmask 130048
        %v406 = vsel %vm404, %v398, 0
        %v409 = vsel %vm404, %v399, 0
        %411 = vmatpush.msra.mxu0 0.0
        %412 = vmatpush.msra.mxu0 0.0
        %413 = vmatpush.msra.mxu0 0.0
        %414 = vmatpush.msra.mxu0 0.0
        %415 = vmatpush.msra.mxu0 0.0
        %416 = vmatpush.msra.mxu0 0.0
        %417 = vmatpush.msra.mxu0 0.0
        %418 = vmatpush.msra.mxu0 0.0
        %419 = vmatpush.msra.mxu0 0.0
        %420 = vmatpush.msra.mxu0 0.0
        %421 = vmatpush.msra.mxu0 0.0
        %422 = vmatpush.msra.mxu0 0.0
        %423 = vmatpush.msra.mxu0 0.0
        %424 = vmatpush.msra.mxu0 0.0
        %v425 = vand.u32 %v403, 4294901760
        %426 = vmatpush.msra.mxu0 %v425
        %v427 = vand.u32 %v402, 4294901760
        %428 = vmatpush.msra.mxu0 %v427
        %v429 = vand.u32 %v406, 4294901760
        %v430 = vsub.f32 %v406, %v429
        %v431 = vand.u32 %v430, 4294901760
        %v432 = vsub.f32 %v430, %v431
        %v433 = vand.u32 %v432, 4294901760
        %434 = vmatmul.f32.gmra.mxu0 %v433
        %v435 = vpop.f32.mrf.mxu0
        %v436 = vadd.f32 0.0, %v435
        %v437 = vand.u32 %v409, 4294901760
        %v438 = vsub.f32 %v409, %v437
        %v439 = vand.u32 %v438, 4294901760
        %v440 = vsub.f32 %v438, %v439
        %v441 = vand.u32 %v440, 4294901760
        %442 = vmatmul.f32.gmra.mxu0 %v441
        %v443 = vpop.f32.mrf.mxu0
        %v444 = vadd.f32 0.0, %v443
        %445 = vdwg.mxu0
        %446 = vmatpush.msra.mxu0 0.0
        %447 = vmatpush.msra.mxu0 0.0
        %448 = vmatpush.msra.mxu0 0.0
        %449 = vmatpush.msra.mxu0 0.0
        %450 = vmatpush.msra.mxu0 0.0
        %451 = vmatpush.msra.mxu0 0.0
        %452 = vmatpush.msra.mxu0 0.0
        %453 = vmatpush.msra.mxu0 0.0
        %454 = vmatpush.msra.mxu0 0.0
        %455 = vmatpush.msra.mxu0 0.0
        %456 = vmatpush.msra.mxu0 0.0
        %457 = vmatpush.msra.mxu0 0.0
        %458 = vmatpush.msra.mxu0 0.0
        %459 = vmatpush.msra.mxu0 0.0
        %v460 = vand.u32 %v403, 4294901760
        %v461 = vsub.f32 %v403, %v460
        %v462 = vand.u32 %v461, 4294901760
        %v463 = vsub.f32 %v461, %v462
        %v464 = vand.u32 %v463, 4294901760
        %465 = vmatpush.msra.mxu0 %v464
        %v466 = vand.u32 %v402, 4294901760
        %v467 = vsub.f32 %v402, %v466
        %v468 = vand.u32 %v467, 4294901760
        %v469 = vsub.f32 %v467, %v468
        %v470 = vand.u32 %v469, 4294901760
        %471 = vmatpush.msra.mxu0 %v470
        %v472 = vand.u32 %v406, 4294901760
        %473 = vmatmul.f32.gmra.mxu0 %v472
        %v474 = vpop.f32.mrf.mxu0
        %v475 = vadd.f32 %v436, %v474
        %v476 = vand.u32 %v409, 4294901760
        %477 = vmatmul.f32.gmra.mxu0 %v476
        %v478 = vpop.f32.mrf.mxu0
        %v479 = vadd.f32 %v444, %v478
        %480 = vdwg.mxu0
        %481 = vmatpush.msra.mxu0 0.0
        %482 = vmatpush.msra.mxu0 0.0
        %483 = vmatpush.msra.mxu0 0.0
        %484 = vmatpush.msra.mxu0 0.0
        %485 = vmatpush.msra.mxu0 0.0
        %486 = vmatpush.msra.mxu0 0.0
        %487 = vmatpush.msra.mxu0 0.0
        %488 = vmatpush.msra.mxu0 0.0
        %489 = vmatpush.msra.mxu0 0.0
        %490 = vmatpush.msra.mxu0 0.0
        %491 = vmatpush.msra.mxu0 0.0
        %492 = vmatpush.msra.mxu0 0.0
        %493 = vmatpush.msra.mxu0 0.0
        %494 = vmatpush.msra.mxu0 0.0
        %v495 = vand.u32 %v403, 4294901760
        %v496 = vsub.f32 %v403, %v495
        %497 = vmatpush.msra.mxu0 %v496
        %v498 = vand.u32 %v402, 4294901760
        %v499 = vsub.f32 %v402, %v498
        %500 = vmatpush.msra.mxu0 %v499
        %v501 = vand.u32 %v406, 4294901760
        %v502 = vsub.f32 %v406, %v501
        %503 = vmatmul.f32.gmra.mxu0 %v502
        %v504 = vpop.f32.mrf.mxu0
        %v505 = vadd.f32 %v475, %v504
        %v506 = vand.u32 %v409, 4294901760
        %v507 = vsub.f32 %v409, %v506
        %508 = vmatmul.f32.gmra.mxu0 %v507
        %v509 = vpop.f32.mrf.mxu0
        %v510 = vadd.f32 %v479, %v509
        %511 = vdwg.mxu0
        %512 = vmatpush.msra.mxu0 0.0
        %513 = vmatpush.msra.mxu0 0.0
        %514 = vmatpush.msra.mxu0 0.0
        %515 = vmatpush.msra.mxu0 0.0
        %516 = vmatpush.msra.mxu0 0.0
        %517 = vmatpush.msra.mxu0 0.0
        %518 = vmatpush.msra.mxu0 0.0
        %519 = vmatpush.msra.mxu0 0.0
        %520 = vmatpush.msra.mxu0 0.0
        %521 = vmatpush.msra.mxu0 0.0
        %522 = vmatpush.msra.mxu0 0.0
        %523 = vmatpush.msra.mxu0 0.0
        %524 = vmatpush.msra.mxu0 0.0
        %525 = vmatpush.msra.mxu0 0.0
        %v526 = vand.u32 %v403, 4294901760
        %527 = vmatpush.msra.mxu0 %v526
        %v528 = vand.u32 %v402, 4294901760
        %529 = vmatpush.msra.mxu0 %v528
        %v530 = vand.u32 %v406, 4294901760
        %v531 = vsub.f32 %v406, %v530
        %v532 = vand.u32 %v531, 4294901760
        %533 = vmatmul.f32.gmra.mxu0 %v532
        %v534 = vpop.f32.mrf.mxu0
        %v535 = vadd.f32 %v505, %v534
        %v536 = vand.u32 %v409, 4294901760
        %v537 = vsub.f32 %v409, %v536
        %v538 = vand.u32 %v537, 4294901760
        %539 = vmatmul.f32.gmra.mxu0 %v538
        %v540 = vpop.f32.mrf.mxu0
        %v541 = vadd.f32 %v510, %v540
        %542 = vdwg.mxu0
        %543 = vmatpush.msra.mxu0 0.0
        %544 = vmatpush.msra.mxu0 0.0
        %545 = vmatpush.msra.mxu0 0.0
        %546 = vmatpush.msra.mxu0 0.0
        %547 = vmatpush.msra.mxu0 0.0
        %548 = vmatpush.msra.mxu0 0.0
        %549 = vmatpush.msra.mxu0 0.0
        %550 = vmatpush.msra.mxu0 0.0
        %551 = vmatpush.msra.mxu0 0.0
        %552 = vmatpush.msra.mxu0 0.0
        %553 = vmatpush.msra.mxu0 0.0
        %554 = vmatpush.msra.mxu0 0.0
        %555 = vmatpush.msra.mxu0 0.0
        %556 = vmatpush.msra.mxu0 0.0
        %v557 = vand.u32 %v403, 4294901760
        %v558 = vsub.f32 %v403, %v557
        %v559 = vand.u32 %v558, 4294901760
        %560 = vmatpush.msra.mxu0 %v559
        %v561 = vand.u32 %v402, 4294901760
        %v562 = vsub.f32 %v402, %v561
        %v563 = vand.u32 %v562, 4294901760
        %564 = vmatpush.msra.mxu0 %v563
        %v565 = vand.u32 %v406, 4294901760
        %566 = vmatmul.f32.gmra.mxu0 %v565
        %v567 = vpop.f32.mrf.mxu0
        %v568 = vadd.f32 %v535, %v567
        %v569 = vand.u32 %v409, 4294901760
        %570 = vmatmul.f32.gmra.mxu0 %v569
        %v571 = vpop.f32.mrf.mxu0
        %v572 = vadd.f32 %v541, %v571
        %573 = vdwg.mxu0
        %574 = vmatpush.msra.mxu0 0.0
        %575 = vmatpush.msra.mxu0 0.0
        %576 = vmatpush.msra.mxu0 0.0
        %577 = vmatpush.msra.mxu0 0.0
        %578 = vmatpush.msra.mxu0 0.0
        %579 = vmatpush.msra.mxu0 0.0
        %580 = vmatpush.msra.mxu0 0.0
        %581 = vmatpush.msra.mxu0 0.0
        %582 = vmatpush.msra.mxu0 0.0
        %583 = vmatpush.msra.mxu0 0.0
        %584 = vmatpush.msra.mxu0 0.0
        %585 = vmatpush.msra.mxu0 0.0
        %586 = vmatpush.msra.mxu0 0.0
        %587 = vmatpush.msra.mxu0 0.0
        %v588 = vand.u32 %v403, 4294901760
        %589 = vmatpush.msra.mxu0 %v588
        %v590 = vand.u32 %v402, 4294901760
        %591 = vmatpush.msra.mxu0 %v590
        %v592 = vand.u32 %v406, 4294901760
        %593 = vmatmul.f32.gmra.mxu0 %v592
        %v594 = vpop.f32.mrf.mxu0
        %v595 = vadd.f32 %v568, %v594
        %v596 = vand.u32 %v409, 4294901760
        %597 = vmatmul.f32.gmra.mxu0 %v596
        %v598 = vpop.f32.mrf.mxu0
        %v599 = vadd.f32 %v572, %v598
        %600 = vdwg.mxu0
        %v601 = vld [vmem:[#allocation14] sm:$0xff]
        %v602 = vld [vmem:[#allocation14 + $0x8] sm:$0xff]
        %v604 = vsel %vm404, %v400, 0
        %v607 = vsel %vm404, %v401, 0
        %609 = vmatpush.msra.mxu0 0.0
        %610 = vmatpush.msra.mxu0 0.0
        %611 = vmatpush.msra.mxu0 0.0
        %612 = vmatpush.msra.mxu0 0.0
        %613 = vmatpush.msra.mxu0 0.0
        %614 = vmatpush.msra.mxu0 0.0
        %615 = vmatpush.msra.mxu0 0.0
        %616 = vmatpush.msra.mxu0 0.0
        %617 = vmatpush.msra.mxu0 0.0
        %618 = vmatpush.msra.mxu0 0.0
        %619 = vmatpush.msra.mxu0 0.0
        %620 = vmatpush.msra.mxu0 0.0
        %621 = vmatpush.msra.mxu0 0.0
        %622 = vmatpush.msra.mxu0 0.0
        %v623 = vand.u32 %v602, 4294901760
        %624 = vmatpush.msra.mxu0 %v623
        %v625 = vand.u32 %v601, 4294901760
        %626 = vmatpush.msra.mxu0 %v625
        %v627 = vand.u32 %v604, 4294901760
        %v628 = vsub.f32 %v604, %v627
        %v629 = vand.u32 %v628, 4294901760
        %v630 = vsub.f32 %v628, %v629
        %v631 = vand.u32 %v630, 4294901760
        %632 = vmatmul.f32.gmra.mxu0 %v631
        %v633 = vpop.f32.mrf.mxu0
        %v634 = vadd.f32 0.0, %v633
        %v635 = vand.u32 %v607, 4294901760
        %v636 = vsub.f32 %v607, %v635
        %v637 = vand.u32 %v636, 4294901760
        %v638 = vsub.f32 %v636, %v637
        %v639 = vand.u32 %v638, 4294901760
        %640 = vmatmul.f32.gmra.mxu0 %v639
        %v641 = vpop.f32.mrf.mxu0
        %v642 = vadd.f32 0.0, %v641
        %643 = vdwg.mxu0
        %644 = vmatpush.msra.mxu0 0.0
        %645 = vmatpush.msra.mxu0 0.0
        %646 = vmatpush.msra.mxu0 0.0
        %647 = vmatpush.msra.mxu0 0.0
        %648 = vmatpush.msra.mxu0 0.0
        %649 = vmatpush.msra.mxu0 0.0
        %650 = vmatpush.msra.mxu0 0.0
        %651 = vmatpush.msra.mxu0 0.0
        %652 = vmatpush.msra.mxu0 0.0
        %653 = vmatpush.msra.mxu0 0.0
        %654 = vmatpush.msra.mxu0 0.0
        %655 = vmatpush.msra.mxu0 0.0
        %656 = vmatpush.msra.mxu0 0.0
        %657 = vmatpush.msra.mxu0 0.0
        %v658 = vand.u32 %v602, 4294901760
        %v659 = vsub.f32 %v602, %v658
        %v660 = vand.u32 %v659, 4294901760
        %v661 = vsub.f32 %v659, %v660
        %v662 = vand.u32 %v661, 4294901760
        %663 = vmatpush.msra.mxu0 %v662
        %v664 = vand.u32 %v601, 4294901760
        %v665 = vsub.f32 %v601, %v664
        %v666 = vand.u32 %v665, 4294901760
        %v667 = vsub.f32 %v665, %v666
        %v668 = vand.u32 %v667, 4294901760
        %669 = vmatpush.msra.mxu0 %v668
        %v670 = vand.u32 %v604, 4294901760
        %671 = vmatmul.f32.gmra.mxu0 %v670
        %v672 = vpop.f32.mrf.mxu0
        %v673 = vadd.f32 %v634, %v672
        %v674 = vand.u32 %v607, 4294901760
        %675 = vmatmul.f32.gmra.mxu0 %v674
        %v676 = vpop.f32.mrf.mxu0
        %v677 = vadd.f32 %v642, %v676
        %678 = vdwg.mxu0
        %679 = vmatpush.msra.mxu0 0.0
        %680 = vmatpush.msra.mxu0 0.0
        %681 = vmatpush.msra.mxu0 0.0
        %682 = vmatpush.msra.mxu0 0.0
        %683 = vmatpush.msra.mxu0 0.0
        %684 = vmatpush.msra.mxu0 0.0
        %685 = vmatpush.msra.mxu0 0.0
        %686 = vmatpush.msra.mxu0 0.0
        %687 = vmatpush.msra.mxu0 0.0
        %688 = vmatpush.msra.mxu0 0.0
        %689 = vmatpush.msra.mxu0 0.0
        %690 = vmatpush.msra.mxu0 0.0
        %691 = vmatpush.msra.mxu0 0.0
        %692 = vmatpush.msra.mxu0 0.0
        %v693 = vand.u32 %v602, 4294901760
        %v694 = vsub.f32 %v602, %v693
        %695 = vmatpush.msra.mxu0 %v694
        %v696 = vand.u32 %v601, 4294901760
        %v697 = vsub.f32 %v601, %v696
        %698 = vmatpush.msra.mxu0 %v697
        %v699 = vand.u32 %v604, 4294901760
        %v700 = vsub.f32 %v604, %v699
        %701 = vmatmul.f32.gmra.mxu0 %v700
        %v702 = vpop.f32.mrf.mxu0
        %v703 = vadd.f32 %v673, %v702
        %v704 = vand.u32 %v607, 4294901760
        %v705 = vsub.f32 %v607, %v704
        %706 = vmatmul.f32.gmra.mxu0 %v705
        %v707 = vpop.f32.mrf.mxu0
        %v708 = vadd.f32 %v677, %v707
        %709 = vdwg.mxu0
        %710 = vmatpush.msra.mxu0 0.0
        %711 = vmatpush.msra.mxu0 0.0
        %712 = vmatpush.msra.mxu0 0.0
        %713 = vmatpush.msra.mxu0 0.0
        %714 = vmatpush.msra.mxu0 0.0
        %715 = vmatpush.msra.mxu0 0.0
        %716 = vmatpush.msra.mxu0 0.0
        %717 = vmatpush.msra.mxu0 0.0
        %718 = vmatpush.msra.mxu0 0.0
        %719 = vmatpush.msra.mxu0 0.0
        %720 = vmatpush.msra.mxu0 0.0
        %721 = vmatpush.msra.mxu0 0.0
        %722 = vmatpush.msra.mxu0 0.0
        %723 = vmatpush.msra.mxu0 0.0
        %v724 = vand.u32 %v602, 4294901760
        %725 = vmatpush.msra.mxu0 %v724
        %v726 = vand.u32 %v601, 4294901760
        %727 = vmatpush.msra.mxu0 %v726
        %v728 = vand.u32 %v604, 4294901760
        %v729 = vsub.f32 %v604, %v728
        %v730 = vand.u32 %v729, 4294901760
        %731 = vmatmul.f32.gmra.mxu0 %v730
        %v732 = vpop.f32.mrf.mxu0
        %v733 = vadd.f32 %v703, %v732
        %v734 = vand.u32 %v607, 4294901760
        %v735 = vsub.f32 %v607, %v734
        %v736 = vand.u32 %v735, 4294901760
        %737 = vmatmul.f32.gmra.mxu0 %v736
        %v738 = vpop.f32.mrf.mxu0
        %v739 = vadd.f32 %v708, %v738
        %740 = vdwg.mxu0
        %741 = vmatpush.msra.mxu0 0.0
        %742 = vmatpush.msra.mxu0 0.0
        %743 = vmatpush.msra.mxu0 0.0
        %744 = vmatpush.msra.mxu0 0.0
        %745 = vmatpush.msra.mxu0 0.0
        %746 = vmatpush.msra.mxu0 0.0
        %747 = vmatpush.msra.mxu0 0.0
        %748 = vmatpush.msra.mxu0 0.0
        %749 = vmatpush.msra.mxu0 0.0
        %750 = vmatpush.msra.mxu0 0.0
        %751 = vmatpush.msra.mxu0 0.0
        %752 = vmatpush.msra.mxu0 0.0
        %753 = vmatpush.msra.mxu0 0.0
        %754 = vmatpush.msra.mxu0 0.0
        %v755 = vand.u32 %v602, 4294901760
        %v756 = vsub.f32 %v602, %v755
        %v757 = vand.u32 %v756, 4294901760
        %758 = vmatpush.msra.mxu0 %v757
        %v759 = vand.u32 %v601, 4294901760
        %v760 = vsub.f32 %v601, %v759
        %v761 = vand.u32 %v760, 4294901760
        %762 = vmatpush.msra.mxu0 %v761
        %v763 = vand.u32 %v604, 4294901760
        %764 = vmatmul.f32.gmra.mxu0 %v763
        %v765 = vpop.f32.mrf.mxu0
        %v766 = vadd.f32 %v733, %v765
        %v767 = vand.u32 %v607, 4294901760
        %768 = vmatmul.f32.gmra.mxu0 %v767
        %v769 = vpop.f32.mrf.mxu0
        %v770 = vadd.f32 %v739, %v769
        %771 = vdwg.mxu0
        %772 = vmatpush.msra.mxu0 0.0
        %773 = vmatpush.msra.mxu0 0.0
        %774 = vmatpush.msra.mxu0 0.0
        %775 = vmatpush.msra.mxu0 0.0
        %776 = vmatpush.msra.mxu0 0.0
        %777 = vmatpush.msra.mxu0 0.0
        %778 = vmatpush.msra.mxu0 0.0
        %779 = vmatpush.msra.mxu0 0.0
        %780 = vmatpush.msra.mxu0 0.0
        %781 = vmatpush.msra.mxu0 0.0
        %782 = vmatpush.msra.mxu0 0.0
        %783 = vmatpush.msra.mxu0 0.0
        %784 = vmatpush.msra.mxu0 0.0
        %785 = vmatpush.msra.mxu0 0.0
        %v786 = vand.u32 %v602, 4294901760
        %787 = vmatpush.msra.mxu0 %v786
        %v788 = vand.u32 %v601, 4294901760
        %789 = vmatpush.msra.mxu0 %v788
        %v790 = vand.u32 %v604, 4294901760
        %791 = vmatmul.f32.gmra.mxu0 %v790
        %v792 = vpop.f32.mrf.mxu0
        %v793 = vadd.f32 %v766, %v792
        %v794 = vand.u32 %v607, 4294901760
        %795 = vmatmul.f32.gmra.mxu0 %v794
        %v796 = vpop.f32.mrf.mxu0
        %v797 = vadd.f32 %v770, %v796
        %798 = vdwg.mxu0
        %v799 = vadd.f32 %v398, %v400
        %v800 = vadd.f32 %v399, %v401
        %v801 = vld [vmem:[#allocation16] sm:$0xff]
        %v802 = vld [vmem:[#allocation16 + $0x8] sm:$0xff]
        %v804 = vsel %vm404, %v799, 0
        %v807 = vsel %vm404, %v800, 0
        %809 = vmatpush.msra.mxu0 0.0
        %810 = vmatpush.msra.mxu0 0.0
        %811 = vmatpush.msra.mxu0 0.0
        %812 = vmatpush.msra.mxu0 0.0
        %813 = vmatpush.msra.mxu0 0.0
        %814 = vmatpush.msra.mxu0 0.0
        %815 = vmatpush.msra.mxu0 0.0
        %816 = vmatpush.msra.mxu0 0.0
        %817 = vmatpush.msra.mxu0 0.0
        %818 = vmatpush.msra.mxu0 0.0
        %819 = vmatpush.msra.mxu0 0.0
        %820 = vmatpush.msra.mxu0 0.0
        %821 = vmatpush.msra.mxu0 0.0
        %822 = vmatpush.msra.mxu0 0.0
        %v823 = vand.u32 %v802, 4294901760
        %824 = vmatpush.msra.mxu0 %v823
        %v825 = vand.u32 %v801, 4294901760
        %826 = vmatpush.msra.mxu0 %v825
        %v827 = vand.u32 %v804, 4294901760
        %v828 = vsub.f32 %v804, %v827
        %v829 = vand.u32 %v828, 4294901760
        %v830 = vsub.f32 %v828, %v829
        %v831 = vand.u32 %v830, 4294901760
        %832 = vmatmul.f32.gmra.mxu0 %v831
        %v833 = vpop.f32.mrf.mxu0
        %v834 = vadd.f32 0.0, %v833
        %v835 = vand.u32 %v807, 4294901760
        %v836 = vsub.f32 %v807, %v835
        %v837 = vand.u32 %v836, 4294901760
        %v838 = vsub.f32 %v836, %v837
        %v839 = vand.u32 %v838, 4294901760
        %840 = vmatmul.f32.gmra.mxu0 %v839
        %v841 = vpop.f32.mrf.mxu0
        %v842 = vadd.f32 0.0, %v841
        %843 = vdwg.mxu0
        %844 = vmatpush.msra.mxu0 0.0
        %845 = vmatpush.msra.mxu0 0.0
        %846 = vmatpush.msra.mxu0 0.0
        %847 = vmatpush.msra.mxu0 0.0
        %848 = vmatpush.msra.mxu0 0.0
        %849 = vmatpush.msra.mxu0 0.0
        %850 = vmatpush.msra.mxu0 0.0
        %851 = vmatpush.msra.mxu0 0.0
        %852 = vmatpush.msra.mxu0 0.0
        %853 = vmatpush.msra.mxu0 0.0
        %854 = vmatpush.msra.mxu0 0.0
        %855 = vmatpush.msra.mxu0 0.0
        %856 = vmatpush.msra.mxu0 0.0
        %857 = vmatpush.msra.mxu0 0.0
        %v858 = vand.u32 %v802, 4294901760
        %v859 = vsub.f32 %v802, %v858
        %v860 = vand.u32 %v859, 4294901760
        %v861 = vsub.f32 %v859, %v860
        %v862 = vand.u32 %v861, 4294901760
        %863 = vmatpush.msra.mxu0 %v862
        %v864 = vand.u32 %v801, 4294901760
        %v865 = vsub.f32 %v801, %v864
        %v866 = vand.u32 %v865, 4294901760
        %v867 = vsub.f32 %v865, %v866
        %v868 = vand.u32 %v867, 4294901760
        %869 = vmatpush.msra.mxu0 %v868
        %v870 = vand.u32 %v804, 4294901760
        %871 = vmatmul.f32.gmra.mxu0 %v870
        %v872 = vpop.f32.mrf.mxu0
        %v873 = vadd.f32 %v834, %v872
        %v874 = vand.u32 %v807, 4294901760
        %875 = vmatmul.f32.gmra.mxu0 %v874
        %v876 = vpop.f32.mrf.mxu0
        %v877 = vadd.f32 %v842, %v876
        %878 = vdwg.mxu0
        %879 = vmatpush.msra.mxu0 0.0
        %880 = vmatpush.msra.mxu0 0.0
        %881 = vmatpush.msra.mxu0 0.0
        %882 = vmatpush.msra.mxu0 0.0
        %883 = vmatpush.msra.mxu0 0.0
        %884 = vmatpush.msra.mxu0 0.0
        %885 = vmatpush.msra.mxu0 0.0
        %886 = vmatpush.msra.mxu0 0.0
        %887 = vmatpush.msra.mxu0 0.0
        %888 = vmatpush.msra.mxu0 0.0
        %889 = vmatpush.msra.mxu0 0.0
        %890 = vmatpush.msra.mxu0 0.0
        %891 = vmatpush.msra.mxu0 0.0
        %892 = vmatpush.msra.mxu0 0.0
        %v893 = vand.u32 %v802, 4294901760
        %v894 = vsub.f32 %v802, %v893
        %895 = vmatpush.msra.mxu0 %v894
        %v896 = vand.u32 %v801, 4294901760
        %v897 = vsub.f32 %v801, %v896
        %898 = vmatpush.msra.mxu0 %v897
        %v899 = vand.u32 %v804, 4294901760
        %v900 = vsub.f32 %v804, %v899
        %901 = vmatmul.f32.gmra.mxu0 %v900
        %v902 = vpop.f32.mrf.mxu0
        %v903 = vadd.f32 %v873, %v902
        %v904 = vand.u32 %v807, 4294901760
        %v905 = vsub.f32 %v807, %v904
        %906 = vmatmul.f32.gmra.mxu0 %v905
        %v907 = vpop.f32.mrf.mxu0
        %v908 = vadd.f32 %v877, %v907
        %909 = vdwg.mxu0
        %910 = vmatpush.msra.mxu0 0.0
        %911 = vmatpush.msra.mxu0 0.0
        %912 = vmatpush.msra.mxu0 0.0
        %913 = vmatpush.msra.mxu0 0.0
        %914 = vmatpush.msra.mxu0 0.0
        %915 = vmatpush.msra.mxu0 0.0
        %916 = vmatpush.msra.mxu0 0.0
        %917 = vmatpush.msra.mxu0 0.0
        %918 = vmatpush.msra.mxu0 0.0
        %919 = vmatpush.msra.mxu0 0.0
        %920 = vmatpush.msra.mxu0 0.0
        %921 = vmatpush.msra.mxu0 0.0
        %922 = vmatpush.msra.mxu0 0.0
        %923 = vmatpush.msra.mxu0 0.0
        %v924 = vand.u32 %v802, 4294901760
        %925 = vmatpush.msra.mxu0 %v924
        %v926 = vand.u32 %v801, 4294901760
        %927 = vmatpush.msra.mxu0 %v926
        %v928 = vand.u32 %v804, 4294901760
        %v929 = vsub.f32 %v804, %v928
        %v930 = vand.u32 %v929, 4294901760
        %931 = vmatmul.f32.gmra.mxu0 %v930
        %v932 = vpop.f32.mrf.mxu0
        %v933 = vadd.f32 %v903, %v932
        %v934 = vand.u32 %v807, 4294901760
        %v935 = vsub.f32 %v807, %v934
        %v936 = vand.u32 %v935, 4294901760
        %937 = vmatmul.f32.gmra.mxu0 %v936
        %v938 = vpop.f32.mrf.mxu0
        %v939 = vadd.f32 %v908, %v938
        %940 = vdwg.mxu0
        %941 = vmatpush.msra.mxu0 0.0
        %942 = vmatpush.msra.mxu0 0.0
        %943 = vmatpush.msra.mxu0 0.0
        %944 = vmatpush.msra.mxu0 0.0
        %945 = vmatpush.msra.mxu0 0.0
        %946 = vmatpush.msra.mxu0 0.0
        %947 = vmatpush.msra.mxu0 0.0
        %948 = vmatpush.msra.mxu0 0.0
        %949 = vmatpush.msra.mxu0 0.0
        %950 = vmatpush.msra.mxu0 0.0
        %951 = vmatpush.msra.mxu0 0.0
        %952 = vmatpush.msra.mxu0 0.0
        %953 = vmatpush.msra.mxu0 0.0
        %954 = vmatpush.msra.mxu0 0.0
        %v955 = vand.u32 %v802, 4294901760
        %v956 = vsub.f32 %v802, %v955
        %v957 = vand.u32 %v956, 4294901760
        %958 = vmatpush.msra.mxu0 %v957
        %v959 = vand.u32 %v801, 4294901760
        %v960 = vsub.f32 %v801, %v959
        %v961 = vand.u32 %v960, 4294901760
        %962 = vmatpush.msra.mxu0 %v961
        %v963 = vand.u32 %v804, 4294901760
        %964 = vmatmul.f32.gmra.mxu0 %v963
        %v965 = vpop.f32.mrf.mxu0
        %v966 = vadd.f32 %v933, %v965
        %v967 = vand.u32 %v807, 4294901760
        %968 = vmatmul.f32.gmra.mxu0 %v967
        %v969 = vpop.f32.mrf.mxu0
        %v970 = vadd.f32 %v939, %v969
        %971 = vdwg.mxu0
        %972 = vmatpush.msra.mxu0 0.0
        %973 = vmatpush.msra.mxu0 0.0
        %974 = vmatpush.msra.mxu0 0.0
        %975 = vmatpush.msra.mxu0 0.0
        %976 = vmatpush.msra.mxu0 0.0
        %977 = vmatpush.msra.mxu0 0.0
        %978 = vmatpush.msra.mxu0 0.0
        %979 = vmatpush.msra.mxu0 0.0
        %980 = vmatpush.msra.mxu0 0.0
        %981 = vmatpush.msra.mxu0 0.0
        %982 = vmatpush.msra.mxu0 0.0
        %983 = vmatpush.msra.mxu0 0.0
        %984 = vmatpush.msra.mxu0 0.0
        %985 = vmatpush.msra.mxu0 0.0
        %v986 = vand.u32 %v802, 4294901760
        %987 = vmatpush.msra.mxu0 %v986
        %v988 = vand.u32 %v801, 4294901760
        %989 = vmatpush.msra.mxu0 %v988
        %v990 = vand.u32 %v804, 4294901760
        %991 = vmatmul.f32.gmra.mxu0 %v990
        %v992 = vpop.f32.mrf.mxu0
        %v993 = vadd.f32 %v966, %v992
        %v994 = vand.u32 %v807, 4294901760
        %995 = vmatmul.f32.gmra.mxu0 %v994
        %v996 = vpop.f32.mrf.mxu0
        %v997 = vadd.f32 %v970, %v996
        %998 = vdwg.mxu0
        %v999 = vsub.f32 %v595, %v793
        %v1000 = vsub.f32 %v599, %v797
        %v1001 = vsub.f32 %v993, %v595
        %v1002 = vsub.f32 %v997, %v599
        %v1003 = vsub.f32 %v1001, %v793
        %v1004 = vsub.f32 %v1002, %v797
        %1005 = vst.msk [vmem:[#allocation2] sm:$0xff] %vm404, %v999
        %1006 = vst.msk [vmem:[#allocation2 + $0x8] sm:$0xff] %vm404, %v1000
        %1007 = vst.msk [vmem:[#allocation3] sm:$0xff] %vm404, %v1003
        %1008 = vst.msk [vmem:[#allocation3 + $0x8] sm:$0xff] %vm404, %v1004
        %v1009 = vadd.f32 %v999, %v1003
        %v1010 = vadd.f32 %v1000, %v1004
        %1011 = vst.msk [vmem:[#allocation4] sm:$0xff] %vm404, %v1009
        %1012 = vst.msk [vmem:[#allocation4 + $0x8] sm:$0xff] %vm404, %v1010
        %v1013 = vld [vmem:[#allocation8] sm:$0xff]
        %v1014 = vld [vmem:[#allocation8 + $0x8] sm:$0xff]
        %v1015 = vld [vmem:[#allocation10] sm:$0xff]
        %v1016 = vld [vmem:[#allocation10 + $0x8] sm:$0xff]
        %v1017 = vld [vmem:[#allocation11] sm:$0xff]
        %v1018 = vld [vmem:[#allocation11 + $0x8] sm:$0xff]
        %v1019 = vld [vmem:[#allocation2] sm:$0xff]
        %v1020 = vld [vmem:[#allocation2 + $0x8] sm:$0xff]
        %v1022 = vsel %vm404, %v1013, 0
        %v1025 = vsel %vm404, %v1014, 0
        %1027 = vmatpush.msra.mxu0 0.0
        %1028 = vmatpush.msra.mxu0 0.0
        %1029 = vmatpush.msra.mxu0 0.0
        %1030 = vmatpush.msra.mxu0 0.0
        %1031 = vmatpush.msra.mxu0 0.0
        %1032 = vmatpush.msra.mxu0 0.0
        %1033 = vmatpush.msra.mxu0 0.0
        %1034 = vmatpush.msra.mxu0 0.0
        %1035 = vmatpush.msra.mxu0 0.0
        %1036 = vmatpush.msra.mxu0 0.0
        %1037 = vmatpush.msra.mxu0 0.0
        %1038 = vmatpush.msra.mxu0 0.0
        %1039 = vmatpush.msra.mxu0 0.0
        %1040 = vmatpush.msra.mxu0 0.0
        %v1041 = vand.u32 %v1020, 4294901760
        %1042 = vmatpush.msra.mxu0 %v1041
        %v1043 = vand.u32 %v1019, 4294901760
        %1044 = vmatpush.msra.mxu0 %v1043
        %v1045 = vand.u32 %v1022, 4294901760
        %v1046 = vsub.f32 %v1022, %v1045
        %v1047 = vand.u32 %v1046, 4294901760
        %v1048 = vsub.f32 %v1046, %v1047
        %v1049 = vand.u32 %v1048, 4294901760
        %1050 = vmatmul.f32.gmra.mxu0 %v1049
        %v1051 = vpop.f32.mrf.mxu0
        %v1052 = vadd.f32 0.0, %v1051
        %v1053 = vand.u32 %v1025, 4294901760
        %v1054 = vsub.f32 %v1025, %v1053
        %v1055 = vand.u32 %v1054, 4294901760
        %v1056 = vsub.f32 %v1054, %v1055
        %v1057 = vand.u32 %v1056, 4294901760
        %1058 = vmatmul.f32.gmra.mxu0 %v1057
        %v1059 = vpop.f32.mrf.mxu0
        %v1060 = vadd.f32 0.0, %v1059
        %1061 = vdwg.mxu0
        %1062 = vmatpush.msra.mxu0 0.0
        %1063 = vmatpush.msra.mxu0 0.0
        %1064 = vmatpush.msra.mxu0 0.0
        %1065 = vmatpush.msra.mxu0 0.0
        %1066 = vmatpush.msra.mxu0 0.0
        %1067 = vmatpush.msra.mxu0 0.0
        %1068 = vmatpush.msra.mxu0 0.0
        %1069 = vmatpush.msra.mxu0 0.0
        %1070 = vmatpush.msra.mxu0 0.0
        %1071 = vmatpush.msra.mxu0 0.0
        %1072 = vmatpush.msra.mxu0 0.0
        %1073 = vmatpush.msra.mxu0 0.0
        %1074 = vmatpush.msra.mxu0 0.0
        %1075 = vmatpush.msra.mxu0 0.0
        %v1076 = vand.u32 %v1020, 4294901760
        %v1077 = vsub.f32 %v1020, %v1076
        %v1078 = vand.u32 %v1077, 4294901760
        %v1079 = vsub.f32 %v1077, %v1078
        %v1080 = vand.u32 %v1079, 4294901760
        %1081 = vmatpush.msra.mxu0 %v1080
        %v1082 = vand.u32 %v1019, 4294901760
        %v1083 = vsub.f32 %v1019, %v1082
        %v1084 = vand.u32 %v1083, 4294901760
        %v1085 = vsub.f32 %v1083, %v1084
        %v1086 = vand.u32 %v1085, 4294901760
        %1087 = vmatpush.msra.mxu0 %v1086
        %v1088 = vand.u32 %v1022, 4294901760
        %1089 = vmatmul.f32.gmra.mxu0 %v1088
        %v1090 = vpop.f32.mrf.mxu0
        %v1091 = vadd.f32 %v1052, %v1090
        %v1092 = vand.u32 %v1025, 4294901760
        %1093 = vmatmul.f32.gmra.mxu0 %v1092
        %v1094 = vpop.f32.mrf.mxu0
        %v1095 = vadd.f32 %v1060, %v1094
        %1096 = vdwg.mxu0
        %1097 = vmatpush.msra.mxu0 0.0
        %1098 = vmatpush.msra.mxu0 0.0
        %1099 = vmatpush.msra.mxu0 0.0
        %1100 = vmatpush.msra.mxu0 0.0
        %1101 = vmatpush.msra.mxu0 0.0
        %1102 = vmatpush.msra.mxu0 0.0
        %1103 = vmatpush.msra.mxu0 0.0
        %1104 = vmatpush.msra.mxu0 0.0
        %1105 = vmatpush.msra.mxu0 0.0
        %1106 = vmatpush.msra.mxu0 0.0
        %1107 = vmatpush.msra.mxu0 0.0
        %1108 = vmatpush.msra.mxu0 0.0
        %1109 = vmatpush.msra.mxu0 0.0
        %1110 = vmatpush.msra.mxu0 0.0
        %v1111 = vand.u32 %v1020, 4294901760
        %v1112 = vsub.f32 %v1020, %v1111
        %1113 = vmatpush.msra.mxu0 %v1112
        %v1114 = vand.u32 %v1019, 4294901760
        %v1115 = vsub.f32 %v1019, %v1114
        %1116 = vmatpush.msra.mxu0 %v1115
        %v1117 = vand.u32 %v1022, 4294901760
        %v1118 = vsub.f32 %v1022, %v1117
        %1119 = vmatmul.f32.gmra.mxu0 %v1118
        %v1120 = vpop.f32.mrf.mxu0
        %v1121 = vadd.f32 %v1091, %v1120
        %v1122 = vand.u32 %v1025, 4294901760
        %v1123 = vsub.f32 %v1025, %v1122
        %1124 = vmatmul.f32.gmra.mxu0 %v1123
        %v1125 = vpop.f32.mrf.mxu0
        %v1126 = vadd.f32 %v1095, %v1125
        %1127 = vdwg.mxu0
        %1128 = vmatpush.msra.mxu0 0.0
        %1129 = vmatpush.msra.mxu0 0.0
        %1130 = vmatpush.msra.mxu0 0.0
        %1131 = vmatpush.msra.mxu0 0.0
        %1132 = vmatpush.msra.mxu0 0.0
        %1133 = vmatpush.msra.mxu0 0.0
        %1134 = vmatpush.msra.mxu0 0.0
        %1135 = vmatpush.msra.mxu0 0.0
        %1136 = vmatpush.msra.mxu0 0.0
        %1137 = vmatpush.msra.mxu0 0.0
        %1138 = vmatpush.msra.mxu0 0.0
        %1139 = vmatpush.msra.mxu0 0.0
        %1140 = vmatpush.msra.mxu0 0.0
        %1141 = vmatpush.msra.mxu0 0.0
        %v1142 = vand.u32 %v1020, 4294901760
        %1143 = vmatpush.msra.mxu0 %v1142
        %v1144 = vand.u32 %v1019, 4294901760
        %1145 = vmatpush.msra.mxu0 %v1144
        %v1146 = vand.u32 %v1022, 4294901760
        %v1147 = vsub.f32 %v1022, %v1146
        %v1148 = vand.u32 %v1147, 4294901760
        %1149 = vmatmul.f32.gmra.mxu0 %v1148
        %v1150 = vpop.f32.mrf.mxu0
        %v1151 = vadd.f32 %v1121, %v1150
        %v1152 = vand.u32 %v1025, 4294901760
        %v1153 = vsub.f32 %v1025, %v1152
        %v1154 = vand.u32 %v1153, 4294901760
        %1155 = vmatmul.f32.gmra.mxu0 %v1154
        %v1156 = vpop.f32.mrf.mxu0
        %v1157 = vadd.f32 %v1126, %v1156
        %1158 = vdwg.mxu0
        %1159 = vmatpush.msra.mxu0 0.0
        %1160 = vmatpush.msra.mxu0 0.0
        %1161 = vmatpush.msra.mxu0 0.0
        %1162 = vmatpush.msra.mxu0 0.0
        %1163 = vmatpush.msra.mxu0 0.0
        %1164 = vmatpush.msra.mxu0 0.0
        %1165 = vmatpush.msra.mxu0 0.0
        %1166 = vmatpush.msra.mxu0 0.0
        %1167 = vmatpush.msra.mxu0 0.0
        %1168 = vmatpush.msra.mxu0 0.0
        %1169 = vmatpush.msra.mxu0 0.0
        %1170 = vmatpush.msra.mxu0 0.0
        %1171 = vmatpush.msra.mxu0 0.0
        %1172 = vmatpush.msra.mxu0 0.0
        %v1173 = vand.u32 %v1020, 4294901760
        %v1174 = vsub.f32 %v1020, %v1173
        %v1175 = vand.u32 %v1174, 4294901760
        %1176 = vmatpush.msra.mxu0 %v1175
        %v1177 = vand.u32 %v1019, 4294901760
        %v1178 = vsub.f32 %v1019, %v1177
        %v1179 = vand.u32 %v1178, 4294901760
        %1180 = vmatpush.msra.mxu0 %v1179
        %v1181 = vand.u32 %v1022, 4294901760
        %1182 = vmatmul.f32.gmra.mxu0 %v1181
        %v1183 = vpop.f32.mrf.mxu0
        %v1184 = vadd.f32 %v1151, %v1183
        %v1185 = vand.u32 %v1025, 4294901760
        %1186 = vmatmul.f32.gmra.mxu0 %v1185
        %v1187 = vpop.f32.mrf.mxu0
        %v1188 = vadd.f32 %v1157, %v1187
        %1189 = vdwg.mxu0
        %1190 = vmatpush.msra.mxu0 0.0
        %1191 = vmatpush.msra.mxu0 0.0
        %1192 = vmatpush.msra.mxu0 0.0
        %1193 = vmatpush.msra.mxu0 0.0
        %1194 = vmatpush.msra.mxu0 0.0
        %1195 = vmatpush.msra.mxu0 0.0
        %1196 = vmatpush.msra.mxu0 0.0
        %1197 = vmatpush.msra.mxu0 0.0
        %1198 = vmatpush.msra.mxu0 0.0
        %1199 = vmatpush.msra.mxu0 0.0
        %1200 = vmatpush.msra.mxu0 0.0
        %1201 = vmatpush.msra.mxu0 0.0
        %1202 = vmatpush.msra.mxu0 0.0
        %1203 = vmatpush.msra.mxu0 0.0
        %v1204 = vand.u32 %v1020, 4294901760
        %1205 = vmatpush.msra.mxu0 %v1204
        %v1206 = vand.u32 %v1019, 4294901760
        %1207 = vmatpush.msra.mxu0 %v1206
        %v1208 = vand.u32 %v1022, 4294901760
        %1209 = vmatmul.f32.gmra.mxu0 %v1208
        %v1210 = vpop.f32.mrf.mxu0
        %v1211 = vadd.f32 %v1184, %v1210
        %v1212 = vand.u32 %v1025, 4294901760
        %1213 = vmatmul.f32.gmra.mxu0 %v1212
        %v1214 = vpop.f32.mrf.mxu0
        %v1215 = vadd.f32 %v1188, %v1214
        %1216 = vdwg.mxu0
        %v1217 = vld [vmem:[#allocation3] sm:$0xff]
        %v1218 = vld [vmem:[#allocation3 + $0x8] sm:$0xff]
        %v1220 = vsel %vm404, %v1015, 0
        %v1223 = vsel %vm404, %v1016, 0
        %1225 = vmatpush.msra.mxu0 0.0
        %1226 = vmatpush.msra.mxu0 0.0
        %1227 = vmatpush.msra.mxu0 0.0
        %1228 = vmatpush.msra.mxu0 0.0
        %1229 = vmatpush.msra.mxu0 0.0
        %1230 = vmatpush.msra.mxu0 0.0
        %1231 = vmatpush.msra.mxu0 0.0
        %1232 = vmatpush.msra.mxu0 0.0
        %1233 = vmatpush.msra.mxu0 0.0
        %1234 = vmatpush.msra.mxu0 0.0
        %1235 = vmatpush.msra.mxu0 0.0
        %1236 = vmatpush.msra.mxu0 0.0
        %1237 = vmatpush.msra.mxu0 0.0
        %1238 = vmatpush.msra.mxu0 0.0
        %v1239 = vand.u32 %v1218, 4294901760
        %1240 = vmatpush.msra.mxu0 %v1239
        %v1241 = vand.u32 %v1217, 4294901760
        %1242 = vmatpush.msra.mxu0 %v1241
        %v1243 = vand.u32 %v1220, 4294901760
        %v1244 = vsub.f32 %v1220, %v1243
        %v1245 = vand.u32 %v1244, 4294901760
        %v1246 = vsub.f32 %v1244, %v1245
        %v1247 = vand.u32 %v1246, 4294901760
        %1248 = vmatmul.f32.gmra.mxu0 %v1247
        %v1249 = vpop.f32.mrf.mxu0
        %v1250 = vadd.f32 0.0, %v1249
        %v1251 = vand.u32 %v1223, 4294901760
        %v1252 = vsub.f32 %v1223, %v1251
        %v1253 = vand.u32 %v1252, 4294901760
        %v1254 = vsub.f32 %v1252, %v1253
        %v1255 = vand.u32 %v1254, 4294901760
        %1256 = vmatmul.f32.gmra.mxu0 %v1255
        %v1257 = vpop.f32.mrf.mxu0
        %v1258 = vadd.f32 0.0, %v1257
        %1259 = vdwg.mxu0
        %1260 = vmatpush.msra.mxu0 0.0
        %1261 = vmatpush.msra.mxu0 0.0
        %1262 = vmatpush.msra.mxu0 0.0
        %1263 = vmatpush.msra.mxu0 0.0
        %1264 = vmatpush.msra.mxu0 0.0
        %1265 = vmatpush.msra.mxu0 0.0
        %1266 = vmatpush.msra.mxu0 0.0
        %1267 = vmatpush.msra.mxu0 0.0
        %1268 = vmatpush.msra.mxu0 0.0
        %1269 = vmatpush.msra.mxu0 0.0
        %1270 = vmatpush.msra.mxu0 0.0
        %1271 = vmatpush.msra.mxu0 0.0
        %1272 = vmatpush.msra.mxu0 0.0
        %1273 = vmatpush.msra.mxu0 0.0
        %v1274 = vand.u32 %v1218, 4294901760
        %v1275 = vsub.f32 %v1218, %v1274
        %v1276 = vand.u32 %v1275, 4294901760
        %v1277 = vsub.f32 %v1275, %v1276
        %v1278 = vand.u32 %v1277, 4294901760
        %1279 = vmatpush.msra.mxu0 %v1278
        %v1280 = vand.u32 %v1217, 4294901760
        %v1281 = vsub.f32 %v1217, %v1280
        %v1282 = vand.u32 %v1281, 4294901760
        %v1283 = vsub.f32 %v1281, %v1282
        %v1284 = vand.u32 %v1283, 4294901760
        %1285 = vmatpush.msra.mxu0 %v1284
        %v1286 = vand.u32 %v1220, 4294901760
        %1287 = vmatmul.f32.gmra.mxu0 %v1286
        %v1288 = vpop.f32.mrf.mxu0
        %v1289 = vadd.f32 %v1250, %v1288
        %v1290 = vand.u32 %v1223, 4294901760
        %1291 = vmatmul.f32.gmra.mxu0 %v1290
        %v1292 = vpop.f32.mrf.mxu0
        %v1293 = vadd.f32 %v1258, %v1292
        %1294 = vdwg.mxu0
        %1295 = vmatpush.msra.mxu0 0.0
        %1296 = vmatpush.msra.mxu0 0.0
        %1297 = vmatpush.msra.mxu0 0.0
        %1298 = vmatpush.msra.mxu0 0.0
        %1299 = vmatpush.msra.mxu0 0.0
        %1300 = vmatpush.msra.mxu0 0.0
        %1301 = vmatpush.msra.mxu0 0.0
        %1302 = vmatpush.msra.mxu0 0.0
        %1303 = vmatpush.msra.mxu0 0.0
        %1304 = vmatpush.msra.mxu0 0.0
        %1305 = vmatpush.msra.mxu0 0.0
        %1306 = vmatpush.msra.mxu0 0.0
        %1307 = vmatpush.msra.mxu0 0.0
        %1308 = vmatpush.msra.mxu0 0.0
        %v1309 = vand.u32 %v1218, 4294901760
        %v1310 = vsub.f32 %v1218, %v1309
        %1311 = vmatpush.msra.mxu0 %v1310
        %v1312 = vand.u32 %v1217, 4294901760
        %v1313 = vsub.f32 %v1217, %v1312
        %1314 = vmatpush.msra.mxu0 %v1313
        %v1315 = vand.u32 %v1220, 4294901760
        %v1316 = vsub.f32 %v1220, %v1315
        %1317 = vmatmul.f32.gmra.mxu0 %v1316
        %v1318 = vpop.f32.mrf.mxu0
        %v1319 = vadd.f32 %v1289, %v1318
        %v1320 = vand.u32 %v1223, 4294901760
        %v1321 = vsub.f32 %v1223, %v1320
        %1322 = vmatmul.f32.gmra.mxu0 %v1321
        %v1323 = vpop.f32.mrf.mxu0
        %v1324 = vadd.f32 %v1293, %v1323
        %1325 = vdwg.mxu0
        %1326 = vmatpush.msra.mxu0 0.0
        %1327 = vmatpush.msra.mxu0 0.0
        %1328 = vmatpush.msra.mxu0 0.0
        %1329 = vmatpush.msra.mxu0 0.0
        %1330 = vmatpush.msra.mxu0 0.0
        %1331 = vmatpush.msra.mxu0 0.0
        %1332 = vmatpush.msra.mxu0 0.0
        %1333 = vmatpush.msra.mxu0 0.0
        %1334 = vmatpush.msra.mxu0 0.0
        %1335 = vmatpush.msra.mxu0 0.0
        %1336 = vmatpush.msra.mxu0 0.0
        %1337 = vmatpush.msra.mxu0 0.0
        %1338 = vmatpush.msra.mxu0 0.0
        %1339 = vmatpush.msra.mxu0 0.0
        %v1340 = vand.u32 %v1218, 4294901760
        %1341 = vmatpush.msra.mxu0 %v1340
        %v1342 = vand.u32 %v1217, 4294901760
        %1343 = vmatpush.msra.mxu0 %v1342
        %v1344 = vand.u32 %v1220, 4294901760
        %v1345 = vsub.f32 %v1220, %v1344
        %v1346 = vand.u32 %v1345, 4294901760
        %1347 = vmatmul.f32.gmra.mxu0 %v1346
        %v1348 = vpop.f32.mrf.mxu0
        %v1349 = vadd.f32 %v1319, %v1348
        %v1350 = vand.u32 %v1223, 4294901760
        %v1351 = vsub.f32 %v1223, %v1350
        %v1352 = vand.u32 %v1351, 4294901760
        %1353 = vmatmul.f32.gmra.mxu0 %v1352
        %v1354 = vpop.f32.mrf.mxu0
        %v1355 = vadd.f32 %v1324, %v1354
        %1356 = vdwg.mxu0
        %1357 = vmatpush.msra.mxu0 0.0
        %1358 = vmatpush.msra.mxu0 0.0
        %1359 = vmatpush.msra.mxu0 0.0
        %1360 = vmatpush.msra.mxu0 0.0
        %1361 = vmatpush.msra.mxu0 0.0
        %1362 = vmatpush.msra.mxu0 0.0
        %1363 = vmatpush.msra.mxu0 0.0
        %1364 = vmatpush.msra.mxu0 0.0
        %1365 = vmatpush.msra.mxu0 0.0
        %1366 = vmatpush.msra.mxu0 0.0
        %1367 = vmatpush.msra.mxu0 0.0
        %1368 = vmatpush.msra.mxu0 0.0
        %1369 = vmatpush.msra.mxu0 0.0
        %1370 = vmatpush.msra.mxu0 0.0
        %v1371 = vand.u32 %v1218, 4294901760
        %v1372 = vsub.f32 %v1218, %v1371
        %v1373 = vand.u32 %v1372, 4294901760
        %1374 = vmatpush.msra.mxu0 %v1373
        %v1375 = vand.u32 %v1217, 4294901760
        %v1376 = vsub.f32 %v1217, %v1375
        %v1377 = vand.u32 %v1376, 4294901760
        %1378 = vmatpush.msra.mxu0 %v1377
        %v1379 = vand.u32 %v1220, 4294901760
        %1380 = vmatmul.f32.gmra.mxu0 %v1379
        %v1381 = vpop.f32.mrf.mxu0
        %v1382 = vadd.f32 %v1349, %v1381
        %v1383 = vand.u32 %v1223, 4294901760
        %1384 = vmatmul.f32.gmra.mxu0 %v1383
        %v1385 = vpop.f32.mrf.mxu0
        %v1386 = vadd.f32 %v1355, %v1385
        %1387 = vdwg.mxu0
        %1388 = vmatpush.msra.mxu0 0.0
        %1389 = vmatpush.msra.mxu0 0.0
        %1390 = vmatpush.msra.mxu0 0.0
        %1391 = vmatpush.msra.mxu0 0.0
        %1392 = vmatpush.msra.mxu0 0.0
        %1393 = vmatpush.msra.mxu0 0.0
        %1394 = vmatpush.msra.mxu0 0.0
        %1395 = vmatpush.msra.mxu0 0.0
        %1396 = vmatpush.msra.mxu0 0.0
        %1397 = vmatpush.msra.mxu0 0.0
        %1398 = vmatpush.msra.mxu0 0.0
        %1399 = vmatpush.msra.mxu0 0.0
        %1400 = vmatpush.msra.mxu0 0.0
        %1401 = vmatpush.msra.mxu0 0.0
        %v1402 = vand.u32 %v1218, 4294901760
        %1403 = vmatpush.msra.mxu0 %v1402
        %v1404 = vand.u32 %v1217, 4294901760
        %1405 = vmatpush.msra.mxu0 %v1404
        %v1406 = vand.u32 %v1220, 4294901760
        %1407 = vmatmul.f32.gmra.mxu0 %v1406
        %v1408 = vpop.f32.mrf.mxu0
        %v1409 = vadd.f32 %v1382, %v1408
        %v1410 = vand.u32 %v1223, 4294901760
        %1411 = vmatmul.f32.gmra.mxu0 %v1410
        %v1412 = vpop.f32.mrf.mxu0
        %v1413 = vadd.f32 %v1386, %v1412
        %1414 = vdwg.mxu0
        %v1415 = vld [vmem:[#allocation4] sm:$0xff]
        %v1416 = vld [vmem:[#allocation4 + $0x8] sm:$0xff]
        %v1418 = vsel %vm404, %v1017, 0
        %v1421 = vsel %vm404, %v1018, 0
        %1423 = vmatpush.msra.mxu0 0.0
        %1424 = vmatpush.msra.mxu0 0.0
        %1425 = vmatpush.msra.mxu0 0.0
        %1426 = vmatpush.msra.mxu0 0.0
        %1427 = vmatpush.msra.mxu0 0.0
        %1428 = vmatpush.msra.mxu0 0.0
        %1429 = vmatpush.msra.mxu0 0.0
        %1430 = vmatpush.msra.mxu0 0.0
        %1431 = vmatpush.msra.mxu0 0.0
        %1432 = vmatpush.msra.mxu0 0.0
        %1433 = vmatpush.msra.mxu0 0.0
        %1434 = vmatpush.msra.mxu0 0.0
        %1435 = vmatpush.msra.mxu0 0.0
        %1436 = vmatpush.msra.mxu0 0.0
        %v1437 = vand.u32 %v1416, 4294901760
        %1438 = vmatpush.msra.mxu0 %v1437
        %v1439 = vand.u32 %v1415, 4294901760
        %1440 = vmatpush.msra.mxu0 %v1439
        %v1441 = vand.u32 %v1418, 4294901760
        %v1442 = vsub.f32 %v1418, %v1441
        %v1443 = vand.u32 %v1442, 4294901760
        %v1444 = vsub.f32 %v1442, %v1443
        %v1445 = vand.u32 %v1444, 4294901760
        %1446 = vmatmul.f32.gmra.mxu0 %v1445
        %v1447 = vpop.f32.mrf.mxu0
        %v1448 = vadd.f32 0.0, %v1447
        %v1449 = vand.u32 %v1421, 4294901760
        %v1450 = vsub.f32 %v1421, %v1449
        %v1451 = vand.u32 %v1450, 4294901760
        %v1452 = vsub.f32 %v1450, %v1451
        %v1453 = vand.u32 %v1452, 4294901760
        %1454 = vmatmul.f32.gmra.mxu0 %v1453
        %v1455 = vpop.f32.mrf.mxu0
        %v1456 = vadd.f32 0.0, %v1455
        %1457 = vdwg.mxu0
        %1458 = vmatpush.msra.mxu0 0.0
        %1459 = vmatpush.msra.mxu0 0.0
        %1460 = vmatpush.msra.mxu0 0.0
        %1461 = vmatpush.msra.mxu0 0.0
        %1462 = vmatpush.msra.mxu0 0.0
        %1463 = vmatpush.msra.mxu0 0.0
        %1464 = vmatpush.msra.mxu0 0.0
        %1465 = vmatpush.msra.mxu0 0.0
        %1466 = vmatpush.msra.mxu0 0.0
        %1467 = vmatpush.msra.mxu0 0.0
        %1468 = vmatpush.msra.mxu0 0.0
        %1469 = vmatpush.msra.mxu0 0.0
        %1470 = vmatpush.msra.mxu0 0.0
        %1471 = vmatpush.msra.mxu0 0.0
        %v1472 = vand.u32 %v1416, 4294901760
        %v1473 = vsub.f32 %v1416, %v1472
        %v1474 = vand.u32 %v1473, 4294901760
        %v1475 = vsub.f32 %v1473, %v1474
        %v1476 = vand.u32 %v1475, 4294901760
        %1477 = vmatpush.msra.mxu0 %v1476
        %v1478 = vand.u32 %v1415, 4294901760
        %v1479 = vsub.f32 %v1415, %v1478
        %v1480 = vand.u32 %v1479, 4294901760
        %v1481 = vsub.f32 %v1479, %v1480
        %v1482 = vand.u32 %v1481, 4294901760
        %1483 = vmatpush.msra.mxu0 %v1482
        %v1484 = vand.u32 %v1418, 4294901760
        %1485 = vmatmul.f32.gmra.mxu0 %v1484
        %v1486 = vpop.f32.mrf.mxu0
        %v1487 = vadd.f32 %v1448, %v1486
        %v1488 = vand.u32 %v1421, 4294901760
        %1489 = vmatmul.f32.gmra.mxu0 %v1488
        %v1490 = vpop.f32.mrf.mxu0
        %v1491 = vadd.f32 %v1456, %v1490
        %1492 = vdwg.mxu0
        %1493 = vmatpush.msra.mxu0 0.0
        %1494 = vmatpush.msra.mxu0 0.0
        %1495 = vmatpush.msra.mxu0 0.0
        %1496 = vmatpush.msra.mxu0 0.0
        %1497 = vmatpush.msra.mxu0 0.0
        %1498 = vmatpush.msra.mxu0 0.0
        %1499 = vmatpush.msra.mxu0 0.0
        %1500 = vmatpush.msra.mxu0 0.0
        %1501 = vmatpush.msra.mxu0 0.0
        %1502 = vmatpush.msra.mxu0 0.0
        %1503 = vmatpush.msra.mxu0 0.0
        %1504 = vmatpush.msra.mxu0 0.0
        %1505 = vmatpush.msra.mxu0 0.0
        %1506 = vmatpush.msra.mxu0 0.0
        %v1507 = vand.u32 %v1416, 4294901760
        %v1508 = vsub.f32 %v1416, %v1507
        %1509 = vmatpush.msra.mxu0 %v1508
        %v1510 = vand.u32 %v1415, 4294901760
        %v1511 = vsub.f32 %v1415, %v1510
        %1512 = vmatpush.msra.mxu0 %v1511
        %v1513 = vand.u32 %v1418, 4294901760
        %v1514 = vsub.f32 %v1418, %v1513
        %1515 = vmatmul.f32.gmra.mxu0 %v1514
        %v1516 = vpop.f32.mrf.mxu0
        %v1517 = vadd.f32 %v1487, %v1516
        %v1518 = vand.u32 %v1421, 4294901760
        %v1519 = vsub.f32 %v1421, %v1518
        %1520 = vmatmul.f32.gmra.mxu0 %v1519
        %v1521 = vpop.f32.mrf.mxu0
        %v1522 = vadd.f32 %v1491, %v1521
        %1523 = vdwg.mxu0
        %1524 = vmatpush.msra.mxu0 0.0
        %1525 = vmatpush.msra.mxu0 0.0
        %1526 = vmatpush.msra.mxu0 0.0
        %1527 = vmatpush.msra.mxu0 0.0
        %1528 = vmatpush.msra.mxu0 0.0
        %1529 = vmatpush.msra.mxu0 0.0
        %1530 = vmatpush.msra.mxu0 0.0
        %1531 = vmatpush.msra.mxu0 0.0
        %1532 = vmatpush.msra.mxu0 0.0
        %1533 = vmatpush.msra.mxu0 0.0
        %1534 = vmatpush.msra.mxu0 0.0
        %1535 = vmatpush.msra.mxu0 0.0
        %1536 = vmatpush.msra.mxu0 0.0
        %1537 = vmatpush.msra.mxu0 0.0
        %v1538 = vand.u32 %v1416, 4294901760
        %1539 = vmatpush.msra.mxu0 %v1538
        %v1540 = vand.u32 %v1415, 4294901760
        %1541 = vmatpush.msra.mxu0 %v1540
        %v1542 = vand.u32 %v1418, 4294901760
        %v1543 = vsub.f32 %v1418, %v1542
        %v1544 = vand.u32 %v1543, 4294901760
        %1545 = vmatmul.f32.gmra.mxu0 %v1544
        %v1546 = vpop.f32.mrf.mxu0
        %v1547 = vadd.f32 %v1517, %v1546
        %v1548 = vand.u32 %v1421, 4294901760
        %v1549 = vsub.f32 %v1421, %v1548
        %v1550 = vand.u32 %v1549, 4294901760
        %1551 = vmatmul.f32.gmra.mxu0 %v1550
        %v1552 = vpop.f32.mrf.mxu0
        %v1553 = vadd.f32 %v1522, %v1552
        %1554 = vdwg.mxu0
        %1555 = vmatpush.msra.mxu0 0.0
        %1556 = vmatpush.msra.mxu0 0.0
        %1557 = vmatpush.msra.mxu0 0.0
        %1558 = vmatpush.msra.mxu0 0.0
        %1559 = vmatpush.msra.mxu0 0.0
        %1560 = vmatpush.msra.mxu0 0.0
        %1561 = vmatpush.msra.mxu0 0.0
        %1562 = vmatpush.msra.mxu0 0.0
        %1563 = vmatpush.msra.mxu0 0.0
        %1564 = vmatpush.msra.mxu0 0.0
        %1565 = vmatpush.msra.mxu0 0.0
        %1566 = vmatpush.msra.mxu0 0.0
        %1567 = vmatpush.msra.mxu0 0.0
        %1568 = vmatpush.msra.mxu0 0.0
        %v1569 = vand.u32 %v1416, 4294901760
        %v1570 = vsub.f32 %v1416, %v1569
        %v1571 = vand.u32 %v1570, 4294901760
        %1572 = vmatpush.msra.mxu0 %v1571
        %v1573 = vand.u32 %v1415, 4294901760
        %v1574 = vsub.f32 %v1415, %v1573
        %v1575 = vand.u32 %v1574, 4294901760
        %1576 = vmatpush.msra.mxu0 %v1575
        %v1577 = vand.u32 %v1418, 4294901760
        %1578 = vmatmul.f32.gmra.mxu0 %v1577
        %v1579 = vpop.f32.mrf.mxu0
        %v1580 = vadd.f32 %v1547, %v1579
        %v1581 = vand.u32 %v1421, 4294901760
        %1582 = vmatmul.f32.gmra.mxu0 %v1581
        %v1583 = vpop.f32.mrf.mxu0
        %v1584 = vadd.f32 %v1553, %v1583
        %1585 = vdwg.mxu0
        %1586 = vmatpush.msra.mxu0 0.0
        %1587 = vmatpush.msra.mxu0 0.0
        %1588 = vmatpush.msra.mxu0 0.0
        %1589 = vmatpush.msra.mxu0 0.0
        %1590 = vmatpush.msra.mxu0 0.0
        %1591 = vmatpush.msra.mxu0 0.0
        %1592 = vmatpush.msra.mxu0 0.0
        %1593 = vmatpush.msra.mxu0 0.0
        %1594 = vmatpush.msra.mxu0 0.0
        %1595 = vmatpush.msra.mxu0 0.0
        %1596 = vmatpush.msra.mxu0 0.0
        %1597 = vmatpush.msra.mxu0 0.0
        %1598 = vmatpush.msra.mxu0 0.0
        %1599 = vmatpush.msra.mxu0 0.0
        %v1600 = vand.u32 %v1416, 4294901760
        %1601 = vmatpush.msra.mxu0 %v1600
        %v1602 = vand.u32 %v1415, 4294901760
        %1603 = vmatpush.msra.mxu0 %v1602
        %v1604 = vand.u32 %v1418, 4294901760
        %1605 = vmatmul.f32.gmra.mxu0 %v1604
        %v1606 = vpop.f32.mrf.mxu0
        %v1607 = vadd.f32 %v1580, %v1606
        %v1608 = vand.u32 %v1421, 4294901760
        %1609 = vmatmul.f32.gmra.mxu0 %v1608
        %v1610 = vpop.f32.mrf.mxu0
        %v1611 = vadd.f32 %v1584, %v1610
        %1612 = vdwg.mxu0
        %v1613 = vsub.f32 %v1211, %v1409
        %v1614 = vsub.f32 %v1215, %v1413
        %1615 = vst.msk [vmem:[%s397] sm:$0xff] %vm404, %v1613
        %1616 = vst.msk [vmem:[%s397 + $0x8] sm:$0xff] %vm404, %v1614
        %v1617 = vsub.f32 %v1607, %v1211
        %v1618 = vsub.f32 %v1611, %v1215
        %v1619 = vsub.f32 %v1617, %v1409
        %v1620 = vsub.f32 %v1618, %v1413
        %s1621 = scalar_lea.vmem %s397, 16 [#allocation17]
        %1622 = vst.msk [vmem:[%s1621] sm:$0xff] %vm404, %v1619
        %1623 = vst.msk [vmem:[%s1621 + $0x8] sm:$0xff] %vm404, %v1620
        %s1624 = sand.u32 %s187, 1
        %s1625 = scalar_lea.sflag [#allocation7], %s1624
        %s1626 = sand.u32 %s187, 1
        %s1627 = smul.addr %s1626, 32
        %s1628 = scalar_lea.vmem [#allocation17], %s1627
        // Predicated region
        $region77: #{tpu_custom_call.1} parent=47 // pred_check
          %p1629 = pneg %p197
        $region78: #{tpu_custom_call.1} parent=47 // pred_check_branch
          %1631 = sbr.rel (%p1629) target = $region80
        $region79: #{tpu_custom_call.1} parent=47 // pred_region
          %1633 = vsyncadd %s1625, 0
          %s1634 = smul.addr %s27, 4
          %s1635 = smul.addr %s1634, 8
          %s1636 = scalar_lea.hbm %s7, %s1635
          %s1637 = sshll.u32 %s1628, 4
          %s1638 = int_to_ptr.vmem [resolvable:$true] %s1637
          %s1639 = sshll.u32 %s1636, 4
          %s1640 = int_to_ptr.hbm [resolvable:$true] %s1639
          %1645 = dma.vmem_to_hbm [thread:$0]  %s1638, 512, %s1640, %s1625, 128, 128, 8
        $region80: #{tpu_custom_call.1} parent=47 // pred_fallthru
          _
      $region48: #{tpu_custom_call.1} parent=5 // pred_fallthru
        _
      %p1646 = scmp.le.s32.totalorder 2, %s22
      // Predicated region
      $region81: #{tpu_custom_call.1} parent=5 // pred_check
        %p1647 = pneg %p1646
      $region82: #{tpu_custom_call.1} parent=5 // pred_check_branch
        %1649 = sbr.rel (%p1647) target = $region84
      $region83: #{tpu_custom_call.1} parent=5 // pred_region
        %s1650 = ssub.s32 %s22, 2
        // Predicated region
        $region85: #{tpu_custom_call.1} parent=83 // pred_check
          %p1651 = pneg %p203
        $region86: #{tpu_custom_call.1} parent=83 // pred_check_branch
          %1653 = sbr.rel (%p1651) target = $region88
        $region87: #{tpu_custom_call.1} parent=83 // pred_region
          %s1654 = sand.u32 %s188, 1
          %s1655 = scalar_lea.sflag [#allocation7], %s1654
          %s1656 = sand.u32 %s188, 1
          %s1657 = smul.addr %s1656, 32
          %s1658 = scalar_lea.vmem [#allocation17], %s1657
          %1660 = dma.done %s1655, 512
        $region88: #{tpu_custom_call.1} parent=83 // pred_fallthru
          _
      $region84: #{tpu_custom_call.1} parent=5 // pred_fallthru
        _
    $region6: #{tpu_custom_call.1} parent=1 // loop_footer
      %s26 = sadd.s32 1, %s22
    $region7: #{tpu_custom_call.1} parent=1 // loop_footer_branch
      %21 = sbr.rel target = $region3
    $region8: #{tpu_custom_call.1} parent=1 // loop_exit
      _
    %1661 = vsyncpa [#allocation6], 1
    %s1662 = scalar_lea.sflag [#allocation6], 1
    %1663 = vsyncpa %s1662, 1
    %1664 = vsyncpa [#allocation9], 1
    %1665 = vsyncpa [#allocation12], 1
    %1666 = vsyncpa [#allocation15], 1
    %1667 = vsyncpa [#allocation7], 1
    %s1668 = scalar_lea.sflag [#allocation7], 1
    %1669 = vsyncpa %s1668, 1

// kernel: tpu_custom_call.1
$region0: #{tpu_custom_call.1}
  #allocation0 [shape = 'u32[]', space=smem, size = 0x4, offset = 0x4, fixed_abs, tag = 'smem constant byte address 0x4 - core index']
  #allocation1 [shape = 'u32[72,128]{1,0:T(1,128)}', space=vmem, size = 0x9000, scoped, tag = 'internal scratch']
  #allocation2 [shape = 'f32[16,16]{1,0:T(8,128)}', space=vmem, size = 0x2000, scoped, tag = 'scratch operand']
  #allocation3 [shape = 'f32[16,16]{1,0:T(8,128)}', space=vmem, size = 0x2000, scoped, tag = 'scratch operand']
  #allocation4 [shape = 'f32[16,16]{1,0:T(8,128)}', space=vmem, size = 0x2000, scoped, tag = 'scratch operand']
  %s0 = inlined_call_operand.hbm [shape: f32[2,2,16,16], index: 0, kind: input, shape index: {}]
  %s1 = inlined_call_operand.hbm [shape: f32[16,16], index: 1, kind: input, shape index: {}]
  %s2 = inlined_call_operand.hbm [shape: f32[16,16], index: 2, kind: input, shape index: {}]
  %s3 = inlined_call_operand.hbm [shape: f32[16,16], index: 3, kind: input, shape index: {}]
  %s4 = inlined_call_operand.hbm [shape: f32[16,16], index: 4, kind: input, shape index: {}]
  %s5 = inlined_call_operand.hbm [shape: f32[16,16], index: 5, kind: input, shape index: {}]
  %s6 = inlined_call_operand.hbm [shape: f32[16,16], index: 6, kind: input, shape index: {}]
  %s7 = inlined_call_operand.hbm [shape: f32[2,2,16,16], index: 7, kind: output, shape index: {}]
  %s8 = sld [smem:[#allocation0]]
  $region89: #{tpu_custom_call.1} parent=0
    _
  %s10 = ssub.s32 1, %s8
  %s11 = scalar_select 0, %s10, %s8
  $region1: #{tpu_custom_call.1} parent=0
    #allocation5 [shape = 'u8[32768]{0}', space=vmem, size = 0x8000, scoped, tag = 'input window, operand 0']
    #allocation6 [shape = 's32[2]{0}', space=sflag, size = 0x8, scoped, tag = 'scoped memory for tpu_custom_call.1']
    #allocation7 [shape = 's32[2]{0}', space=sflag, size = 0x8, scoped, tag = 'scoped memory for tpu_custom_call.1']
    #allocation8 [shape = 'u8[8192]{0}', space=vmem, size = 0x2000, scoped, tag = 'input window, operand 1, single buffered']
    #allocation9 [shape = 's32[1]{0}', space=sflag, size = 0x4, scoped, tag = 'scoped memory for tpu_custom_call.1']
    #allocation10 [shape = 'u8[8192]{0}', space=vmem, size = 0x2000, scoped, tag = 'input window, operand 2, single buffered']
    #allocation11 [shape = 'u8[8192]{0}', space=vmem, size = 0x2000, scoped, tag = 'input window, operand 3, single buffered']
    #allocation12 [shape = 's32[1]{0}', space=sflag, size = 0x4, scoped, tag = 'scoped memory for tpu_custom_call.1']
    #allocation13 [shape = 'u8[8192]{0}', space=vmem, size = 0x2000, scoped, tag = 'input window, operand 4, single buffered']
    #allocation14 [shape = 'u8[8192]{0}', space=vmem, size = 0x2000, scoped, tag = 'input window, operand 5, single buffered']
    #allocation15 [shape = 's32[1]{0}', space=sflag, size = 0x4, scoped, tag = 'scoped memory for tpu_custom_call.1']
    #allocation16 [shape = 'u8[8192]{0}', space=vmem, size = 0x2000, scoped, tag = 'input window, operand 6, single buffered']
    #allocation17 [shape = 'u8[32768]{0}', space=vmem, size = 0x8000, scoped, tag = 'output window, operand 0']
    %12 = vsyncpa [#allocation6], 0
    %s13 = scalar_lea.sflag [#allocation6], 1
    %14 = vsyncpa %s13, 0
    %15 = vsyncpa [#allocation9], 0
    %16 = vsyncpa [#allocation12], 0
    %17 = vsyncpa [#allocation15], 0
    %18 = vsyncpa [#allocation7], 0
    %s19 = scalar_lea.sflag [#allocation7], 1
    %20 = vsyncpa %s19, 0
    loop: start=0, step=1, limit=4
    $region2: #{tpu_custom_call.1} parent=1 // loop_pre_header
      _
    $region3: #{tpu_custom_call.1} parent=1 // loop_header
      %s22 = sphi 0, %s26
      %p23 = scmp.ge.s32.totalorder %s22, 4
      %s32 = sphi 0, %s34
      %s35 = sphi 0, %s32
      %s36 = sphi 0, %s35
      %s52 = sphi 0, %s36
      %s56 = sphi 0, %s56
      %s58 = sphi 0, %s56
      %s59 = sphi 0, %s58
      %s73 = sphi 0, %s59
      %s77 = sphi 0, %s77
      %s79 = sphi 0, %s77
      %s80 = sphi 0, %s79
      %s94 = sphi 0, %s80
      %s98 = sphi 0, %s98
      %s100 = sphi 0, %s98
      %s101 = sphi 0, %s100
      %s115 = sphi 0, %s101
      %s119 = sphi 0, %s119
      %s121 = sphi 0, %s119
      %s122 = sphi 0, %s121
      %s136 = sphi 0, %s122
      %s140 = sphi 0, %s140
      %s142 = sphi 0, %s140
      %s143 = sphi 0, %s142
      %s157 = sphi 0, %s143
      %s161 = sphi 0, %s161
      %s163 = sphi 0, %s161
      %s164 = sphi 0, %s163
      %s178 = sphi 0, %s164
      %s184 = sphi 0, %s186
      %s187 = sphi 0, %s184
      %s188 = sphi 0, %s187
      %s204 = sphi 0, %s188
    $region4: #{tpu_custom_call.1} parent=1 // loop_header_branch
      %25 = sbr.rel (%p23) target = $region8
    $region5: #{tpu_custom_call.1} parent=1 // loop_body
      %s27 = ssub.s32 %s22, 1
      %s28 = ssub.s32 %s22, 2
      %s29 = sadd.s32 %s22, 1
      %s30 = ssub.s32 %s22, %s29
      %p31 = scmp.eq.s32.totalorder %s30, 0
      %s33 = sadd.s32 %s32, 1
      %s34 = scalar_select %p31, %s32, %s33
      %p37 = pneg %p31
      %p38 = scmp.eq.s32.totalorder %s22, 1
      %p39 = por %p37, %p38
      %p40 = scmp.ne.s32.totalorder %s32, %s35
      %p41 = scmp.eq.s32.totalorder %s22, 0
      %p42 = por %p40, %p41
      %p43 = scmp.ne.s32.totalorder %s32, %s35
      %p44 = scmp.eq.s32.totalorder %s27, 1
      %p45 = por %p43, %p44
      %p46 = scmp.ne.s32.totalorder %s35, %s36
      %p47 = scmp.eq.s32.totalorder %s27, 0
      %p48 = por %p46, %p47
      %p49 = scmp.ne.s32.totalorder %s35, %s36
      %p50 = scmp.eq.s32.totalorder %s28, 1
      %p51 = por %p49, %p50
      %p53 = scmp.ne.s32.totalorder %s36, %s52
      %p54 = scmp.eq.s32.totalorder %s28, 0
      %p55 = por %p53, %p54
      %s57 = sadd.s32 %s56, 1
      %p60 = scmp.eq.s32.totalorder %s22, 1
      %p61 = scmp.ne.s32.totalorder %s56, %s58
      %p62 = scmp.eq.s32.totalorder %s22, 0
      %p63 = por %p61, %p62
      %p64 = scmp.ne.s32.totalorder %s56, %s58
      %p65 = scmp.eq.s32.totalorder %s27, 1
      %p66 = por %p64, %p65
      %p67 = scmp.ne.s32.totalorder %s58, %s59
      %p68 = scmp.eq.s32.totalorder %s27, 0
      %p69 = por %p67, %p68
      %p70 = scmp.ne.s32.totalorder %s58, %s59
      %p71 = scmp.eq.s32.totalorder %s28, 1
      %p72 = por %p70, %p71
      %p74 = scmp.ne.s32.totalorder %s59, %s73
      %p75 = scmp.eq.s32.totalorder %s28, 0
      %p76 = por %p74, %p75
      %s78 = sadd.s32 %s77, 1
      %p81 = scmp.eq.s32.totalorder %s22, 1
      %p82 = scmp.ne.s32.totalorder %s77, %s79
      %p83 = scmp.eq.s32.totalorder %s22, 0
      %p84 = por %p82, %p83
      %p85 = scmp.ne.s32.totalorder %s77, %s79
      %p86 = scmp.eq.s32.totalorder %s27, 1
      %p87 = por %p85, %p86
      %p88 = scmp.ne.s32.totalorder %s79, %s80
      %p89 = scmp.eq.s32.totalorder %s27, 0
      %p90 = por %p88, %p89
      %p91 = scmp.ne.s32.totalorder %s79, %s80
      %p92 = scmp.eq.s32.totalorder %s28, 1
      %p93 = por %p91, %p92
      %p95 = scmp.ne.s32.totalorder %s80, %s94
      %p96 = scmp.eq.s32.totalorder %s28, 0
      %p97 = por %p95, %p96
      %s99 = sadd.s32 %s98, 1
      %p102 = scmp.eq.s32.totalorder %s22, 1
      %p103 = scmp.ne.s32.totalorder %s98, %s100
      %p104 = scmp.eq.s32.totalorder %s22, 0
      %p105 = por %p103, %p104
      %p106 = scmp.ne.s32.totalorder %s98, %s100
      %p107 = scmp.eq.s32.totalorder %s27, 1
      %p108 = por %p106, %p107
      %p109 = scmp.ne.s32.totalorder %s100, %s101
      %p110 = scmp.eq.s32.totalorder %s27, 0
      %p111 = por %p109, %p110
      %p112 = scmp.ne.s32.totalorder %s100, %s101
      %p113 = scmp.eq.s32.totalorder %s28, 1
      %p114 = por %p112, %p113
      %p116 = scmp.ne.s32.totalorder %s101, %s115
      %p117 = scmp.eq.s32.totalorder %s28, 0
      %p118 = por %p116, %p117
      %s120 = sadd.s32 %s119, 1
      %p123 = scmp.eq.s32.totalorder %s22, 1
      %p124 = scmp.ne.s32.totalorder %s119, %s121
      %p125 = scmp.eq.s32.totalorder %s22, 0
      %p126 = por %p124, %p125
      %p127 = scmp.ne.s32.totalorder %s119, %s121
      %p128 = scmp.eq.s32.totalorder %s27, 1
      %p129 = por %p127, %p128
      %p130 = scmp.ne.s32.totalorder %s121, %s122
      %p131 = scmp.eq.s32.totalorder %s27, 0
      %p132 = por %p130, %p131
      %p133 = scmp.ne.s32.totalorder %s121, %s122
      %p134 = scmp.eq.s32.totalorder %s28, 1
      %p135 = por %p133, %p134
      %p137 = scmp.ne.s32.totalorder %s122, %s136
      %p138 = scmp.eq.s32.totalorder %s28, 0
      %p139 = por %p137, %p138
      %s141 = sadd.s32 %s140, 1
      %p144 = scmp.eq.s32.totalorder %s22, 1
      %p145 = scmp.ne.s32.totalorder %s140, %s142
      %p146 = scmp.eq.s32.totalorder %s22, 0
      %p147 = por %p145, %p146
      %p148 = scmp.ne.s32.totalorder %s140, %s142
      %p149 = scmp.eq.s32.totalorder %s27, 1
      %p150 = por %p148, %p149
      %p151 = scmp.ne.s32.totalorder %s142, %s143
      %p152 = scmp.eq.s32.totalorder %s27, 0
      %p153 = por %p151, %p152
      %p154 = scmp.ne.s32.totalorder %s142, %s143
      %p155 = scmp.eq.s32.totalorder %s28, 1
      %p156 = por %p154, %p155
      %p158 = scmp.ne.s32.totalorder %s143, %s157
      %p159 = scmp.eq.s32.totalorder %s28, 0
      %p160 = por %p158, %p159
      %s162 = sadd.s32 %s161, 1
      %p165 = scmp.eq.s32.totalorder %s22, 1
      %p166 = scmp.ne.s32.totalorder %s161, %s163
      %p167 = scmp.eq.s32.totalorder %s22, 0
      %p168 = por %p166, %p167
      %p169 = scmp.ne.s32.totalorder %s161, %s163
      %p170 = scmp.eq.s32.totalorder %s27, 1
      %p171 = por %p169, %p170
      %p172 = scmp.ne.s32.totalorder %s163, %s164
      %p173 = scmp.eq.s32.totalorder %s27, 0
      %p174 = por %p172, %p173
      %p175 = scmp.ne.s32.totalorder %s163, %s164
      %p176 = scmp.eq.s32.totalorder %s28, 1
      %p177 = por %p175, %p176
      %p179 = scmp.ne.s32.totalorder %s164, %s178
      %p180 = scmp.eq.s32.totalorder %s28, 0
      %p181 = por %p179, %p180
      %s182 = ssub.s32 %s22, %s29
      %p183 = scmp.eq.s32.totalorder %s182, 0
      %s185 = sadd.s32 %s184, 1
      %s186 = scalar_select %p183, %s184, %s185
      %p189 = pneg %p183
      %p190 = scmp.eq.s32.totalorder %s22, 1
      %p191 = por %p189, %p190
      %p192 = scmp.ne.s32.totalorder %s184, %s187
      %p193 = scmp.eq.s32.totalorder %s22, 0
      %p194 = por %p192, %p193
      %p195 = scmp.ne.s32.totalorder %s184, %s187
      %p196 = scmp.eq.s32.totalorder %s27, 1
      %p197 = por %p195, %p196
      %p198 = scmp.ne.s32.totalorder %s187, %s188
      %p199 = scmp.eq.s32.totalorder %s27, 0
      %p200 = por %p198, %p199
      %p201 = scmp.ne.s32.totalorder %s187, %s188
      %p202 = scmp.eq.s32.totalorder %s28, 1
      %p203 = por %p201, %p202
      %p205 = scmp.ne.s32.totalorder %s188, %s204
      %p206 = scmp.eq.s32.totalorder %s28, 0
      %p207 = por %p205, %p206
      %p208 = scmp.le.s32.totalorder 1, %s22
      %p209 = scmp.lt.s32.totalorder %s22, 3
      %p210 = pnand %p208, %p209
      %p211 = pneg %p210
      // Predicated region
      $region9: #{tpu_custom_call.1} parent=5 // pred_check
        _
      $region10: #{tpu_custom_call.1} parent=5 // pred_check_branch
        %213 = sbr.rel (%p210) target = $region12
      $region11: #{tpu_custom_call.1} parent=5 // pred_region
        %s214 = ssub.s32 %s22, 1
        // Predicated region
        $region13: #{tpu_custom_call.1} parent=11 // pred_check
          %p215 = pneg %p69
        $region14: #{tpu_custom_call.1} parent=11 // pred_check_branch
          %217 = sbr.rel (%p215) target = $region16
        $region15: #{tpu_custom_call.1} parent=11 // pred_region
          %219 = vsyncadd [#allocation9], 0
          %s220 = sshll.u32 %s1, 4
          %s221 = int_to_ptr.hbm [resolvable:$true] %s220
          %s222 = sshll.u32 [#allocation8], 4
          %s223 = int_to_ptr.vmem [resolvable:$true] %s222
          %228 = dma.hbm_to_vmem [thread:$0]  %s221, 256, %s223, [#allocation9], 128, 128, 8
        $region16: #{tpu_custom_call.1} parent=11 // pred_fallthru
          _
        // Predicated region
        $region17: #{tpu_custom_call.1} parent=11 // pred_check
          %p229 = pneg %p90
        $region18: #{tpu_custom_call.1} parent=11 // pred_check_branch
          %231 = sbr.rel (%p229) target = $region20
        $region19: #{tpu_custom_call.1} parent=11 // pred_region
          %233 = vsyncadd [#allocation9], 0
          %s234 = sshll.u32 %s2, 4
          %s235 = int_to_ptr.hbm [resolvable:$true] %s234
          %s236 = sshll.u32 [#allocation10], 4
          %s237 = int_to_ptr.vmem [resolvable:$true] %s236
          %242 = dma.hbm_to_vmem [thread:$0]  %s235, 256, %s237, [#allocation9], 128, 128, 8
        $region20: #{tpu_custom_call.1} parent=11 // pred_fallthru
          _
        // Predicated region
        $region21: #{tpu_custom_call.1} parent=11 // pred_check
          %p243 = pneg %p111
        $region22: #{tpu_custom_call.1} parent=11 // pred_check_branch
          %245 = sbr.rel (%p243) target = $region24
        $region23: #{tpu_custom_call.1} parent=11 // pred_region
          %247 = vsyncadd [#allocation12], 0
          %s248 = sshll.u32 %s3, 4
          %s249 = int_to_ptr.hbm [resolvable:$true] %s248
          %s250 = sshll.u32 [#allocation11], 4
          %s251 = int_to_ptr.vmem [resolvable:$true] %s250
          %256 = dma.hbm_to_vmem [thread:$0]  %s249, 256, %s251, [#allocation12], 128, 128, 8
        $region24: #{tpu_custom_call.1} parent=11 // pred_fallthru
          _
        // Predicated region
        $region25: #{tpu_custom_call.1} parent=11 // pred_check
          %p257 = pneg %p132
        $region26: #{tpu_custom_call.1} parent=11 // pred_check_branch
          %259 = sbr.rel (%p257) target = $region28
        $region27: #{tpu_custom_call.1} parent=11 // pred_region
          %261 = vsyncadd [#allocation12], 0
          %s262 = sshll.u32 %s4, 4
          %s263 = int_to_ptr.hbm [resolvable:$true] %s262
          %s264 = sshll.u32 [#allocation13], 4
          %s265 = int_to_ptr.vmem [resolvable:$true] %s264
          %270 = dma.hbm_to_vmem [thread:$0]  %s263, 256, %s265, [#allocation12], 128, 128, 8
        $region28: #{tpu_custom_call.1} parent=11 // pred_fallthru
          _
        // Predicated region
        $region29: #{tpu_custom_call.1} parent=11 // pred_check
          %p271 = pneg %p153
        $region30: #{tpu_custom_call.1} parent=11 // pred_check_branch
          %273 = sbr.rel (%p271) target = $region32
        $region31: #{tpu_custom_call.1} parent=11 // pred_region
          %275 = vsyncadd [#allocation15], 0
          %s276 = sshll.u32 %s5, 4
          %s277 = int_to_ptr.hbm [resolvable:$true] %s276
          %s278 = sshll.u32 [#allocation14], 4
          %s279 = int_to_ptr.vmem [resolvable:$true] %s278
          %284 = dma.hbm_to_vmem [thread:$0]  %s277, 256, %s279, [#allocation15], 128, 128, 8
        $region32: #{tpu_custom_call.1} parent=11 // pred_fallthru
          _
        // Predicated region
        $region33: #{tpu_custom_call.1} parent=11 // pred_check
          %p285 = pneg %p174
        $region34: #{tpu_custom_call.1} parent=11 // pred_check_branch
          %287 = sbr.rel (%p285) target = $region36
        $region35: #{tpu_custom_call.1} parent=11 // pred_region
          %289 = vsyncadd [#allocation15], 0
          %s290 = sshll.u32 %s6, 4
          %s291 = int_to_ptr.hbm [resolvable:$true] %s290
          %s292 = sshll.u32 [#allocation16], 4
          %s293 = int_to_ptr.vmem [resolvable:$true] %s292
          %298 = dma.hbm_to_vmem [thread:$0]  %s291, 256, %s293, [#allocation15], 128, 128, 8
        $region36: #{tpu_custom_call.1} parent=11 // pred_fallthru
          _
      $region12: #{tpu_custom_call.1} parent=5 // pred_fallthru
        _
      %p299 = scmp.lt.s32.totalorder %s22, 2
      // Predicated region
      $region37: #{tpu_custom_call.1} parent=5 // pred_check
        %p300 = pneg %p299
      $region38: #{tpu_custom_call.1} parent=5 // pred_check_branch
        %302 = sbr.rel (%p300) target = $region40
      $region39: #{tpu_custom_call.1} parent=5 // pred_region
        // Predicated region
        $region41: #{tpu_custom_call.1} parent=39 // pred_check
          %p303 = pneg %p42
        $region42: #{tpu_custom_call.1} parent=39 // pred_check_branch
          %305 = sbr.rel (%p303) target = $region44
        $region43: #{tpu_custom_call.1} parent=39 // pred_region
          %s306 = sand.u32 %s32, 1
          %s307 = scalar_lea.sflag [#allocation6], %s306
          %s308 = sand.u32 %s32, 1
          %s309 = smul.addr %s308, 32
          %s310 = scalar_lea.vmem [#allocation5], %s309
          %312 = vsyncadd %s307, 0
          %s313 = smul.addr %s22, 4
          %s314 = smul.addr %s313, 8
          %s315 = scalar_lea.hbm %s0, %s314
          %s316 = sshll.u32 %s315, 4
          %s317 = int_to_ptr.hbm [resolvable:$true] %s316
          %s318 = sshll.u32 %s310, 4
          %s319 = int_to_ptr.vmem [resolvable:$true] %s318
          %324 = dma.hbm_to_vmem [thread:$0]  %s317, 512, %s319, %s307, 128, 128, 8
        $region44: #{tpu_custom_call.1} parent=39 // pred_fallthru
          _
      $region40: #{tpu_custom_call.1} parent=5 // pred_fallthru
        _
      %p325 = scmp.le.s32.totalorder 1, %s22
      %p326 = scmp.lt.s32.totalorder %s22, 3
      %p327 = pnand %p325, %p326
      %p328 = pneg %p327
      // Predicated region
      $region45: #{tpu_custom_call.1} parent=5 // pred_check
        _
      $region46: #{tpu_custom_call.1} parent=5 // pred_check_branch
        %330 = sbr.rel (%p327) target = $region48
      $region47: #{tpu_custom_call.1} parent=5 // pred_region
        %s331 = ssub.s32 %s22, 1
        %s332 = sand.u32 %s35, 1
        %s333 = scalar_lea.sflag [#allocation6], %s332
        %s334 = sand.u32 %s35, 1
        %s335 = smul.addr %s334, 32
        %s336 = scalar_lea.vmem [#allocation5], %s335
        // Predicated region
        $region49: #{tpu_custom_call.1} parent=47 // pred_check
          %p337 = pneg %p48
        $region50: #{tpu_custom_call.1} parent=47 // pred_check_branch
          %339 = sbr.rel (%p337) target = $region52
        $region51: #{tpu_custom_call.1} parent=47 // pred_region
          %341 = dma.done %s333, 512
        $region52: #{tpu_custom_call.1} parent=47 // pred_fallthru
          _
        // Predicated region
        $region53: #{tpu_custom_call.1} parent=47 // pred_check
          %p342 = pneg %p69
        $region54: #{tpu_custom_call.1} parent=47 // pred_check_branch
          %344 = sbr.rel (%p342) target = $region56
        $region55: #{tpu_custom_call.1} parent=47 // pred_region
          %346 = dma.done [#allocation9], 256
        $region56: #{tpu_custom_call.1} parent=47 // pred_fallthru
          _
        // Predicated region
        $region57: #{tpu_custom_call.1} parent=47 // pred_check
          %p347 = pneg %p90
        $region58: #{tpu_custom_call.1} parent=47 // pred_check_branch
          %349 = sbr.rel (%p347) target = $region60
        $region59: #{tpu_custom_call.1} parent=47 // pred_region
          %351 = dma.done [#allocation9], 256
        $region60: #{tpu_custom_call.1} parent=47 // pred_fallthru
          _
        // Predicated region
        $region61: #{tpu_custom_call.1} parent=47 // pred_check
          %p352 = pneg %p111
        $region62: #{tpu_custom_call.1} parent=47 // pred_check_branch
          %354 = sbr.rel (%p352) target = $region64
        $region63: #{tpu_custom_call.1} parent=47 // pred_region
          %356 = dma.done [#allocation12], 256
        $region64: #{tpu_custom_call.1} parent=47 // pred_fallthru
          _
        // Predicated region
        $region65: #{tpu_custom_call.1} parent=47 // pred_check
          %p357 = pneg %p132
        $region66: #{tpu_custom_call.1} parent=47 // pred_check_branch
          %359 = sbr.rel (%p357) target = $region68
        $region67: #{tpu_custom_call.1} parent=47 // pred_region
          %361 = dma.done [#allocation12], 256
        $region68: #{tpu_custom_call.1} parent=47 // pred_fallthru
          _
        // Predicated region
        $region69: #{tpu_custom_call.1} parent=47 // pred_check
          %p362 = pneg %p153
        $region70: #{tpu_custom_call.1} parent=47 // pred_check_branch
          %364 = sbr.rel (%p362) target = $region72
        $region71: #{tpu_custom_call.1} parent=47 // pred_region
          %366 = dma.done [#allocation15], 256
        $region72: #{tpu_custom_call.1} parent=47 // pred_fallthru
          _
        // Predicated region
        $region73: #{tpu_custom_call.1} parent=47 // pred_check
          %p367 = pneg %p174
        $region74: #{tpu_custom_call.1} parent=47 // pred_check_branch
          %369 = sbr.rel (%p367) target = $region76
        $region75: #{tpu_custom_call.1} parent=47 // pred_region
          %371 = dma.done [#allocation15], 256
        $region76: #{tpu_custom_call.1} parent=47 // pred_fallthru
          _
        %s372 = sand.u32 %s35, 1
        %s373 = scalar_lea.sflag [#allocation6], %s372
        %s374 = sand.u32 %s35, 1
        %s375 = smul.addr %s374, 32
        %s376 = scalar_lea.vmem [#allocation5], %s375
        %p377 = pneg %p48
        %p378 = pneg %p45
        %p379 = pneg %p69
        %p380 = pneg %p66
        %p381 = pneg %p90
        %p382 = pneg %p87
        %p383 = pneg %p111
        %p384 = pneg %p108
        %p385 = pneg %p132
        %p386 = pneg %p129
        %p387 = pneg %p153
        %p388 = pneg %p150
        %p389 = pneg %p174
        %p390 = pneg %p171
        %p391 = pneg %p200
        %p392 = pneg %p197
        %s393 = sand.u32 %s187, 1
        %s394 = scalar_lea.sflag [#allocation7], %s393
        %s395 = sand.u32 %s187, 1
        %s396 = smul.addr %s395, 32
        %s397 = scalar_lea.vmem [#allocation17], %s396
        %v398 = vld [vmem:[%s336] sm:$0xff]
        %v399 = vld [vmem:[%s336 + $0x8] sm:$0xff]
        %v400 = vld [vmem:[%s336 + $0x10] sm:$0xff]
        %v401 = vld [vmem:[%s336 + $0x18] sm:$0xff]
        %v402 = vld [vmem:[#allocation13] sm:$0xff]
        %v403 = vld [vmem:[#allocation13 + $0x8] sm:$0xff]
        %vm404 = vcmask 130048
        %v406 = vsel %vm404, %v398, 0
        %v409 = vsel %vm404, %v399, 0
        %411 = vmatpush.msra.mxu0 0.0
        %412 = vmatpush.msra.mxu0 0.0
        %413 = vmatpush.msra.mxu0 0.0
        %414 = vmatpush.msra.mxu0 0.0
        %415 = vmatpush.msra.mxu0 0.0
        %416 = vmatpush.msra.mxu0 0.0
        %417 = vmatpush.msra.mxu0 0.0
        %418 = vmatpush.msra.mxu0 0.0
        %419 = vmatpush.msra.mxu0 0.0
        %420 = vmatpush.msra.mxu0 0.0
        %421 = vmatpush.msra.mxu0 0.0
        %422 = vmatpush.msra.mxu0 0.0
        %423 = vmatpush.msra.mxu0 0.0
        %424 = vmatpush.msra.mxu0 0.0
        %v425 = vand.u32 %v403, 4294901760
        %426 = vmatpush.msra.mxu0 %v425
        %v427 = vand.u32 %v402, 4294901760
        %428 = vmatpush.msra.mxu0 %v427
        %v429 = vand.u32 %v406, 4294901760
        %v430 = vsub.f32 %v406, %v429
        %v431 = vand.u32 %v430, 4294901760
        %v432 = vsub.f32 %v430, %v431
        %v433 = vand.u32 %v432, 4294901760
        %434 = vmatmul.f32.gmra.mxu0 %v433
        %v435 = vpop.f32.mrf.mxu0
        %v436 = vadd.f32 0.0, %v435
        %v437 = vand.u32 %v409, 4294901760
        %v438 = vsub.f32 %v409, %v437
        %v439 = vand.u32 %v438, 4294901760
        %v440 = vsub.f32 %v438, %v439
        %v441 = vand.u32 %v440, 4294901760
        %442 = vmatmul.f32.gmra.mxu0 %v441
        %v443 = vpop.f32.mrf.mxu0
        %v444 = vadd.f32 0.0, %v443
        %445 = vdwg.mxu0
        %446 = vmatpush.msra.mxu0 0.0
        %447 = vmatpush.msra.mxu0 0.0
        %448 = vmatpush.msra.mxu0 0.0
        %449 = vmatpush.msra.mxu0 0.0
        %450 = vmatpush.msra.mxu0 0.0
        %451 = vmatpush.msra.mxu0 0.0
        %452 = vmatpush.msra.mxu0 0.0
        %453 = vmatpush.msra.mxu0 0.0
        %454 = vmatpush.msra.mxu0 0.0
        %455 = vmatpush.msra.mxu0 0.0
        %456 = vmatpush.msra.mxu0 0.0
        %457 = vmatpush.msra.mxu0 0.0
        %458 = vmatpush.msra.mxu0 0.0
        %459 = vmatpush.msra.mxu0 0.0
        %v460 = vand.u32 %v403, 4294901760
        %v461 = vsub.f32 %v403, %v460
        %v462 = vand.u32 %v461, 4294901760
        %v463 = vsub.f32 %v461, %v462
        %v464 = vand.u32 %v463, 4294901760
        %465 = vmatpush.msra.mxu0 %v464
        %v466 = vand.u32 %v402, 4294901760
        %v467 = vsub.f32 %v402, %v466
        %v468 = vand.u32 %v467, 4294901760
        %v469 = vsub.f32 %v467, %v468
        %v470 = vand.u32 %v469, 4294901760
        %471 = vmatpush.msra.mxu0 %v470
        %v472 = vand.u32 %v406, 4294901760
        %473 = vmatmul.f32.gmra.mxu0 %v472
        %v474 = vpop.f32.mrf.mxu0
        %v475 = vadd.f32 %v436, %v474
        %v476 = vand.u32 %v409, 4294901760
        %477 = vmatmul.f32.gmra.mxu0 %v476
        %v478 = vpop.f32.mrf.mxu0
        %v479 = vadd.f32 %v444, %v478
        %480 = vdwg.mxu0
        %481 = vmatpush.msra.mxu0 0.0
        %482 = vmatpush.msra.mxu0 0.0
        %483 = vmatpush.msra.mxu0 0.0
        %484 = vmatpush.msra.mxu0 0.0
        %485 = vmatpush.msra.mxu0 0.0
        %486 = vmatpush.msra.mxu0 0.0
        %487 = vmatpush.msra.mxu0 0.0
        %488 = vmatpush.msra.mxu0 0.0
        %489 = vmatpush.msra.mxu0 0.0
        %490 = vmatpush.msra.mxu0 0.0
        %491 = vmatpush.msra.mxu0 0.0
        %492 = vmatpush.msra.mxu0 0.0
        %493 = vmatpush.msra.mxu0 0.0
        %494 = vmatpush.msra.mxu0 0.0
        %v495 = vand.u32 %v403, 4294901760
        %v496 = vsub.f32 %v403, %v495
        %497 = vmatpush.msra.mxu0 %v496
        %v498 = vand.u32 %v402, 4294901760
        %v499 = vsub.f32 %v402, %v498
        %500 = vmatpush.msra.mxu0 %v499
        %v501 = vand.u32 %v406, 4294901760
        %v502 = vsub.f32 %v406, %v501
        %503 = vmatmul.f32.gmra.mxu0 %v502
        %v504 = vpop.f32.mrf.mxu0
        %v505 = vadd.f32 %v475, %v504
        %v506 = vand.u32 %v409, 4294901760
        %v507 = vsub.f32 %v409, %v506
        %508 = vmatmul.f32.gmra.mxu0 %v507
        %v509 = vpop.f32.mrf.mxu0
        %v510 = vadd.f32 %v479, %v509
        %511 = vdwg.mxu0
        %512 = vmatpush.msra.mxu0 0.0
        %513 = vmatpush.msra.mxu0 0.0
        %514 = vmatpush.msra.mxu0 0.0
        %515 = vmatpush.msra.mxu0 0.0
        %516 = vmatpush.msra.mxu0 0.0
        %517 = vmatpush.msra.mxu0 0.0
        %518 = vmatpush.msra.mxu0 0.0
        %519 = vmatpush.msra.mxu0 0.0
        %520 = vmatpush.msra.mxu0 0.0
        %521 = vmatpush.msra.mxu0 0.0
        %522 = vmatpush.msra.mxu0 0.0
        %523 = vmatpush.msra.mxu0 0.0
        %524 = vmatpush.msra.mxu0 0.0
        %525 = vmatpush.msra.mxu0 0.0
        %v526 = vand.u32 %v403, 4294901760
        %527 = vmatpush.msra.mxu0 %v526
        %v528 = vand.u32 %v402, 4294901760
        %529 = vmatpush.msra.mxu0 %v528
        %v530 = vand.u32 %v406, 4294901760
        %v531 = vsub.f32 %v406, %v530
        %v532 = vand.u32 %v531, 4294901760
        %533 = vmatmul.f32.gmra.mxu0 %v532
        %v534 = vpop.f32.mrf.mxu0
        %v535 = vadd.f32 %v505, %v534
        %v536 = vand.u32 %v409, 4294901760
        %v537 = vsub.f32 %v409, %v536
        %v538 = vand.u32 %v537, 4294901760
        %539 = vmatmul.f32.gmra.mxu0 %v538
        %v540 = vpop.f32.mrf.mxu0
        %v541 = vadd.f32 %v510, %v540
        %542 = vdwg.mxu0
        %543 = vmatpush.msra.mxu0 0.0
        %544 = vmatpush.msra.mxu0 0.0
        %545 = vmatpush.msra.mxu0 0.0
        %546 = vmatpush.msra.mxu0 0.0
        %547 = vmatpush.msra.mxu0 0.0
        %548 = vmatpush.msra.mxu0 0.0
        %549 = vmatpush.msra.mxu0 0.0
        %550 = vmatpush.msra.mxu0 0.0
        %551 = vmatpush.msra.mxu0 0.0
        %552 = vmatpush.msra.mxu0 0.0
        %553 = vmatpush.msra.mxu0 0.0
        %554 = vmatpush.msra.mxu0 0.0
        %555 = vmatpush.msra.mxu0 0.0
        %556 = vmatpush.msra.mxu0 0.0
        %v557 = vand.u32 %v403, 4294901760
        %v558 = vsub.f32 %v403, %v557
        %v559 = vand.u32 %v558, 4294901760
        %560 = vmatpush.msra.mxu0 %v559
        %v561 = vand.u32 %v402, 4294901760
        %v562 = vsub.f32 %v402, %v561
        %v563 = vand.u32 %v562, 4294901760
        %564 = vmatpush.msra.mxu0 %v563
        %v565 = vand.u32 %v406, 4294901760
        %566 = vmatmul.f32.gmra.mxu0 %v565
        %v567 = vpop.f32.mrf.mxu0
        %v568 = vadd.f32 %v535, %v567
        %v569 = vand.u32 %v409, 4294901760
        %570 = vmatmul.f32.gmra.mxu0 %v569
        %v571 = vpop.f32.mrf.mxu0
        %v572 = vadd.f32 %v541, %v571
        %573 = vdwg.mxu0
        %574 = vmatpush.msra.mxu0 0.0
        %575 = vmatpush.msra.mxu0 0.0
        %576 = vmatpush.msra.mxu0 0.0
        %577 = vmatpush.msra.mxu0 0.0
        %578 = vmatpush.msra.mxu0 0.0
        %579 = vmatpush.msra.mxu0 0.0
        %580 = vmatpush.msra.mxu0 0.0
        %581 = vmatpush.msra.mxu0 0.0
        %582 = vmatpush.msra.mxu0 0.0
        %583 = vmatpush.msra.mxu0 0.0
        %584 = vmatpush.msra.mxu0 0.0
        %585 = vmatpush.msra.mxu0 0.0
        %586 = vmatpush.msra.mxu0 0.0
        %587 = vmatpush.msra.mxu0 0.0
        %v588 = vand.u32 %v403, 4294901760
        %589 = vmatpush.msra.mxu0 %v588
        %v590 = vand.u32 %v402, 4294901760
        %591 = vmatpush.msra.mxu0 %v590
        %v592 = vand.u32 %v406, 4294901760
        %593 = vmatmul.f32.gmra.mxu0 %v592
        %v594 = vpop.f32.mrf.mxu0
        %v595 = vadd.f32 %v568, %v594
        %v596 = vand.u32 %v409, 4294901760
        %597 = vmatmul.f32.gmra.mxu0 %v596
        %v598 = vpop.f32.mrf.mxu0
        %v599 = vadd.f32 %v572, %v598
        %600 = vdwg.mxu0
        %v601 = vld [vmem:[#allocation14] sm:$0xff]
        %v602 = vld [vmem:[#allocation14 + $0x8] sm:$0xff]
        %v604 = vsel %vm404, %v400, 0
        %v607 = vsel %vm404, %v401, 0
        %609 = vmatpush.msra.mxu0 0.0
        %610 = vmatpush.msra.mxu0 0.0
        %611 = vmatpush.msra.mxu0 0.0
        %612 = vmatpush.msra.mxu0 0.0
        %613 = vmatpush.msra.mxu0 0.0
        %614 = vmatpush.msra.mxu0 0.0
        %615 = vmatpush.msra.mxu0 0.0
        %616 = vmatpush.msra.mxu0 0.0
        %617 = vmatpush.msra.mxu0 0.0
        %618 = vmatpush.msra.mxu0 0.0
        %619 = vmatpush.msra.mxu0 0.0
        %620 = vmatpush.msra.mxu0 0.0
        %621 = vmatpush.msra.mxu0 0.0
        %622 = vmatpush.msra.mxu0 0.0
        %v623 = vand.u32 %v602, 4294901760
        %624 = vmatpush.msra.mxu0 %v623
        %v625 = vand.u32 %v601, 4294901760
        %626 = vmatpush.msra.mxu0 %v625
        %v627 = vand.u32 %v604, 4294901760
        %v628 = vsub.f32 %v604, %v627
        %v629 = vand.u32 %v628, 4294901760
        %v630 = vsub.f32 %v628, %v629
        %v631 = vand.u32 %v630, 4294901760
        %632 = vmatmul.f32.gmra.mxu0 %v631
        %v633 = vpop.f32.mrf.mxu0
        %v634 = vadd.f32 0.0, %v633
        %v635 = vand.u32 %v607, 4294901760
        %v636 = vsub.f32 %v607, %v635
        %v637 = vand.u32 %v636, 4294901760
        %v638 = vsub.f32 %v636, %v637
        %v639 = vand.u32 %v638, 4294901760
        %640 = vmatmul.f32.gmra.mxu0 %v639
        %v641 = vpop.f32.mrf.mxu0
        %v642 = vadd.f32 0.0, %v641
        %643 = vdwg.mxu0
        %644 = vmatpush.msra.mxu0 0.0
        %645 = vmatpush.msra.mxu0 0.0
        %646 = vmatpush.msra.mxu0 0.0
        %647 = vmatpush.msra.mxu0 0.0
        %648 = vmatpush.msra.mxu0 0.0
        %649 = vmatpush.msra.mxu0 0.0
        %650 = vmatpush.msra.mxu0 0.0
        %651 = vmatpush.msra.mxu0 0.0
        %652 = vmatpush.msra.mxu0 0.0
        %653 = vmatpush.msra.mxu0 0.0
        %654 = vmatpush.msra.mxu0 0.0
        %655 = vmatpush.msra.mxu0 0.0
        %656 = vmatpush.msra.mxu0 0.0
        %657 = vmatpush.msra.mxu0 0.0
        %v658 = vand.u32 %v602, 4294901760
        %v659 = vsub.f32 %v602, %v658
        %v660 = vand.u32 %v659, 4294901760
        %v661 = vsub.f32 %v659, %v660
        %v662 = vand.u32 %v661, 4294901760
        %663 = vmatpush.msra.mxu0 %v662
        %v664 = vand.u32 %v601, 4294901760
        %v665 = vsub.f32 %v601, %v664
        %v666 = vand.u32 %v665, 4294901760
        %v667 = vsub.f32 %v665, %v666
        %v668 = vand.u32 %v667, 4294901760
        %669 = vmatpush.msra.mxu0 %v668
        %v670 = vand.u32 %v604, 4294901760
        %671 = vmatmul.f32.gmra.mxu0 %v670
        %v672 = vpop.f32.mrf.mxu0
        %v673 = vadd.f32 %v634, %v672
        %v674 = vand.u32 %v607, 4294901760
        %675 = vmatmul.f32.gmra.mxu0 %v674
        %v676 = vpop.f32.mrf.mxu0
        %v677 = vadd.f32 %v642, %v676
        %678 = vdwg.mxu0
        %679 = vmatpush.msra.mxu0 0.0
        %680 = vmatpush.msra.mxu0 0.0
        %681 = vmatpush.msra.mxu0 0.0
        %682 = vmatpush.msra.mxu0 0.0
        %683 = vmatpush.msra.mxu0 0.0
        %684 = vmatpush.msra.mxu0 0.0
        %685 = vmatpush.msra.mxu0 0.0
        %686 = vmatpush.msra.mxu0 0.0
        %687 = vmatpush.msra.mxu0 0.0
        %688 = vmatpush.msra.mxu0 0.0
        %689 = vmatpush.msra.mxu0 0.0
        %690 = vmatpush.msra.mxu0 0.0
        %691 = vmatpush.msra.mxu0 0.0
        %692 = vmatpush.msra.mxu0 0.0
        %v693 = vand.u32 %v602, 4294901760
        %v694 = vsub.f32 %v602, %v693
        %695 = vmatpush.msra.mxu0 %v694
        %v696 = vand.u32 %v601, 4294901760
        %v697 = vsub.f32 %v601, %v696
        %698 = vmatpush.msra.mxu0 %v697
        %v699 = vand.u32 %v604, 4294901760
        %v700 = vsub.f32 %v604, %v699
        %701 = vmatmul.f32.gmra.mxu0 %v700
        %v702 = vpop.f32.mrf.mxu0
        %v703 = vadd.f32 %v673, %v702
        %v704 = vand.u32 %v607, 4294901760
        %v705 = vsub.f32 %v607, %v704
        %706 = vmatmul.f32.gmra.mxu0 %v705
        %v707 = vpop.f32.mrf.mxu0
        %v708 = vadd.f32 %v677, %v707
        %709 = vdwg.mxu0
        %710 = vmatpush.msra.mxu0 0.0
        %711 = vmatpush.msra.mxu0 0.0
        %712 = vmatpush.msra.mxu0 0.0
        %713 = vmatpush.msra.mxu0 0.0
        %714 = vmatpush.msra.mxu0 0.0
        %715 = vmatpush.msra.mxu0 0.0
        %716 = vmatpush.msra.mxu0 0.0
        %717 = vmatpush.msra.mxu0 0.0
        %718 = vmatpush.msra.mxu0 0.0
        %719 = vmatpush.msra.mxu0 0.0
        %720 = vmatpush.msra.mxu0 0.0
        %721 = vmatpush.msra.mxu0 0.0
        %722 = vmatpush.msra.mxu0 0.0
        %723 = vmatpush.msra.mxu0 0.0
        %v724 = vand.u32 %v602, 4294901760
        %725 = vmatpush.msra.mxu0 %v724
        %v726 = vand.u32 %v601, 4294901760
        %727 = vmatpush.msra.mxu0 %v726
        %v728 = vand.u32 %v604, 4294901760
        %v729 = vsub.f32 %v604, %v728
        %v730 = vand.u32 %v729, 4294901760
        %731 = vmatmul.f32.gmra.mxu0 %v730
        %v732 = vpop.f32.mrf.mxu0
        %v733 = vadd.f32 %v703, %v732
        %v734 = vand.u32 %v607, 4294901760
        %v735 = vsub.f32 %v607, %v734
        %v736 = vand.u32 %v735, 4294901760
        %737 = vmatmul.f32.gmra.mxu0 %v736
        %v738 = vpop.f32.mrf.mxu0
        %v739 = vadd.f32 %v708, %v738
        %740 = vdwg.mxu0
        %741 = vmatpush.msra.mxu0 0.0
        %742 = vmatpush.msra.mxu0 0.0
        %743 = vmatpush.msra.mxu0 0.0
        %744 = vmatpush.msra.mxu0 0.0
        %745 = vmatpush.msra.mxu0 0.0
        %746 = vmatpush.msra.mxu0 0.0
        %747 = vmatpush.msra.mxu0 0.0
        %748 = vmatpush.msra.mxu0 0.0
        %749 = vmatpush.msra.mxu0 0.0
        %750 = vmatpush.msra.mxu0 0.0
        %751 = vmatpush.msra.mxu0 0.0
        %752 = vmatpush.msra.mxu0 0.0
        %753 = vmatpush.msra.mxu0 0.0
        %754 = vmatpush.msra.mxu0 0.0
        %v755 = vand.u32 %v602, 4294901760
        %v756 = vsub.f32 %v602, %v755
        %v757 = vand.u32 %v756, 4294901760
        %758 = vmatpush.msra.mxu0 %v757
        %v759 = vand.u32 %v601, 4294901760
        %v760 = vsub.f32 %v601, %v759
        %v761 = vand.u32 %v760, 4294901760
        %762 = vmatpush.msra.mxu0 %v761
        %v763 = vand.u32 %v604, 4294901760
        %764 = vmatmul.f32.gmra.mxu0 %v763
        %v765 = vpop.f32.mrf.mxu0
        %v766 = vadd.f32 %v733, %v765
        %v767 = vand.u32 %v607, 4294901760
        %768 = vmatmul.f32.gmra.mxu0 %v767
        %v769 = vpop.f32.mrf.mxu0
        %v770 = vadd.f32 %v739, %v769
        %771 = vdwg.mxu0
        %772 = vmatpush.msra.mxu0 0.0
        %773 = vmatpush.msra.mxu0 0.0
        %774 = vmatpush.msra.mxu0 0.0
        %775 = vmatpush.msra.mxu0 0.0
        %776 = vmatpush.msra.mxu0 0.0
        %777 = vmatpush.msra.mxu0 0.0
        %778 = vmatpush.msra.mxu0 0.0
        %779 = vmatpush.msra.mxu0 0.0
        %780 = vmatpush.msra.mxu0 0.0
        %781 = vmatpush.msra.mxu0 0.0
        %782 = vmatpush.msra.mxu0 0.0
        %783 = vmatpush.msra.mxu0 0.0
        %784 = vmatpush.msra.mxu0 0.0
        %785 = vmatpush.msra.mxu0 0.0
        %v786 = vand.u32 %v602, 4294901760
        %787 = vmatpush.msra.mxu0 %v786
        %v788 = vand.u32 %v601, 4294901760
        %789 = vmatpush.msra.mxu0 %v788
        %v790 = vand.u32 %v604, 4294901760
        %791 = vmatmul.f32.gmra.mxu0 %v790
        %v792 = vpop.f32.mrf.mxu0
        %v793 = vadd.f32 %v766, %v792
        %v794 = vand.u32 %v607, 4294901760
        %795 = vmatmul.f32.gmra.mxu0 %v794
        %v796 = vpop.f32.mrf.mxu0
        %v797 = vadd.f32 %v770, %v796
        %798 = vdwg.mxu0
        %v799 = vadd.f32 %v398, %v400
        %v800 = vadd.f32 %v399, %v401
        %v801 = vld [vmem:[#allocation16] sm:$0xff]
        %v802 = vld [vmem:[#allocation16 + $0x8] sm:$0xff]
        %v804 = vsel %vm404, %v799, 0
        %v807 = vsel %vm404, %v800, 0
        %809 = vmatpush.msra.mxu0 0.0
        %810 = vmatpush.msra.mxu0 0.0
        %811 = vmatpush.msra.mxu0 0.0
        %812 = vmatpush.msra.mxu0 0.0
        %813 = vmatpush.msra.mxu0 0.0
        %814 = vmatpush.msra.mxu0 0.0
        %815 = vmatpush.msra.mxu0 0.0
        %816 = vmatpush.msra.mxu0 0.0
        %817 = vmatpush.msra.mxu0 0.0
        %818 = vmatpush.msra.mxu0 0.0
        %819 = vmatpush.msra.mxu0 0.0
        %820 = vmatpush.msra.mxu0 0.0
        %821 = vmatpush.msra.mxu0 0.0
        %822 = vmatpush.msra.mxu0 0.0
        %v823 = vand.u32 %v802, 4294901760
        %824 = vmatpush.msra.mxu0 %v823
        %v825 = vand.u32 %v801, 4294901760
        %826 = vmatpush.msra.mxu0 %v825
        %v827 = vand.u32 %v804, 4294901760
        %v828 = vsub.f32 %v804, %v827
        %v829 = vand.u32 %v828, 4294901760
        %v830 = vsub.f32 %v828, %v829
        %v831 = vand.u32 %v830, 4294901760
        %832 = vmatmul.f32.gmra.mxu0 %v831
        %v833 = vpop.f32.mrf.mxu0
        %v834 = vadd.f32 0.0, %v833
        %v835 = vand.u32 %v807, 4294901760
        %v836 = vsub.f32 %v807, %v835
        %v837 = vand.u32 %v836, 4294901760
        %v838 = vsub.f32 %v836, %v837
        %v839 = vand.u32 %v838, 4294901760
        %840 = vmatmul.f32.gmra.mxu0 %v839
        %v841 = vpop.f32.mrf.mxu0
        %v842 = vadd.f32 0.0, %v841
        %843 = vdwg.mxu0
        %844 = vmatpush.msra.mxu0 0.0
        %845 = vmatpush.msra.mxu0 0.0
        %846 = vmatpush.msra.mxu0 0.0
        %847 = vmatpush.msra.mxu0 0.0
        %848 = vmatpush.msra.mxu0 0.0
        %849 = vmatpush.msra.mxu0 0.0
        %850 = vmatpush.msra.mxu0 0.0
        %851 = vmatpush.msra.mxu0 0.0
        %852 = vmatpush.msra.mxu0 0.0
        %853 = vmatpush.msra.mxu0 0.0
        %854 = vmatpush.msra.mxu0 0.0
        %855 = vmatpush.msra.mxu0 0.0
        %856 = vmatpush.msra.mxu0 0.0
        %857 = vmatpush.msra.mxu0 0.0
        %v858 = vand.u32 %v802, 4294901760
        %v859 = vsub.f32 %v802, %v858
        %v860 = vand.u32 %v859, 4294901760
        %v861 = vsub.f32 %v859, %v860
        %v862 = vand.u32 %v861, 4294901760
        %863 = vmatpush.msra.mxu0 %v862
        %v864 = vand.u32 %v801, 4294901760
        %v865 = vsub.f32 %v801, %v864
        %v866 = vand.u32 %v865, 4294901760
        %v867 = vsub.f32 %v865, %v866
        %v868 = vand.u32 %v867, 4294901760
        %869 = vmatpush.msra.mxu0 %v868
        %v870 = vand.u32 %v804, 4294901760
        %871 = vmatmul.f32.gmra.mxu0 %v870
        %v872 = vpop.f32.mrf.mxu0
        %v873 = vadd.f32 %v834, %v872
        %v874 = vand.u32 %v807, 4294901760
        %875 = vmatmul.f32.gmra.mxu0 %v874
        %v876 = vpop.f32.mrf.mxu0
        %v877 = vadd.f32 %v842, %v876
        %878 = vdwg.mxu0
        %879 = vmatpush.msra.mxu0 0.0
        %880 = vmatpush.msra.mxu0 0.0
        %881 = vmatpush.msra.mxu0 0.0
        %882 = vmatpush.msra.mxu0 0.0
        %883 = vmatpush.msra.mxu0 0.0
        %884 = vmatpush.msra.mxu0 0.0
        %885 = vmatpush.msra.mxu0 0.0
        %886 = vmatpush.msra.mxu0 0.0
        %887 = vmatpush.msra.mxu0 0.0
        %888 = vmatpush.msra.mxu0 0.0
        %889 = vmatpush.msra.mxu0 0.0
        %890 = vmatpush.msra.mxu0 0.0
        %891 = vmatpush.msra.mxu0 0.0
        %892 = vmatpush.msra.mxu0 0.0
        %v893 = vand.u32 %v802, 4294901760
        %v894 = vsub.f32 %v802, %v893
        %895 = vmatpush.msra.mxu0 %v894
        %v896 = vand.u32 %v801, 4294901760
        %v897 = vsub.f32 %v801, %v896
        %898 = vmatpush.msra.mxu0 %v897
        %v899 = vand.u32 %v804, 4294901760
        %v900 = vsub.f32 %v804, %v899
        %901 = vmatmul.f32.gmra.mxu0 %v900
        %v902 = vpop.f32.mrf.mxu0
        %v903 = vadd.f32 %v873, %v902
        %v904 = vand.u32 %v807, 4294901760
        %v905 = vsub.f32 %v807, %v904
        %906 = vmatmul.f32.gmra.mxu0 %v905
        %v907 = vpop.f32.mrf.mxu0
        %v908 = vadd.f32 %v877, %v907
        %909 = vdwg.mxu0
        %910 = vmatpush.msra.mxu0 0.0
        %911 = vmatpush.msra.mxu0 0.0
        %912 = vmatpush.msra.mxu0 0.0
        %913 = vmatpush.msra.mxu0 0.0
        %914 = vmatpush.msra.mxu0 0.0
        %915 = vmatpush.msra.mxu0 0.0
        %916 = vmatpush.msra.mxu0 0.0
        %917 = vmatpush.msra.mxu0 0.0
        %918 = vmatpush.msra.mxu0 0.0
        %919 = vmatpush.msra.mxu0 0.0
        %920 = vmatpush.msra.mxu0 0.0
        %921 = vmatpush.msra.mxu0 0.0
        %922 = vmatpush.msra.mxu0 0.0
        %923 = vmatpush.msra.mxu0 0.0
        %v924 = vand.u32 %v802, 4294901760
        %925 = vmatpush.msra.mxu0 %v924
        %v926 = vand.u32 %v801, 4294901760
        %927 = vmatpush.msra.mxu0 %v926
        %v928 = vand.u32 %v804, 4294901760
        %v929 = vsub.f32 %v804, %v928
        %v930 = vand.u32 %v929, 4294901760
        %931 = vmatmul.f32.gmra.mxu0 %v930
        %v932 = vpop.f32.mrf.mxu0
        %v933 = vadd.f32 %v903, %v932
        %v934 = vand.u32 %v807, 4294901760
        %v935 = vsub.f32 %v807, %v934
        %v936 = vand.u32 %v935, 4294901760
        %937 = vmatmul.f32.gmra.mxu0 %v936
        %v938 = vpop.f32.mrf.mxu0
        %v939 = vadd.f32 %v908, %v938
        %940 = vdwg.mxu0
        %941 = vmatpush.msra.mxu0 0.0
        %942 = vmatpush.msra.mxu0 0.0
        %943 = vmatpush.msra.mxu0 0.0
        %944 = vmatpush.msra.mxu0 0.0
        %945 = vmatpush.msra.mxu0 0.0
        %946 = vmatpush.msra.mxu0 0.0
        %947 = vmatpush.msra.mxu0 0.0
        %948 = vmatpush.msra.mxu0 0.0
        %949 = vmatpush.msra.mxu0 0.0
        %950 = vmatpush.msra.mxu0 0.0
        %951 = vmatpush.msra.mxu0 0.0
        %952 = vmatpush.msra.mxu0 0.0
        %953 = vmatpush.msra.mxu0 0.0
        %954 = vmatpush.msra.mxu0 0.0
        %v955 = vand.u32 %v802, 4294901760
        %v956 = vsub.f32 %v802, %v955
        %v957 = vand.u32 %v956, 4294901760
        %958 = vmatpush.msra.mxu0 %v957
        %v959 = vand.u32 %v801, 4294901760
        %v960 = vsub.f32 %v801, %v959
        %v961 = vand.u32 %v960, 4294901760
        %962 = vmatpush.msra.mxu0 %v961
        %v963 = vand.u32 %v804, 4294901760
        %964 = vmatmul.f32.gmra.mxu0 %v963
        %v965 = vpop.f32.mrf.mxu0
        %v966 = vadd.f32 %v933, %v965
        %v967 = vand.u32 %v807, 4294901760
        %968 = vmatmul.f32.gmra.mxu0 %v967
        %v969 = vpop.f32.mrf.mxu0
        %v970 = vadd.f32 %v939, %v969
        %971 = vdwg.mxu0
        %972 = vmatpush.msra.mxu0 0.0
        %973 = vmatpush.msra.mxu0 0.0
        %974 = vmatpush.msra.mxu0 0.0
        %975 = vmatpush.msra.mxu0 0.0
        %976 = vmatpush.msra.mxu0 0.0
        %977 = vmatpush.msra.mxu0 0.0
        %978 = vmatpush.msra.mxu0 0.0
        %979 = vmatpush.msra.mxu0 0.0
        %980 = vmatpush.msra.mxu0 0.0
        %981 = vmatpush.msra.mxu0 0.0
        %982 = vmatpush.msra.mxu0 0.0
        %983 = vmatpush.msra.mxu0 0.0
        %984 = vmatpush.msra.mxu0 0.0
        %985 = vmatpush.msra.mxu0 0.0
        %v986 = vand.u32 %v802, 4294901760
        %987 = vmatpush.msra.mxu0 %v986
        %v988 = vand.u32 %v801, 4294901760
        %989 = vmatpush.msra.mxu0 %v988
        %v990 = vand.u32 %v804, 4294901760
        %991 = vmatmul.f32.gmra.mxu0 %v990
        %v992 = vpop.f32.mrf.mxu0
        %v993 = vadd.f32 %v966, %v992
        %v994 = vand.u32 %v807, 4294901760
        %995 = vmatmul.f32.gmra.mxu0 %v994
        %v996 = vpop.f32.mrf.mxu0
        %v997 = vadd.f32 %v970, %v996
        %998 = vdwg.mxu0
        %v999 = vsub.f32 %v595, %v793
        %v1000 = vsub.f32 %v599, %v797
        %v1001 = vsub.f32 %v993, %v595
        %v1002 = vsub.f32 %v997, %v599
        %v1003 = vsub.f32 %v1001, %v793
        %v1004 = vsub.f32 %v1002, %v797
        %1005 = vst.msk [vmem:[#allocation2] sm:$0xff] %vm404, %v999
        %1006 = vst.msk [vmem:[#allocation2 + $0x8] sm:$0xff] %vm404, %v1000
        %1007 = vst.msk [vmem:[#allocation3] sm:$0xff] %vm404, %v1003
        %1008 = vst.msk [vmem:[#allocation3 + $0x8] sm:$0xff] %vm404, %v1004
        %v1009 = vadd.f32 %v999, %v1003
        %v1010 = vadd.f32 %v1000, %v1004
        %1011 = vst.msk [vmem:[#allocation4] sm:$0xff] %vm404, %v1009
        %1012 = vst.msk [vmem:[#allocation4 + $0x8] sm:$0xff] %vm404, %v1010
        %v1013 = vld [vmem:[#allocation8] sm:$0xff]
        %v1014 = vld [vmem:[#allocation8 + $0x8] sm:$0xff]
        %v1015 = vld [vmem:[#allocation10] sm:$0xff]
        %v1016 = vld [vmem:[#allocation10 + $0x8] sm:$0xff]
        %v1017 = vld [vmem:[#allocation11] sm:$0xff]
        %v1018 = vld [vmem:[#allocation11 + $0x8] sm:$0xff]
        %v1019 = vld [vmem:[#allocation2] sm:$0xff]
        %v1020 = vld [vmem:[#allocation2 + $0x8] sm:$0xff]
        %v1022 = vsel %vm404, %v1013, 0
        %v1025 = vsel %vm404, %v1014, 0
        %1027 = vmatpush.msra.mxu0 0.0
        %1028 = vmatpush.msra.mxu0 0.0
        %1029 = vmatpush.msra.mxu0 0.0
        %1030 = vmatpush.msra.mxu0 0.0
        %1031 = vmatpush.msra.mxu0 0.0
        %1032 = vmatpush.msra.mxu0 0.0
        %1033 = vmatpush.msra.mxu0 0.0
        %1034 = vmatpush.msra.mxu0 0.0
        %1035 = vmatpush.msra.mxu0 0.0
        %1036 = vmatpush.msra.mxu0 0.0
        %1037 = vmatpush.msra.mxu0 0.0
        %1038 = vmatpush.msra.mxu0 0.0
        %1039 = vmatpush.msra.mxu0 0.0
        %1040 = vmatpush.msra.mxu0 0.0
        %v1041 = vand.u32 %v1020, 4294901760
        %1042 = vmatpush.msra.mxu0 %v1041
        %v1043 = vand.u32 %v1019, 4294901760
        %1044 = vmatpush.msra.mxu0 %v1043
        %v1045 = vand.u32 %v1022, 4294901760
        %v1046 = vsub.f32 %v1022, %v1045
        %v1047 = vand.u32 %v1046, 4294901760
        %v1048 = vsub.f32 %v1046, %v1047
        %v1049 = vand.u32 %v1048, 4294901760
        %1050 = vmatmul.f32.gmra.mxu0 %v1049
        %v1051 = vpop.f32.mrf.mxu0
        %v1052 = vadd.f32 0.0, %v1051
        %v1053 = vand.u32 %v1025, 4294901760
        %v1054 = vsub.f32 %v1025, %v1053
        %v1055 = vand.u32 %v1054, 4294901760
        %v1056 = vsub.f32 %v1054, %v1055
        %v1057 = vand.u32 %v1056, 4294901760
        %1058 = vmatmul.f32.gmra.mxu0 %v1057
        %v1059 = vpop.f32.mrf.mxu0
        %v1060 = vadd.f32 0.0, %v1059
        %1061 = vdwg.mxu0
        %1062 = vmatpush.msra.mxu0 0.0
        %1063 = vmatpush.msra.mxu0 0.0
        %1064 = vmatpush.msra.mxu0 0.0
        %1065 = vmatpush.msra.mxu0 0.0
        %1066 = vmatpush.msra.mxu0 0.0
        %1067 = vmatpush.msra.mxu0 0.0
        %1068 = vmatpush.msra.mxu0 0.0
        %1069 = vmatpush.msra.mxu0 0.0
        %1070 = vmatpush.msra.mxu0 0.0
        %1071 = vmatpush.msra.mxu0 0.0
        %1072 = vmatpush.msra.mxu0 0.0
        %1073 = vmatpush.msra.mxu0 0.0
        %1074 = vmatpush.msra.mxu0 0.0
        %1075 = vmatpush.msra.mxu0 0.0
        %v1076 = vand.u32 %v1020, 4294901760
        %v1077 = vsub.f32 %v1020, %v1076
        %v1078 = vand.u32 %v1077, 4294901760
        %v1079 = vsub.f32 %v1077, %v1078
        %v1080 = vand.u32 %v1079, 4294901760
        %1081 = vmatpush.msra.mxu0 %v1080
        %v1082 = vand.u32 %v1019, 4294901760
        %v1083 = vsub.f32 %v1019, %v1082
        %v1084 = vand.u32 %v1083, 4294901760
        %v1085 = vsub.f32 %v1083, %v1084
        %v1086 = vand.u32 %v1085, 4294901760
        %1087 = vmatpush.msra.mxu0 %v1086
        %v1088 = vand.u32 %v1022, 4294901760
        %1089 = vmatmul.f32.gmra.mxu0 %v1088
        %v1090 = vpop.f32.mrf.mxu0
        %v1091 = vadd.f32 %v1052, %v1090
        %v1092 = vand.u32 %v1025, 4294901760
        %1093 = vmatmul.f32.gmra.mxu0 %v1092
        %v1094 = vpop.f32.mrf.mxu0
        %v1095 = vadd.f32 %v1060, %v1094
        %1096 = vdwg.mxu0
        %1097 = vmatpush.msra.mxu0 0.0
        %1098 = vmatpush.msra.mxu0 0.0
        %1099 = vmatpush.msra.mxu0 0.0
        %1100 = vmatpush.msra.mxu0 0.0
        %1101 = vmatpush.msra.mxu0 0.0
        %1102 = vmatpush.msra.mxu0 0.0
        %1103 = vmatpush.msra.mxu0 0.0
        %1104 = vmatpush.msra.mxu0 0.0
        %1105 = vmatpush.msra.mxu0 0.0
        %1106 = vmatpush.msra.mxu0 0.0
        %1107 = vmatpush.msra.mxu0 0.0
        %1108 = vmatpush.msra.mxu0 0.0
        %1109 = vmatpush.msra.mxu0 0.0
        %1110 = vmatpush.msra.mxu0 0.0
        %v1111 = vand.u32 %v1020, 4294901760
        %v1112 = vsub.f32 %v1020, %v1111
        %1113 = vmatpush.msra.mxu0 %v1112
        %v1114 = vand.u32 %v1019, 4294901760
        %v1115 = vsub.f32 %v1019, %v1114
        %1116 = vmatpush.msra.mxu0 %v1115
        %v1117 = vand.u32 %v1022, 4294901760
        %v1118 = vsub.f32 %v1022, %v1117
        %1119 = vmatmul.f32.gmra.mxu0 %v1118
        %v1120 = vpop.f32.mrf.mxu0
        %v1121 = vadd.f32 %v1091, %v1120
        %v1122 = vand.u32 %v1025, 4294901760
        %v1123 = vsub.f32 %v1025, %v1122
        %1124 = vmatmul.f32.gmra.mxu0 %v1123
        %v1125 = vpop.f32.mrf.mxu0
        %v1126 = vadd.f32 %v1095, %v1125
        %1127 = vdwg.mxu0
        %1128 = vmatpush.msra.mxu0 0.0
        %1129 = vmatpush.msra.mxu0 0.0
        %1130 = vmatpush.msra.mxu0 0.0
        %1131 = vmatpush.msra.mxu0 0.0
        %1132 = vmatpush.msra.mxu0 0.0
        %1133 = vmatpush.msra.mxu0 0.0
        %1134 = vmatpush.msra.mxu0 0.0
        %1135 = vmatpush.msra.mxu0 0.0
        %1136 = vmatpush.msra.mxu0 0.0
        %1137 = vmatpush.msra.mxu0 0.0
        %1138 = vmatpush.msra.mxu0 0.0
        %1139 = vmatpush.msra.mxu0 0.0
        %1140 = vmatpush.msra.mxu0 0.0
        %1141 = vmatpush.msra.mxu0 0.0
        %v1142 = vand.u32 %v1020, 4294901760
        %1143 = vmatpush.msra.mxu0 %v1142
        %v1144 = vand.u32 %v1019, 4294901760
        %1145 = vmatpush.msra.mxu0 %v1144
        %v1146 = vand.u32 %v1022, 4294901760
        %v1147 = vsub.f32 %v1022, %v1146
        %v1148 = vand.u32 %v1147, 4294901760
        %1149 = vmatmul.f32.gmra.mxu0 %v1148
        %v1150 = vpop.f32.mrf.mxu0
        %v1151 = vadd.f32 %v1121, %v1150
        %v1152 = vand.u32 %v1025, 4294901760
        %v1153 = vsub.f32 %v1025, %v1152
        %v1154 = vand.u32 %v1153, 4294901760
        %1155 = vmatmul.f32.gmra.mxu0 %v1154
        %v1156 = vpop.f32.mrf.mxu0
        %v1157 = vadd.f32 %v1126, %v1156
        %1158 = vdwg.mxu0
        %1159 = vmatpush.msra.mxu0 0.0
        %1160 = vmatpush.msra.mxu0 0.0
        %1161 = vmatpush.msra.mxu0 0.0
        %1162 = vmatpush.msra.mxu0 0.0
        %1163 = vmatpush.msra.mxu0 0.0
        %1164 = vmatpush.msra.mxu0 0.0
        %1165 = vmatpush.msra.mxu0 0.0
        %1166 = vmatpush.msra.mxu0 0.0
        %1167 = vmatpush.msra.mxu0 0.0
        %1168 = vmatpush.msra.mxu0 0.0
        %1169 = vmatpush.msra.mxu0 0.0
        %1170 = vmatpush.msra.mxu0 0.0
        %1171 = vmatpush.msra.mxu0 0.0
        %1172 = vmatpush.msra.mxu0 0.0
        %v1173 = vand.u32 %v1020, 4294901760
        %v1174 = vsub.f32 %v1020, %v1173
        %v1175 = vand.u32 %v1174, 4294901760
        %1176 = vmatpush.msra.mxu0 %v1175
        %v1177 = vand.u32 %v1019, 4294901760
        %v1178 = vsub.f32 %v1019, %v1177
        %v1179 = vand.u32 %v1178, 4294901760
        %1180 = vmatpush.msra.mxu0 %v1179
        %v1181 = vand.u32 %v1022, 4294901760
        %1182 = vmatmul.f32.gmra.mxu0 %v1181
        %v1183 = vpop.f32.mrf.mxu0
        %v1184 = vadd.f32 %v1151, %v1183
        %v1185 = vand.u32 %v1025, 4294901760
        %1186 = vmatmul.f32.gmra.mxu0 %v1185
        %v1187 = vpop.f32.mrf.mxu0
        %v1188 = vadd.f32 %v1157, %v1187
        %1189 = vdwg.mxu0
        %1190 = vmatpush.msra.mxu0 0.0
        %1191 = vmatpush.msra.mxu0 0.0
        %1192 = vmatpush.msra.mxu0 0.0
        %1193 = vmatpush.msra.mxu0 0.0
        %1194 = vmatpush.msra.mxu0 0.0
        %1195 = vmatpush.msra.mxu0 0.0
        %1196 = vmatpush.msra.mxu0 0.0
        %1197 = vmatpush.msra.mxu0 0.0
        %1198 = vmatpush.msra.mxu0 0.0
        %1199 = vmatpush.msra.mxu0 0.0
        %1200 = vmatpush.msra.mxu0 0.0
        %1201 = vmatpush.msra.mxu0 0.0
        %1202 = vmatpush.msra.mxu0 0.0
        %1203 = vmatpush.msra.mxu0 0.0
        %v1204 = vand.u32 %v1020, 4294901760
        %1205 = vmatpush.msra.mxu0 %v1204
        %v1206 = vand.u32 %v1019, 4294901760
        %1207 = vmatpush.msra.mxu0 %v1206
        %v1208 = vand.u32 %v1022, 4294901760
        %1209 = vmatmul.f32.gmra.mxu0 %v1208
        %v1210 = vpop.f32.mrf.mxu0
        %v1211 = vadd.f32 %v1184, %v1210
        %v1212 = vand.u32 %v1025, 4294901760
        %1213 = vmatmul.f32.gmra.mxu0 %v1212
        %v1214 = vpop.f32.mrf.mxu0
        %v1215 = vadd.f32 %v1188, %v1214
        %1216 = vdwg.mxu0
        %v1217 = vld [vmem:[#allocation3] sm:$0xff]
        %v1218 = vld [vmem:[#allocation3 + $0x8] sm:$0xff]
        %v1220 = vsel %vm404, %v1015, 0
        %v1223 = vsel %vm404, %v1016, 0
        %1225 = vmatpush.msra.mxu0 0.0
        %1226 = vmatpush.msra.mxu0 0.0
        %1227 = vmatpush.msra.mxu0 0.0
        %1228 = vmatpush.msra.mxu0 0.0
        %1229 = vmatpush.msra.mxu0 0.0
        %1230 = vmatpush.msra.mxu0 0.0
        %1231 = vmatpush.msra.mxu0 0.0
        %1232 = vmatpush.msra.mxu0 0.0
        %1233 = vmatpush.msra.mxu0 0.0
        %1234 = vmatpush.msra.mxu0 0.0
        %1235 = vmatpush.msra.mxu0 0.0
        %1236 = vmatpush.msra.mxu0 0.0
        %1237 = vmatpush.msra.mxu0 0.0
        %1238 = vmatpush.msra.mxu0 0.0
        %v1239 = vand.u32 %v1218, 4294901760
        %1240 = vmatpush.msra.mxu0 %v1239
        %v1241 = vand.u32 %v1217, 4294901760
        %1242 = vmatpush.msra.mxu0 %v1241
        %v1243 = vand.u32 %v1220, 4294901760
        %v1244 = vsub.f32 %v1220, %v1243
        %v1245 = vand.u32 %v1244, 4294901760
        %v1246 = vsub.f32 %v1244, %v1245
        %v1247 = vand.u32 %v1246, 4294901760
        %1248 = vmatmul.f32.gmra.mxu0 %v1247
        %v1249 = vpop.f32.mrf.mxu0
        %v1250 = vadd.f32 0.0, %v1249
        %v1251 = vand.u32 %v1223, 4294901760
        %v1252 = vsub.f32 %v1223, %v1251
        %v1253 = vand.u32 %v1252, 4294901760
        %v1254 = vsub.f32 %v1252, %v1253
        %v1255 = vand.u32 %v1254, 4294901760
        %1256 = vmatmul.f32.gmra.mxu0 %v1255
        %v1257 = vpop.f32.mrf.mxu0
        %v1258 = vadd.f32 0.0, %v1257
        %1259 = vdwg.mxu0
        %1260 = vmatpush.msra.mxu0 0.0
        %1261 = vmatpush.msra.mxu0 0.0
        %1262 = vmatpush.msra.mxu0 0.0
        %1263 = vmatpush.msra.mxu0 0.0
        %1264 = vmatpush.msra.mxu0 0.0
        %1265 = vmatpush.msra.mxu0 0.0
        %1266 = vmatpush.msra.mxu0 0.0
        %1267 = vmatpush.msra.mxu0 0.0
        %1268 = vmatpush.msra.mxu0 0.0
        %1269 = vmatpush.msra.mxu0 0.0
        %1270 = vmatpush.msra.mxu0 0.0
        %1271 = vmatpush.msra.mxu0 0.0
        %1272 = vmatpush.msra.mxu0 0.0
        %1273 = vmatpush.msra.mxu0 0.0
        %v1274 = vand.u32 %v1218, 4294901760
        %v1275 = vsub.f32 %v1218, %v1274
        %v1276 = vand.u32 %v1275, 4294901760
        %v1277 = vsub.f32 %v1275, %v1276
        %v1278 = vand.u32 %v1277, 4294901760
        %1279 = vmatpush.msra.mxu0 %v1278
        %v1280 = vand.u32 %v1217, 4294901760
        %v1281 = vsub.f32 %v1217, %v1280
        %v1282 = vand.u32 %v1281, 4294901760
        %v1283 = vsub.f32 %v1281, %v1282
        %v1284 = vand.u32 %v1283, 4294901760
        %1285 = vmatpush.msra.mxu0 %v1284
        %v1286 = vand.u32 %v1220, 4294901760
        %1287 = vmatmul.f32.gmra.mxu0 %v1286
        %v1288 = vpop.f32.mrf.mxu0
        %v1289 = vadd.f32 %v1250, %v1288
        %v1290 = vand.u32 %v1223, 4294901760
        %1291 = vmatmul.f32.gmra.mxu0 %v1290
        %v1292 = vpop.f32.mrf.mxu0
        %v1293 = vadd.f32 %v1258, %v1292
        %1294 = vdwg.mxu0
        %1295 = vmatpush.msra.mxu0 0.0
        %1296 = vmatpush.msra.mxu0 0.0
        %1297 = vmatpush.msra.mxu0 0.0
        %1298 = vmatpush.msra.mxu0 0.0
        %1299 = vmatpush.msra.mxu0 0.0
        %1300 = vmatpush.msra.mxu0 0.0
        %1301 = vmatpush.msra.mxu0 0.0
        %1302 = vmatpush.msra.mxu0 0.0
        %1303 = vmatpush.msra.mxu0 0.0
        %1304 = vmatpush.msra.mxu0 0.0
        %1305 = vmatpush.msra.mxu0 0.0
        %1306 = vmatpush.msra.mxu0 0.0
        %1307 = vmatpush.msra.mxu0 0.0
        %1308 = vmatpush.msra.mxu0 0.0
        %v1309 = vand.u32 %v1218, 4294901760
        %v1310 = vsub.f32 %v1218, %v1309
        %1311 = vmatpush.msra.mxu0 %v1310
        %v1312 = vand.u32 %v1217, 4294901760
        %v1313 = vsub.f32 %v1217, %v1312
        %1314 = vmatpush.msra.mxu0 %v1313
        %v1315 = vand.u32 %v1220, 4294901760
        %v1316 = vsub.f32 %v1220, %v1315
        %1317 = vmatmul.f32.gmra.mxu0 %v1316
        %v1318 = vpop.f32.mrf.mxu0
        %v1319 = vadd.f32 %v1289, %v1318
        %v1320 = vand.u32 %v1223, 4294901760
        %v1321 = vsub.f32 %v1223, %v1320
        %1322 = vmatmul.f32.gmra.mxu0 %v1321
        %v1323 = vpop.f32.mrf.mxu0
        %v1324 = vadd.f32 %v1293, %v1323
        %1325 = vdwg.mxu0
        %1326 = vmatpush.msra.mxu0 0.0
        %1327 = vmatpush.msra.mxu0 0.0
        %1328 = vmatpush.msra.mxu0 0.0
        %1329 = vmatpush.msra.mxu0 0.0
        %1330 = vmatpush.msra.mxu0 0.0
        %1331 = vmatpush.msra.mxu0 0.0
        %1332 = vmatpush.msra.mxu0 0.0
        %1333 = vmatpush.msra.mxu0 0.0
        %1334 = vmatpush.msra.mxu0 0.0
        %1335 = vmatpush.msra.mxu0 0.0
        %1336 = vmatpush.msra.mxu0 0.0
        %1337 = vmatpush.msra.mxu0 0.0
        %1338 = vmatpush.msra.mxu0 0.0
        %1339 = vmatpush.msra.mxu0 0.0
        %v1340 = vand.u32 %v1218, 4294901760
        %1341 = vmatpush.msra.mxu0 %v1340
        %v1342 = vand.u32 %v1217, 4294901760
        %1343 = vmatpush.msra.mxu0 %v1342
        %v1344 = vand.u32 %v1220, 4294901760
        %v1345 = vsub.f32 %v1220, %v1344
        %v1346 = vand.u32 %v1345, 4294901760
        %1347 = vmatmul.f32.gmra.mxu0 %v1346
        %v1348 = vpop.f32.mrf.mxu0
        %v1349 = vadd.f32 %v1319, %v1348
        %v1350 = vand.u32 %v1223, 4294901760
        %v1351 = vsub.f32 %v1223, %v1350
        %v1352 = vand.u32 %v1351, 4294901760
        %1353 = vmatmul.f32.gmra.mxu0 %v1352
        %v1354 = vpop.f32.mrf.mxu0
        %v1355 = vadd.f32 %v1324, %v1354
        %1356 = vdwg.mxu0
        %1357 = vmatpush.msra.mxu0 0.0
        %1358 = vmatpush.msra.mxu0 0.0
        %1359 = vmatpush.msra.mxu0 0.0
        %1360 = vmatpush.msra.mxu0 0.0
        %1361 = vmatpush.msra.mxu0 0.0
        %1362 = vmatpush.msra.mxu0 0.0
        %1363 = vmatpush.msra.mxu0 0.0
        %1364 = vmatpush.msra.mxu0 0.0
        %1365 = vmatpush.msra.mxu0 0.0
        %1366 = vmatpush.msra.mxu0 0.0
        %1367 = vmatpush.msra.mxu0 0.0
        %1368 = vmatpush.msra.mxu0 0.0
        %1369 = vmatpush.msra.mxu0 0.0
        %1370 = vmatpush.msra.mxu0 0.0
        %v1371 = vand.u32 %v1218, 4294901760
        %v1372 = vsub.f32 %v1218, %v1371
        %v1373 = vand.u32 %v1372, 4294901760
        %1374 = vmatpush.msra.mxu0 %v1373
        %v1375 = vand.u32 %v1217, 4294901760
        %v1376 = vsub.f32 %v1217, %v1375
        %v1377 = vand.u32 %v1376, 4294901760
        %1378 = vmatpush.msra.mxu0 %v1377
        %v1379 = vand.u32 %v1220, 4294901760
        %1380 = vmatmul.f32.gmra.mxu0 %v1379
        %v1381 = vpop.f32.mrf.mxu0
        %v1382 = vadd.f32 %v1349, %v1381
        %v1383 = vand.u32 %v1223, 4294901760
        %1384 = vmatmul.f32.gmra.mxu0 %v1383
        %v1385 = vpop.f32.mrf.mxu0
        %v1386 = vadd.f32 %v1355, %v1385
        %1387 = vdwg.mxu0
        %1388 = vmatpush.msra.mxu0 0.0
        %1389 = vmatpush.msra.mxu0 0.0
        %1390 = vmatpush.msra.mxu0 0.0
        %1391 = vmatpush.msra.mxu0 0.0
        %1392 = vmatpush.msra.mxu0 0.0
        %1393 = vmatpush.msra.mxu0 0.0
        %1394 = vmatpush.msra.mxu0 0.0
        %1395 = vmatpush.msra.mxu0 0.0
        %1396 = vmatpush.msra.mxu0 0.0
        %1397 = vmatpush.msra.mxu0 0.0
        %1398 = vmatpush.msra.mxu0 0.0
        %1399 = vmatpush.msra.mxu0 0.0
        %1400 = vmatpush.msra.mxu0 0.0
        %1401 = vmatpush.msra.mxu0 0.0
        %v1402 = vand.u32 %v1218, 4294901760
        %1403 = vmatpush.msra.mxu0 %v1402
        %v1404 = vand.u32 %v1217, 4294901760
        %1405 = vmatpush.msra.mxu0 %v1404
        %v1406 = vand.u32 %v1220, 4294901760
        %1407 = vmatmul.f32.gmra.mxu0 %v1406
        %v1408 = vpop.f32.mrf.mxu0
        %v1409 = vadd.f32 %v1382, %v1408
        %v1410 = vand.u32 %v1223, 4294901760
        %1411 = vmatmul.f32.gmra.mxu0 %v1410
        %v1412 = vpop.f32.mrf.mxu0
        %v1413 = vadd.f32 %v1386, %v1412
        %1414 = vdwg.mxu0
        %v1415 = vld [vmem:[#allocation4] sm:$0xff]
        %v1416 = vld [vmem:[#allocation4 + $0x8] sm:$0xff]
        %v1418 = vsel %vm404, %v1017, 0
        %v1421 = vsel %vm404, %v1018, 0
        %1423 = vmatpush.msra.mxu0 0.0
        %1424 = vmatpush.msra.mxu0 0.0
        %1425 = vmatpush.msra.mxu0 0.0
        %1426 = vmatpush.msra.mxu0 0.0
        %1427 = vmatpush.msra.mxu0 0.0
        %1428 = vmatpush.msra.mxu0 0.0
        %1429 = vmatpush.msra.mxu0 0.0
        %1430 = vmatpush.msra.mxu0 0.0
        %1431 = vmatpush.msra.mxu0 0.0
        %1432 = vmatpush.msra.mxu0 0.0
        %1433 = vmatpush.msra.mxu0 0.0
        %1434 = vmatpush.msra.mxu0 0.0
        %1435 = vmatpush.msra.mxu0 0.0
        %1436 = vmatpush.msra.mxu0 0.0
        %v1437 = vand.u32 %v1416, 4294901760
        %1438 = vmatpush.msra.mxu0 %v1437
        %v1439 = vand.u32 %v1415, 4294901760
        %1440 = vmatpush.msra.mxu0 %v1439
        %v1441 = vand.u32 %v1418, 4294901760
        %v1442 = vsub.f32 %v1418, %v1441
        %v1443 = vand.u32 %v1442, 4294901760
        %v1444 = vsub.f32 %v1442, %v1443
        %v1445 = vand.u32 %v1444, 4294901760
        %1446 = vmatmul.f32.gmra.mxu0 %v1445
        %v1447 = vpop.f32.mrf.mxu0
        %v1448 = vadd.f32 0.0, %v1447
        %v1449 = vand.u32 %v1421, 4294901760
        %v1450 = vsub.f32 %v1421, %v1449
        %v1451 = vand.u32 %v1450, 4294901760
        %v1452 = vsub.f32 %v1450, %v1451
        %v1453 = vand.u32 %v1452, 4294901760
        %1454 = vmatmul.f32.gmra.mxu0 %v1453
        %v1455 = vpop.f32.mrf.mxu0
        %v1456 = vadd.f32 0.0, %v1455
        %1457 = vdwg.mxu0
        %1458 = vmatpush.msra.mxu0 0.0
        %1459 = vmatpush.msra.mxu0 0.0
        %1460 = vmatpush.msra.mxu0 0.0
        %1461 = vmatpush.msra.mxu0 0.0
        %1462 = vmatpush.msra.mxu0 0.0
        %1463 = vmatpush.msra.mxu0 0.0
        %1464 = vmatpush.msra.mxu0 0.0
        %1465 = vmatpush.msra.mxu0 0.0
        %1466 = vmatpush.msra.mxu0 0.0
        %1467 = vmatpush.msra.mxu0 0.0
        %1468 = vmatpush.msra.mxu0 0.0
        %1469 = vmatpush.msra.mxu0 0.0
        %1470 = vmatpush.msra.mxu0 0.0
        %1471 = vmatpush.msra.mxu0 0.0
        %v1472 = vand.u32 %v1416, 4294901760
        %v1473 = vsub.f32 %v1416, %v1472
        %v1474 = vand.u32 %v1473, 4294901760
        %v1475 = vsub.f32 %v1473, %v1474
        %v1476 = vand.u32 %v1475, 4294901760
        %1477 = vmatpush.msra.mxu0 %v1476
        %v1478 = vand.u32 %v1415, 4294901760
        %v1479 = vsub.f32 %v1415, %v1478
        %v1480 = vand.u32 %v1479, 4294901760
        %v1481 = vsub.f32 %v1479, %v1480
        %v1482 = vand.u32 %v1481, 4294901760
        %1483 = vmatpush.msra.mxu0 %v1482
        %v1484 = vand.u32 %v1418, 4294901760
        %1485 = vmatmul.f32.gmra.mxu0 %v1484
        %v1486 = vpop.f32.mrf.mxu0
        %v1487 = vadd.f32 %v1448, %v1486
        %v1488 = vand.u32 %v1421, 4294901760
        %1489 = vmatmul.f32.gmra.mxu0 %v1488
        %v1490 = vpop.f32.mrf.mxu0
        %v1491 = vadd.f32 %v1456, %v1490
        %1492 = vdwg.mxu0
        %1493 = vmatpush.msra.mxu0 0.0
        %1494 = vmatpush.msra.mxu0 0.0
        %1495 = vmatpush.msra.mxu0 0.0
        %1496 = vmatpush.msra.mxu0 0.0
        %1497 = vmatpush.msra.mxu0 0.0
        %1498 = vmatpush.msra.mxu0 0.0
        %1499 = vmatpush.msra.mxu0 0.0
        %1500 = vmatpush.msra.mxu0 0.0
        %1501 = vmatpush.msra.mxu0 0.0
        %1502 = vmatpush.msra.mxu0 0.0
        %1503 = vmatpush.msra.mxu0 0.0
        %1504 = vmatpush.msra.mxu0 0.0
        %1505 = vmatpush.msra.mxu0 0.0
        %1506 = vmatpush.msra.mxu0 0.0
        %v1507 = vand.u32 %v1416, 4294901760
        %v1508 = vsub.f32 %v1416, %v1507
        %1509 = vmatpush.msra.mxu0 %v1508
        %v1510 = vand.u32 %v1415, 4294901760
        %v1511 = vsub.f32 %v1415, %v1510
        %1512 = vmatpush.msra.mxu0 %v1511
        %v1513 = vand.u32 %v1418, 4294901760
        %v1514 = vsub.f32 %v1418, %v1513
        %1515 = vmatmul.f32.gmra.mxu0 %v1514
        %v1516 = vpop.f32.mrf.mxu0
        %v1517 = vadd.f32 %v1487, %v1516
        %v1518 = vand.u32 %v1421, 4294901760
        %v1519 = vsub.f32 %v1421, %v1518
        %1520 = vmatmul.f32.gmra.mxu0 %v1519
        %v1521 = vpop.f32.mrf.mxu0
        %v1522 = vadd.f32 %v1491, %v1521
        %1523 = vdwg.mxu0
        %1524 = vmatpush.msra.mxu0 0.0
        %1525 = vmatpush.msra.mxu0 0.0
        %1526 = vmatpush.msra.mxu0 0.0
        %1527 = vmatpush.msra.mxu0 0.0
        %1528 = vmatpush.msra.mxu0 0.0
        %1529 = vmatpush.msra.mxu0 0.0
        %1530 = vmatpush.msra.mxu0 0.0
        %1531 = vmatpush.msra.mxu0 0.0
        %1532 = vmatpush.msra.mxu0 0.0
        %1533 = vmatpush.msra.mxu0 0.0
        %1534 = vmatpush.msra.mxu0 0.0
        %1535 = vmatpush.msra.mxu0 0.0
        %1536 = vmatpush.msra.mxu0 0.0
        %1537 = vmatpush.msra.mxu0 0.0
        %v1538 = vand.u32 %v1416, 4294901760
        %1539 = vmatpush.msra.mxu0 %v1538
        %v1540 = vand.u32 %v1415, 4294901760
        %1541 = vmatpush.msra.mxu0 %v1540
        %v1542 = vand.u32 %v1418, 4294901760
        %v1543 = vsub.f32 %v1418, %v1542
        %v1544 = vand.u32 %v1543, 4294901760
        %1545 = vmatmul.f32.gmra.mxu0 %v1544
        %v1546 = vpop.f32.mrf.mxu0
        %v1547 = vadd.f32 %v1517, %v1546
        %v1548 = vand.u32 %v1421, 4294901760
        %v1549 = vsub.f32 %v1421, %v1548
        %v1550 = vand.u32 %v1549, 4294901760
        %1551 = vmatmul.f32.gmra.mxu0 %v1550
        %v1552 = vpop.f32.mrf.mxu0
        %v1553 = vadd.f32 %v1522, %v1552
        %1554 = vdwg.mxu0
        %1555 = vmatpush.msra.mxu0 0.0
        %1556 = vmatpush.msra.mxu0 0.0
        %1557 = vmatpush.msra.mxu0 0.0
        %1558 = vmatpush.msra.mxu0 0.0
        %1559 = vmatpush.msra.mxu0 0.0
        %1560 = vmatpush.msra.mxu0 0.0
        %1561 = vmatpush.msra.mxu0 0.0
        %1562 = vmatpush.msra.mxu0 0.0
        %1563 = vmatpush.msra.mxu0 0.0
        %1564 = vmatpush.msra.mxu0 0.0
        %1565 = vmatpush.msra.mxu0 0.0
        %1566 = vmatpush.msra.mxu0 0.0
        %1567 = vmatpush.msra.mxu0 0.0
        %1568 = vmatpush.msra.mxu0 0.0
        %v1569 = vand.u32 %v1416, 4294901760
        %v1570 = vsub.f32 %v1416, %v1569
        %v1571 = vand.u32 %v1570, 4294901760
        %1572 = vmatpush.msra.mxu0 %v1571
        %v1573 = vand.u32 %v1415, 4294901760
        %v1574 = vsub.f32 %v1415, %v1573
        %v1575 = vand.u32 %v1574, 4294901760
        %1576 = vmatpush.msra.mxu0 %v1575
        %v1577 = vand.u32 %v1418, 4294901760
        %1578 = vmatmul.f32.gmra.mxu0 %v1577
        %v1579 = vpop.f32.mrf.mxu0
        %v1580 = vadd.f32 %v1547, %v1579
        %v1581 = vand.u32 %v1421, 4294901760
        %1582 = vmatmul.f32.gmra.mxu0 %v1581
        %v1583 = vpop.f32.mrf.mxu0
        %v1584 = vadd.f32 %v1553, %v1583
        %1585 = vdwg.mxu0
        %1586 = vmatpush.msra.mxu0 0.0
        %1587 = vmatpush.msra.mxu0 0.0
        %1588 = vmatpush.msra.mxu0 0.0
        %1589 = vmatpush.msra.mxu0 0.0
        %1590 = vmatpush.msra.mxu0 0.0
        %1591 = vmatpush.msra.mxu0 0.0
        %1592 = vmatpush.msra.mxu0 0.0
        %1593 = vmatpush.msra.mxu0 0.0
        %1594 = vmatpush.msra.mxu0 0.0
        %1595 = vmatpush.msra.mxu0 0.0
        %1596 = vmatpush.msra.mxu0 0.0
        %1597 = vmatpush.msra.mxu0 0.0
        %1598 = vmatpush.msra.mxu0 0.0
        %1599 = vmatpush.msra.mxu0 0.0
        %v1600 = vand.u32 %v1416, 4294901760
        %1601 = vmatpush.msra.mxu0 %v1600
        %v1602 = vand.u32 %v1415, 4294901760
        %1603 = vmatpush.msra.mxu0 %v1602
        %v1604 = vand.u32 %v1418, 4294901760
        %1605 = vmatmul.f32.gmra.mxu0 %v1604
        %v1606 = vpop.f32.mrf.mxu0
        %v1607 = vadd.f32 %v1580, %v1606
        %v1608 = vand.u32 %v1421, 4294901760
        %1609 = vmatmul.f32.gmra.mxu0 %v1608
        %v1610 = vpop.f32.mrf.mxu0
        %v1611 = vadd.f32 %v1584, %v1610
        %1612 = vdwg.mxu0
        %v1613 = vsub.f32 %v1211, %v1409
        %v1614 = vsub.f32 %v1215, %v1413
        %1615 = vst.msk [vmem:[%s397] sm:$0xff] %vm404, %v1613
        %1616 = vst.msk [vmem:[%s397 + $0x8] sm:$0xff] %vm404, %v1614
        %v1617 = vsub.f32 %v1607, %v1211
        %v1618 = vsub.f32 %v1611, %v1215
        %v1619 = vsub.f32 %v1617, %v1409
        %v1620 = vsub.f32 %v1618, %v1413
        %s1621 = scalar_lea.vmem %s397, 16 [#allocation17]
        %1622 = vst.msk [vmem:[%s1621] sm:$0xff] %vm404, %v1619
        %1623 = vst.msk [vmem:[%s1621 + $0x8] sm:$0xff] %vm404, %v1620
        %s1624 = sand.u32 %s187, 1
        %s1625 = scalar_lea.sflag [#allocation7], %s1624
        %s1626 = sand.u32 %s187, 1
        %s1627 = smul.addr %s1626, 32
        %s1628 = scalar_lea.vmem [#allocation17], %s1627
        // Predicated region
        $region77: #{tpu_custom_call.1} parent=47 // pred_check
          %p1629 = pneg %p197
        $region78: #{tpu_custom_call.1} parent=47 // pred_check_branch
          %1631 = sbr.rel (%p1629) target = $region80
        $region79: #{tpu_custom_call.1} parent=47 // pred_region
          %1633 = vsyncadd %s1625, 0
          %s1634 = smul.addr %s27, 4
          %s1635 = smul.addr %s1634, 8
          %s1636 = scalar_lea.hbm %s7, %s1635
          %s1637 = sshll.u32 %s1628, 4
          %s1638 = int_to_ptr.vmem [resolvable:$true] %s1637
          %s1639 = sshll.u32 %s1636, 4
          %s1640 = int_to_ptr.hbm [resolvable:$true] %s1639
          %1645 = dma.vmem_to_hbm [thread:$0]  %s1638, 512, %s1640, %s1625, 128, 128, 8
        $region80: #{tpu_custom_call.1} parent=47 // pred_fallthru
          _
      $region48: #{tpu_custom_call.1} parent=5 // pred_fallthru
        _
      %p1646 = scmp.le.s32.totalorder 2, %s22
      // Predicated region
      $region81: #{tpu_custom_call.1} parent=5 // pred_check
        %p1647 = pneg %p1646
      $region82: #{tpu_custom_call.1} parent=5 // pred_check_branch
        %1649 = sbr.rel (%p1647) target = $region84
      $region83: #{tpu_custom_call.1} parent=5 // pred_region
        %s1650 = ssub.s32 %s22, 2
        // Predicated region
        $region85: #{tpu_custom_call.1} parent=83 // pred_check
          %p1651 = pneg %p203
        $region86: #{tpu_custom_call.1} parent=83 // pred_check_branch
          %1653 = sbr.rel (%p1651) target = $region88
        $region87: #{tpu_custom_call.1} parent=83 // pred_region
          %s1654 = sand.u32 %s188, 1
          %s1655 = scalar_lea.sflag [#allocation7], %s1654
          %s1656 = sand.u32 %s188, 1
          %s1657 = smul.addr %s1656, 32
          %s1658 = scalar_lea.vmem [#allocation17], %s1657
          %1660 = dma.done %s1655, 512
        $region88: #{tpu_custom_call.1} parent=83 // pred_fallthru
          _
      $region84: #{tpu_custom_call.1} parent=5 // pred_fallthru
        _
    $region6: #{tpu_custom_call.1} parent=1 // loop_footer
      %s26 = sadd.s32 1, %s22
    $region7: #{tpu_custom_call.1} parent=1 // loop_footer_branch
      %21 = sbr.rel target = $region3
    $region8: #{tpu_custom_call.1} parent=1 // loop_exit
      _
    %1661 = vsyncpa [#allocation6], 1
    %s1662 = scalar_lea.sflag [#allocation6], 1
    %1663 = vsyncpa %s1662, 1
    %1664 = vsyncpa [#allocation9], 1
    %1665 = vsyncpa [#allocation12], 1
    %1666 = vsyncpa [#allocation15], 1
    %1667 = vsyncpa [#allocation7], 1
    %s1668 = scalar_lea.sflag [#allocation7], 1
    %1669 = vsyncpa %s1668, 1

</llo_original>
